<compile_context>
chip_gen: v6e
topology: v6e:2x2x1
jax: 0.10.0
libtpu: 0.0.40
codegen_flags: <defaults>
</compile_context>

<pallas_src>
import functools
import math

import jax
import jax.numpy as jnp
from jax.experimental import pallas as pl
from jax.experimental.pallas import tpu as pltpu


COUT_PAD_FINAL = 32      # pad conv_final Cout 1 -> 32 so its matmul N = 4*32 = 128
BN_EPS = 1e-5


# ----------------------------------------------------------------------------
# Pallas kernels
# ----------------------------------------------------------------------------
def _matmul_shift_kernel(x_ref, w_ref, shift_ref, o_ref, *, relu):
    """o = [relu]((x @ w) + shift); bf16 operands, f32 accumulate + epilogue."""
    acc = jnp.dot(x_ref[...], w_ref[...], preferred_element_type=jnp.float32)
    y = acc + shift_ref[...]
    if relu:
        y = jnp.maximum(y, 0.0)
    o_ref[...] = y.astype(o_ref.dtype)


def _head_kernel(z_ref, w1_ref, b1_ref, w2_ref, b2_ref, o_ref):
    """Fused conv1 (1x1) + conv2 (4x4 on a 1x1 input): two chained matmuls."""
    h1 = jnp.dot(z_ref[...], w1_ref[...], preferred_element_type=jnp.float32)
    h1 = jnp.maximum(h1 + b1_ref[...], 0.0).astype(w2_ref.dtype)
    h2 = jnp.dot(h1, w2_ref[...], preferred_element_type=jnp.float32)
    h2 = jnp.maximum(h2 + b2_ref[...], 0.0)
    o_ref[...] = h2.astype(o_ref.dtype)


# ----------------------------------------------------------------------------
# pallas_call wrappers
# ----------------------------------------------------------------------------
def _choose_m_blocks(M, max_tm=2048):
    """>=2 grid steps (both v7x TCs), 16-row aligned blocks, tm <= max_tm."""
    g = 2
    while -(-M // g) > max_tm:
        g *= 2
    align = 16 * g                        # each of the g blocks 16-row aligned (bf16)
    Mp = -(-M // align) * align
    return Mp, Mp // g, g


def matmul_shift(x, w, shift, *, relu, out_dtype):
    """out = [relu]((x @ w) + shift);  x:(M,K) bf16, w:(K,N) bf16, shift:(N,) f32."""
    M, K = x.shape
    _, N = w.shape
    Mp, tm, g = _choose_m_blocks(M)
    if Mp != M:
        x = jnp.pad(x, ((0, Mp - M), (0, 0)))
    out = pl.pallas_call(
        functools.partial(_matmul_shift_kernel, relu=relu),
        out_shape=jax.ShapeDtypeStruct((Mp, N), out_dtype),
        grid_spec=pltpu.PrefetchScalarGridSpec(
            num_scalar_prefetch=0,
            grid=(g,),
            in_specs=[
                pl.BlockSpec((tm, K), lambda i: (i, 0)),   # phase patches (bf16)
                pl.BlockSpec((K, N), lambda i: (0, 0)),    # BN-folded weights (resident)
                pl.BlockSpec((1, N), lambda i: (0, 0)),    # folded BN shift (f32)
            ],
            out_specs=pl.BlockSpec((tm, N), lambda i: (i, 0)),
        ),
        compiler_params=pltpu.CompilerParams(
            dimension_semantics=("parallel",),
            vmem_limit_bytes=32 * 1024 * 1024),
    )(x, w, shift.reshape(1, N))
    return out[:M] if Mp != M else out


def decoder_head(z, w1, sh1, w2, sh2):
    """Fused conv1+conv2 (+BN+ReLU): (B, Din) -> (B, 16*64) bf16 (flattened NHWC)."""
    B, Din = z.shape
    N1 = w1.shape[1]
    N2 = w2.shape[1]
    g = 2                                   # split conv2's N -> both v7x TCs
    tn = N2 // g
    return pl.pallas_call(
        _head_kernel,
        out_shape=jax.ShapeDtypeStruct((B, N2), jnp.bfloat16),
        grid_spec=pltpu.PrefetchScalarGridSpec(
            num_scalar_prefetch=0,
            grid=(g,),
            in_specs=[
                pl.BlockSpec((B, Din), lambda i: (0, 0)),
                pl.BlockSpec((Din, N1), lambda i: (0, 0)),
                pl.BlockSpec((1, N1), lambda i: (0, 0)),
                pl.BlockSpec((N1, tn), lambda i: (0, i)),
                pl.BlockSpec((1, tn), lambda i: (0, i)),
            ],
            out_specs=pl.BlockSpec((B, tn), lambda i: (0, i)),
        ),
        compiler_params=pltpu.CompilerParams(
            dimension_semantics=("parallel",),
            vmem_limit_bytes=32 * 1024 * 1024),
    )(z, w1, sh1.reshape(1, N1), w2, sh2.reshape(1, N2))


# ----------------------------------------------------------------------------
# ConvTranspose2d(k=4, s=2, p=1) phase (sub-pixel) decomposition helpers
# ----------------------------------------------------------------------------
def _convT_s2_phase_patches(x):
    """NHWC (B,H,W,C) -> ((B*(H+1)*(W+1), 4*C) 2x2-tap patch matrix, (B,H,W))."""
    B, H, W, C = x.shape
    xp = jnp.pad(x, ((0, 0), (1, 1), (1, 1), (0, 0)))
    taps = [xp[:, wy:wy + H + 1, wx:wx + W + 1, :]
            for wy in (0, 1) for wx in (0, 1)]
    patches = jnp.concatenate(taps, axis=-1)                 # (B, H+1, W+1, 4C)
    return patches.reshape(B * (H + 1) * (W + 1), 4 * C), (B, H, W)


def _convT_s2_phase_weight(w):
    """PyTorch ConvTranspose2d weight (Cin, Cout, 4, 4) -> (4*Cin, 4*Cout).

    Row block (wy, wx) = 2x2 input tap, column block (dy, dx) = output
    sub-pixel phase; entry = w[cin, cout, 2*(1-wy)+dy, 2*(1-wx)+dx].
    """
    Cin, Cout, k, _ = w.shape
    assert k == 4
    wr = w.reshape(Cin, Cout, 2, 2, 2, 2)        # (Cin,Cout, ay,dy, ax,dx); ky=2*ay+dy
    wt = jnp.transpose(wr, (2, 4, 0, 3, 5, 1))   # (ay, ax, Cin, dy, dx, Cout)
    wt = wt[::-1, ::-1]                          # ay,ax -> wy=1-ay, wx=1-ax
    return wt.reshape(4 * Cin, 4 * Cout)


def _phase_pixel_shuffle(y_mat, B, H, W, Cout):
    """(B*(H+1)*(W+1), 4*Cout) phase outputs -> (B, 2H, 2W, Cout) NHWC."""
    y = y_mat.reshape(B, H + 1, W + 1, 2, 2, Cout)
    y = jnp.transpose(y, (0, 1, 3, 2, 4, 5))                 # (B, t, dy, u, dx, C)
    y = y.reshape(B, 2 * (H + 1), 2 * (W + 1), Cout)
    return y[:, 1:2 * H + 1, 1:2 * W + 1, :]


# ----------------------------------------------------------------------------
# Parameter preparation (BN fold + phase reorg + bf16 cast) and forward pass
# ----------------------------------------------------------------------------
def _bn_fold(conv_bias, gamma, beta, mean, var, eps=BN_EPS):
    scale = gamma / jnp.sqrt(var + eps)
    shift = beta + (conv_bias - mean) * scale
    return scale, shift


def prepare_decoder_params(params):
    """Fold inference-mode BN into weights, reorganize ConvT weights into
    phase-matmul form, cast the matmul path to bf16 (shifts stay f32)."""
    p = {}
    # conv1: 1x1 transposed conv == plain matmul (Din, 512)
    s1, sh1 = _bn_fold(params['b1'], *params['bn1'])
    p['w1'] = (params['w1'][:, :, 0, 0] * s1[None, :]).astype(jnp.bfloat16)
    p['sh1'] = sh1.astype(jnp.float32)

    # conv2: 4x4 on a 1x1 input == matmul (512, 4*4*64); columns = (oy, ox, cout)
    s2, sh2 = _bn_fold(params['b2'], *params['bn2'])
    w2 = params['w2'] * s2[None, :, None, None]
    p['w2'] = jnp.transpose(w2, (0, 2, 3, 1)).reshape(512, 16 * 64).astype(jnp.bfloat16)
    p['sh2'] = jnp.tile(sh2, 16).astype(jnp.float32)

    # conv3 / conv4 / conv5: phase-decomposed stride-2 transposed convs
    for i in (3, 4, 5):
        s, sh = _bn_fold(params[f'b{i}'], *params[f'bn{i}'])
        wf = params[f'w{i}'] * s[None, :, None, None]
        p[f'w{i}'] = _convT_s2_phase_weight(wf).astype(jnp.bfloat16)
        p[f'sh{i}'] = jnp.tile(sh, 4).astype(jnp.float32)

    # conv_final: no BN / ReLU; pad Cout 1 -> 32 for a lane-dense N = 128 output
    wfin = jnp.pad(params['wf'], ((0, 0), (0, COUT_PAD_FINAL - 1), (0, 0), (0, 0)))
    p['wf'] = _convT_s2_phase_weight(wfin).astype(jnp.bfloat16)
    p['shf'] = jnp.tile(jnp.pad(params['bf'], (0, COUT_PAD_FINAL - 1)), 4).astype(jnp.float32)
    return p


def conv_decoder_forward(z, p):
    """z: (B, input_dim) f32  ->  mu_img (B, 1, 64, 64) f32 (NCHW)."""
    B = z.shape[0]

    # conv1 + conv2 (+BN+ReLU): one fused kernel -> (B, 4, 4, 64) NHWC bf16
    h = decoder_head(z.astype(jnp.bfloat16), p['w1'], p['sh1'], p['w2'], p['sh2'])
    h = h.reshape(B, 4, 4, 64)

    # conv3 / conv4 / conv5: k=4, s=2, p=1 (+BN+ReLU) via phase matmuls
    for i in (3, 4, 5):
        x_mat, (B_, H, W) = _convT_s2_phase_patches(h)
        y_mat = matmul_shift(x_mat, p[f'w{i}'], p[f'sh{i}'],
                             relu=True, out_dtype=jnp.bfloat16)
        cout = p[f'w{i}'].shape[1] // 4
        h = _phase_pixel_shuffle(y_mat, B_, H, W, cout)

    # conv_final: k=4, s=2, p=1, Cout=1 (padded to 32), no BN / ReLU
    x_mat, (B_, H, W) = _convT_s2_phase_patches(h)
    y_mat = matmul_shift(x_mat, p['wf'], p['shf'], relu=False, out_dtype=jnp.float32)
    mu = _phase_pixel_shuffle(y_mat, B_, H, W, COUT_PAD_FINAL)[..., :1]
    return jnp.transpose(mu, (0, 3, 1, 2))                   # NCHW (B, 1, 64, 64)


# ----------------------------------------------------------------------------
# Independent reference: transposed convs via lax.conv_general_dilated
# (lhs dilation + flipped kernel), same bf16-in / f32-accumulate discipline.
# ----------------------------------------------------------------------------
def _ref_convT_layer(x_nhwc, w, bias, bn, *, stride, padding, relu):
    Cin, Cout, k, _ = w.shape
    if bn is not None:
        scale, shift = _bn_fold(bias, *bn)
        w = w * scale[None, :, None, None]
    else:
        shift = bias
    w_hwio = jnp.transpose(w, (2, 3, 0, 1))[::-1, ::-1].astype(jnp.bfloat16)
    pad = k - 1 - padding
    y = jax.lax.conv_general_dilated(
        x_nhwc.astype(jnp.bfloat16), w_hwio,
        window_strides=(1, 1), padding=((pad, pad), (pad, pad)),
        lhs_dilation=(stride, stride),
        dimension_numbers=('NHWC', 'HWIO', 'NHWC'),
        preferred_element_type=jnp.float32)
    y = y + shift.astype(jnp.float32)
    if relu:
        y = jnp.maximum(y, 0.0)
    return y


def conv_decoder_reference(z, params):
    B, Din = z.shape
    h = z.reshape(B, 1, 1, Din)
    h = _ref_convT_layer(h, params['w1'], params['b1'], params['bn1'],
                         stride=1, padding=0, relu=True)
    h = _ref_convT_layer(h, params['w2'], params['b2'], params['bn2'],
                         stride=1, padding=0, relu=True)
    h = _ref_convT_layer(h, params['w3'], params['b3'], params['bn3'],
                         stride=2, padding=1, relu=True)
    h = _ref_convT_layer(h, params['w4'], params['b4'], params['bn4'],
                         stride=2, padding=1, relu=True)
    h = _ref_convT_layer(h, params['w5'], params['b5'], params['bn5'],
                         stride=2, padding=1, relu=True)
    h = _ref_convT_layer(h, params['wf'], params['bf'], None,
                         stride=2, padding=1, relu=False)
    return jnp.transpose(h, (0, 3, 1, 2))


# ----------------------------------------------------------------------------
# Deterministic parameter init (shapes from ConvDecoder.__init__)
# ----------------------------------------------------------------------------
def init_params(key, input_dim):
    def conv_wb(k, cin, cout, ksz):
        kw, kb = jax.random.split(k)
        bound = 1.0 / math.sqrt(cin * ksz * ksz)
        w = jax.random.uniform(kw, (cin, cout, ksz, ksz), jnp.float32, -bound, bound)
        b = jax.random.uniform(kb, (cout,), jnp.float32, -bound, bound)
        return w, b

    def bn(c):  # gamma, beta, running_mean, running_var (PyTorch defaults)
        return (jnp.ones((c,), jnp.float32), jnp.zeros((c,), jnp.float32),
                jnp.zeros((c,), jnp.float32), jnp.ones((c,), jnp.float32))

    ks = jax.random.split(key, 6)
    p = {}
    p['w1'], p['b1'] = conv_wb(ks[0], input_dim, 512, 1); p['bn1'] = bn(512)
    p['w2'], p['b2'] = conv_wb(ks[1], 512, 64, 4);        p['bn2'] = bn(64)
    p['w3'], p['b3'] = conv_wb(ks[2], 64, 64, 4);         p['bn3'] = bn(64)
    p['w4'], p['b4'] = conv_wb(ks[3], 64, 32, 4);         p['bn4'] = bn(32)
    p['w5'], p['b5'] = conv_wb(ks[4], 32, 32, 4);         p['bn5'] = bn(32)
    p['wf'], p['bf'] = conv_wb(ks[5], 32, 1, 4)
    return p


if __name__ == "__main__":
    key = jax.random.PRNGKey(0)
    kz, kp = jax.random.split(key)
    B, input_dim = 2, 32
    z = jax.random.normal(kz, (B, input_dim), jnp.float32)
    params = init_params(kp, input_dim)
    prepped = prepare_decoder_params(params)   # BN folded, phase-reordered, bf16

    fwd = jax.jit(conv_decoder_forward)
    out = jax.block_until_ready(fwd(z, prepped))
    assert out.shape == (B, 1, 64, 64), out.shape

    # Independent lowering check (lax dilated conv, not the phase matmul path).
    ref = jax.block_until_ready(jax.jit(conv_decoder_reference)(z, params))
    max_err = float(jnp.max(jnp.abs(out - ref)))
    assert bool(jnp.allclose(out, ref, atol=2e-2, rtol=2e-2)), max_err

    print("KERNEL_OK")
</pallas_src>

<mosaic_0001>
module attributes {stable_mosaic.version = 11 : i64} {
  func.func @_head_kernel(%arg0: i32, %arg1: memref<2x32xbf16, #tpu.memory_space<vmem>>, %arg2: memref<32x512xbf16, #tpu.memory_space<vmem>>, %arg3: memref<1x512xf32, #tpu.memory_space<vmem>>, %arg4: memref<512x512xbf16, #tpu.memory_space<vmem>>, %arg5: memref<1x512xf32, #tpu.memory_space<vmem>>, %arg6: memref<2x512xbf16, #tpu.memory_space<vmem>>) attributes {dimension_semantics = [#tpu.dimension_semantics<parallel>], iteration_bounds = array<i64: 2>, scalar_prefetch = 0 : i64, scratch_operands = 0 : i64, tpu.core_type = #tpu.core_type<tc>, window_params = [{pipeline_mode = #tpu.pipeline_mode<synchronous>, transform_indices = @transform_0, window_bounds = array<i64: 2, 32>}, {pipeline_mode = #tpu.pipeline_mode<synchronous>, transform_indices = @transform_1, window_bounds = array<i64: 32, 512>}, {pipeline_mode = #tpu.pipeline_mode<synchronous>, transform_indices = @transform_2, window_bounds = array<i64: 1, 512>}, {transform_indices = @transform_3, window_bounds = array<i64: 512, 512>}, {transform_indices = @transform_4, window_bounds = array<i64: 1, 512>}, {transform_indices = @transform_5, window_bounds = array<i64: 2, 512>}]} {
    %c0 = arith.constant 0 : index
    %c0_0 = arith.constant 0 : index
    %0 = vector.load %arg1[%c0, %c0_0] : memref<2x32xbf16, #tpu.memory_space<vmem>>, vector<2x32xbf16>
    %c0_1 = arith.constant 0 : index
    %c0_2 = arith.constant 0 : index
    %1 = vector.load %arg2[%c0_1, %c0_2] : memref<32x512xbf16, #tpu.memory_space<vmem>>, vector<32x512xbf16>
    %cst = arith.constant dense<0.000000e+00> : vector<2x512xf32>
    %2 = tpu.matmul %0, %1, %cst {dimension_numbers = #tpu.dot_dimension_numbers<[1], [0], [0], [1], [0, 0, 1, 1], [], []>} : vector<2x32xbf16>, vector<32x512xbf16>, vector<2x512xf32> -> vector<2x512xf32>
    %c0_3 = arith.constant 0 : index
    %c0_4 = arith.constant 0 : index
    %3 = vector.load %arg3[%c0_3, %c0_4] : memref<1x512xf32, #tpu.memory_space<vmem>>, vector<1x512xf32>
    %4 = vector.broadcast %3 : vector<1x512xf32> to vector<2x512xf32>
    %5 = arith.addf %2, %4 : vector<2x512xf32>
    %cst_5 = arith.constant 0.000000e+00 : f32
    %6 = vector.broadcast %cst_5 : f32 to vector<2x512xf32>
    %7 = arith.maximumf %5, %6 : vector<2x512xf32>
    %8 = arith.truncf %7 : vector<2x512xf32> to vector<2x512xbf16>
    %c0_6 = arith.constant 0 : index
    %c0_7 = arith.constant 0 : index
    %9 = vector.load %arg4[%c0_6, %c0_7] : memref<512x512xbf16, #tpu.memory_space<vmem>>, vector<512x512xbf16>
    %cst_8 = arith.constant dense<0.000000e+00> : vector<2x512xf32>
    %10 = tpu.matmul %8, %9, %cst_8 {dimension_numbers = #tpu.dot_dimension_numbers<[1], [0], [0], [1], [0, 0, 1, 1], [], []>} : vector<2x512xbf16>, vector<512x512xbf16>, vector<2x512xf32> -> vector<2x512xf32>
    %c0_9 = arith.constant 0 : index
    %c0_10 = arith.constant 0 : index
    %11 = vector.load %arg5[%c0_9, %c0_10] : memref<1x512xf32, #tpu.memory_space<vmem>>, vector<1x512xf32>
    %12 = vector.broadcast %11 : vector<1x512xf32> to vector<2x512xf32>
    %13 = arith.addf %10, %12 : vector<2x512xf32>
    %cst_11 = arith.constant 0.000000e+00 : f32
    %14 = vector.broadcast %cst_11 : f32 to vector<2x512xf32>
    %15 = arith.maximumf %13, %14 : vector<2x512xf32>
    %16 = arith.truncf %15 : vector<2x512xf32> to vector<2x512xbf16>
    %c0_12 = arith.constant 0 : index
    %c0_13 = arith.constant 0 : index
    %17 = vector.load %arg6[%c0_12, %c0_13] : memref<2x512xbf16, #tpu.memory_space<vmem>>, vector<2x512xbf16>
    tpu.vector_store %arg6[%c0_12, %c0_13], %16 {strides = array<i32>} : memref<2x512xbf16, #tpu.memory_space<vmem>>, vector<2x512xbf16>,
    return
  }
  func.func @transform_0(%arg0: i32) -> (i32, i32) {
    %c0_i32 = arith.constant 0 : i32
    %c0_i32_0 = arith.constant 0 : i32
    %c0_i32_1 = arith.constant 0 : i32
    return %c0_i32, %c0_i32_0 : i32, i32
  }
  func.func @transform_1(%arg0: i32) -> (i32, i32) {
    %c0_i32 = arith.constant 0 : i32
    %c0_i32_0 = arith.constant 0 : i32
    %c0_i32_1 = arith.constant 0 : i32
    return %c0_i32, %c0_i32_0 : i32, i32
  }
  func.func @transform_2(%arg0: i32) -> (i32, i32) {
    %c0_i32 = arith.constant 0 : i32
    %c0_i32_0 = arith.constant 0 : i32
    %c0_i32_1 = arith.constant 0 : i32
    return %c0_i32, %c0_i32_0 : i32, i32
  }
  func.func @transform_3(%arg0: i32) -> (i32, i32) {
    %c0_i32 = arith.constant 0 : i32
    %c0_i32_0 = arith.constant 0 : i32
    return %c0_i32, %arg0 : i32, i32
  }
  func.func @transform_4(%arg0: i32) -> (i32, i32) {
    %c0_i32 = arith.constant 0 : i32
    %c0_i32_0 = arith.constant 0 : i32
    return %c0_i32, %arg0 : i32, i32
  }
  func.func @transform_5(%arg0: i32) -> (i32, i32) {
    %c0_i32 = arith.constant 0 : i32
    %c0_i32_0 = arith.constant 0 : i32
    return %c0_i32, %arg0 : i32, i32
  }
}

module attributes {stable_mosaic.version = 11 : i64} {
  func.func @_matmul_shift_kernel(%arg0: i32, %arg1: memref<32x256xbf16, #tpu.memory_space<vmem>>, %arg2: memref<256x256xbf16, #tpu.memory_space<vmem>>, %arg3: memref<1x256xf32, #tpu.memory_space<vmem>>, %arg4: memref<32x256xbf16, #tpu.memory_space<vmem>>) attributes {dimension_semantics = [#tpu.dimension_semantics<parallel>], iteration_bounds = array<i64: 2>, scalar_prefetch = 0 : i64, scratch_operands = 0 : i64, tpu.core_type = #tpu.core_type<tc>, window_params = [{transform_indices = @transform_0, window_bounds = array<i64: 32, 256>}, {pipeline_mode = #tpu.pipeline_mode<synchronous>, transform_indices = @transform_1, window_bounds = array<i64: 256, 256>}, {pipeline_mode = #tpu.pipeline_mode<synchronous>, transform_indices = @transform_2, window_bounds = array<i64: 1, 256>}, {transform_indices = @transform_3, window_bounds = array<i64: 32, 256>}]} {
    %c0 = arith.constant 0 : index
    %c0_0 = arith.constant 0 : index
    %0 = vector.load %arg1[%c0, %c0_0] : memref<32x256xbf16, #tpu.memory_space<vmem>>, vector<32x256xbf16>
    %c0_1 = arith.constant 0 : index
    %c0_2 = arith.constant 0 : index
    %1 = vector.load %arg2[%c0_1, %c0_2] : memref<256x256xbf16, #tpu.memory_space<vmem>>, vector<256x256xbf16>
    %cst = arith.constant dense<0.000000e+00> : vector<32x256xf32>
    %2 = tpu.matmul %0, %1, %cst {dimension_numbers = #tpu.dot_dimension_numbers<[1], [0], [0], [1], [0, 0, 1, 1], [], []>} : vector<32x256xbf16>, vector<256x256xbf16>, vector<32x256xf32> -> vector<32x256xf32>
    %c0_3 = arith.constant 0 : index
    %c0_4 = arith.constant 0 : index
    %3 = vector.load %arg3[%c0_3, %c0_4] : memref<1x256xf32, #tpu.memory_space<vmem>>, vector<1x256xf32>
    %4 = vector.broadcast %3 : vector<1x256xf32> to vector<32x256xf32>
    %5 = arith.addf %2, %4 : vector<32x256xf32>
    %cst_5 = arith.constant 0.000000e+00 : f32
    %6 = vector.broadcast %cst_5 : f32 to vector<32x256xf32>
    %7 = arith.maximumf %5, %6 : vector<32x256xf32>
    %8 = arith.truncf %7 : vector<32x256xf32> to vector<32x256xbf16>
    %c0_6 = arith.constant 0 : index
    %c0_7 = arith.constant 0 : index
    %9 = vector.load %arg4[%c0_6, %c0_7] : memref<32x256xbf16, #tpu.memory_space<vmem>>, vector<32x256xbf16>
    tpu.vector_store %arg4[%c0_6, %c0_7], %8 {strides = array<i32>} : memref<32x256xbf16, #tpu.memory_space<vmem>>, vector<32x256xbf16>,
    return
  }
  func.func @transform_0(%arg0: i32) -> (i32, i32) {
    %c0_i32 = arith.constant 0 : i32
    %c0_i32_0 = arith.constant 0 : i32
    return %arg0, %c0_i32 : i32, i32
  }
  func.func @transform_1(%arg0: i32) -> (i32, i32) {
    %c0_i32 = arith.constant 0 : i32
    %c0_i32_0 = arith.constant 0 : i32
    %c0_i32_1 = arith.constant 0 : i32
    return %c0_i32, %c0_i32_0 : i32, i32
  }
  func.func @transform_2(%arg0: i32) -> (i32, i32) {
    %c0_i32 = arith.constant 0 : i32
    %c0_i32_0 = arith.constant 0 : i32
    %c0_i32_1 = arith.constant 0 : i32
    return %c0_i32, %c0_i32_0 : i32, i32
  }
  func.func @transform_3(%arg0: i32) -> (i32, i32) {
    %c0_i32 = arith.constant 0 : i32
    %c0_i32_0 = arith.constant 0 : i32
    return %arg0, %c0_i32 : i32, i32
  }
}

module attributes {stable_mosaic.version = 11 : i64} {
  func.func @_matmul_shift_kernel(%arg0: i32, %arg1: memref<96x256xbf16, #tpu.memory_space<vmem>>, %arg2: memref<256x128xbf16, #tpu.memory_space<vmem>>, %arg3: memref<1x128xf32, #tpu.memory_space<vmem>>, %arg4: memref<96x128xbf16, #tpu.memory_space<vmem>>) attributes {dimension_semantics = [#tpu.dimension_semantics<parallel>], iteration_bounds = array<i64: 2>, scalar_prefetch = 0 : i64, scratch_operands = 0 : i64, tpu.core_type = #tpu.core_type<tc>, window_params = [{transform_indices = @transform_0, window_bounds = array<i64: 96, 256>}, {pipeline_mode = #tpu.pipeline_mode<synchronous>, transform_indices = @transform_1, window_bounds = array<i64: 256, 128>}, {pipeline_mode = #tpu.pipeline_mode<synchronous>, transform_indices = @transform_2, window_bounds = array<i64: 1, 128>}, {transform_indices = @transform_3, window_bounds = array<i64: 96, 128>}]} {
    %c0 = arith.constant 0 : index
    %c0_0 = arith.constant 0 : index
    %0 = vector.load %arg1[%c0, %c0_0] : memref<96x256xbf16, #tpu.memory_space<vmem>>, vector<96x256xbf16>
    %c0_1 = arith.constant 0 : index
    %c0_2 = arith.constant 0 : index
    %1 = vector.load %arg2[%c0_1, %c0_2] : memref<256x128xbf16, #tpu.memory_space<vmem>>, vector<256x128xbf16>
    %cst = arith.constant dense<0.000000e+00> : vector<96x128xf32>
    %2 = tpu.matmul %0, %1, %cst {dimension_numbers = #tpu.dot_dimension_numbers<[1], [0], [0], [1], [0, 0, 1, 1], [], []>} : vector<96x256xbf16>, vector<256x128xbf16>, vector<96x128xf32> -> vector<96x128xf32>
    %c0_3 = arith.constant 0 : index
    %c0_4 = arith.constant 0 : index
    %3 = vector.load %arg3[%c0_3, %c0_4] : memref<1x128xf32, #tpu.memory_space<vmem>>, vector<1x128xf32>
    %4 = vector.broadcast %3 : vector<1x128xf32> to vector<96x128xf32>
    %5 = arith.addf %2, %4 : vector<96x128xf32>
    %cst_5 = arith.constant 0.000000e+00 : f32
    %6 = vector.broadcast %cst_5 : f32 to vector<96x128xf32>
    %7 = arith.maximumf %5, %6 : vector<96x128xf32>
    %8 = arith.truncf %7 : vector<96x128xf32> to vector<96x128xbf16>
    %c0_6 = arith.constant 0 : index
    %c0_7 = arith.constant 0 : index
    %9 = vector.load %arg4[%c0_6, %c0_7] : memref<96x128xbf16, #tpu.memory_space<vmem>>, vector<96x128xbf16>
    tpu.vector_store %arg4[%c0_6, %c0_7], %8 {strides = array<i32>} : memref<96x128xbf16, #tpu.memory_space<vmem>>, vector<96x128xbf16>,
    return
  }
  func.func @transform_0(%arg0: i32) -> (i32, i32) {
    %c0_i32 = arith.constant 0 : i32
    %c0_i32_0 = arith.constant 0 : i32
    return %arg0, %c0_i32 : i32, i32
  }
  func.func @transform_1(%arg0: i32) -> (i32, i32) {
    %c0_i32 = arith.constant 0 : i32
    %c0_i32_0 = arith.constant 0 : i32
    %c0_i32_1 = arith.constant 0 : i32
    return %c0_i32, %c0_i32_0 : i32, i32
  }
  func.func @transform_2(%arg0: i32) -> (i32, i32) {
    %c0_i32 = arith.constant 0 : i32
    %c0_i32_0 = arith.constant 0 : i32
    %c0_i32_1 = arith.constant 0 : i32
    return %c0_i32, %c0_i32_0 : i32, i32
  }
  func.func @transform_3(%arg0: i32) -> (i32, i32) {
    %c0_i32 = arith.constant 0 : i32
    %c0_i32_0 = arith.constant 0 : i32
    return %arg0, %c0_i32 : i32, i32
  }
}

module attributes {stable_mosaic.version = 11 : i64} {
  func.func @_matmul_shift_kernel(%arg0: i32, %arg1: memref<304x128xbf16, #tpu.memory_space<vmem>>, %arg2: memref<128x128xbf16, #tpu.memory_space<vmem>>, %arg3: memref<1x128xf32, #tpu.memory_space<vmem>>, %arg4: memref<304x128xbf16, #tpu.memory_space<vmem>>) attributes {dimension_semantics = [#tpu.dimension_semantics<parallel>], iteration_bounds = array<i64: 2>, scalar_prefetch = 0 : i64, scratch_operands = 0 : i64, tpu.core_type = #tpu.core_type<tc>, window_params = [{transform_indices = @transform_0, window_bounds = array<i64: 304, 128>}, {pipeline_mode = #tpu.pipeline_mode<synchronous>, transform_indices = @transform_1, window_bounds = array<i64: 128, 128>}, {pipeline_mode = #tpu.pipeline_mode<synchronous>, transform_indices = @transform_2, window_bounds = array<i64: 1, 128>}, {transform_indices = @transform_3, window_bounds = array<i64: 304, 128>}]} {
    %c0 = arith.constant 0 : index
    %c0_0 = arith.constant 0 : index
    %0 = vector.load %arg1[%c0, %c0_0] : memref<304x128xbf16, #tpu.memory_space<vmem>>, vector<304x128xbf16>
    %c0_1 = arith.constant 0 : index
    %c0_2 = arith.constant 0 : index
    %1 = vector.load %arg2[%c0_1, %c0_2] : memref<128x128xbf16, #tpu.memory_space<vmem>>, vector<128x128xbf16>
    %cst = arith.constant dense<0.000000e+00> : vector<304x128xf32>
    %2 = tpu.matmul %0, %1, %cst {dimension_numbers = #tpu.dot_dimension_numbers<[1], [0], [0], [1], [0, 0, 1, 1], [], []>} : vector<304x128xbf16>, vector<128x128xbf16>, vector<304x128xf32> -> vector<304x128xf32>
    %c0_3 = arith.constant 0 : index
    %c0_4 = arith.constant 0 : index
    %3 = vector.load %arg3[%c0_3, %c0_4] : memref<1x128xf32, #tpu.memory_space<vmem>>, vector<1x128xf32>
    %4 = vector.broadcast %3 : vector<1x128xf32> to vector<304x128xf32>
    %5 = arith.addf %2, %4 : vector<304x128xf32>
    %cst_5 = arith.constant 0.000000e+00 : f32
    %6 = vector.broadcast %cst_5 : f32 to vector<304x128xf32>
    %7 = arith.maximumf %5, %6 : vector<304x128xf32>
    %8 = arith.truncf %7 : vector<304x128xf32> to vector<304x128xbf16>
    %c0_6 = arith.constant 0 : index
    %c0_7 = arith.constant 0 : index
    %9 = vector.load %arg4[%c0_6, %c0_7] : memref<304x128xbf16, #tpu.memory_space<vmem>>, vector<304x128xbf16>
    tpu.vector_store %arg4[%c0_6, %c0_7], %8 {strides = array<i32>} : memref<304x128xbf16, #tpu.memory_space<vmem>>, vector<304x128xbf16>,
    return
  }
  func.func @transform_0(%arg0: i32) -> (i32, i32) {
    %c0_i32 = arith.constant 0 : i32
    %c0_i32_0 = arith.constant 0 : i32
    return %arg0, %c0_i32 : i32, i32
  }
  func.func @transform_1(%arg0: i32) -> (i32, i32) {
    %c0_i32 = arith.constant 0 : i32
    %c0_i32_0 = arith.constant 0 : i32
    %c0_i32_1 = arith.constant 0 : i32
    return %c0_i32, %c0_i32_0 : i32, i32
  }
  func.func @transform_2(%arg0: i32) -> (i32, i32) {
    %c0_i32 = arith.constant 0 : i32
    %c0_i32_0 = arith.constant 0 : i32
    %c0_i32_1 = arith.constant 0 : i32
    return %c0_i32, %c0_i32_0 : i32, i32
  }
  func.func @transform_3(%arg0: i32) -> (i32, i32) {
    %c0_i32 = arith.constant 0 : i32
    %c0_i32_0 = arith.constant 0 : i32
    return %arg0, %c0_i32 : i32, i32
  }
}

module attributes {stable_mosaic.version = 11 : i64} {
  func.func @_matmul_shift_kernel(%arg0: i32, %arg1: memref<1104x128xbf16, #tpu.memory_space<vmem>>, %arg2: memref<128x128xbf16, #tpu.memory_space<vmem>>, %arg3: memref<1x128xf32, #tpu.memory_space<vmem>>, %arg4: memref<1104x128xf32, #tpu.memory_space<vmem>>) attributes {dimension_semantics = [#tpu.dimension_semantics<parallel>], iteration_bounds = array<i64: 2>, scalar_prefetch = 0 : i64, scratch_operands = 0 : i64, tpu.core_type = #tpu.core_type<tc>, window_params = [{transform_indices = @transform_0, window_bounds = array<i64: 1104, 128>}, {pipeline_mode = #tpu.pipeline_mode<synchronous>, transform_indices = @transform_1, window_bounds = array<i64: 128, 128>}, {pipeline_mode = #tpu.pipeline_mode<synchronous>, transform_indices = @transform_2, window_bounds = array<i64: 1, 128>}, {transform_indices = @transform_3, window_bounds = array<i64: 1104, 128>}]} {
    %c0 = arith.constant 0 : index
    %c0_0 = arith.constant 0 : index
    %0 = vector.load %arg1[%c0, %c0_0] : memref<1104x128xbf16, #tpu.memory_space<vmem>>, vector<1104x128xbf16>
    %c0_1 = arith.constant 0 : index
    %c0_2 = arith.constant 0 : index
    %1 = vector.load %arg2[%c0_1, %c0_2] : memref<128x128xbf16, #tpu.memory_space<vmem>>, vector<128x128xbf16>
    %cst = arith.constant dense<0.000000e+00> : vector<1104x128xf32>
    %2 = tpu.matmul %0, %1, %cst {dimension_numbers = #tpu.dot_dimension_numbers<[1], [0], [0], [1], [0, 0, 1, 1], [], []>} : vector<1104x128xbf16>, vector<128x128xbf16>, vector<1104x128xf32> -> vector<1104x128xf32>
    %c0_3 = arith.constant 0 : index
    %c0_4 = arith.constant 0 : index
    %3 = vector.load %arg3[%c0_3, %c0_4] : memref<1x128xf32, #tpu.memory_space<vmem>>, vector<1x128xf32>
    %4 = vector.broadcast %3 : vector<1x128xf32> to vector<1104x128xf32>
    %5 = arith.addf %2, %4 : vector<1104x128xf32>
    %c0_5 = arith.constant 0 : index
    %c0_6 = arith.constant 0 : index
    %6 = vector.load %arg4[%c0_5, %c0_6] : memref<1104x128xf32, #tpu.memory_space<vmem>>, vector<1104x128xf32>
    tpu.vector_store %arg4[%c0_5, %c0_6], %5 {strides = array<i32>} : memref<1104x128xf32, #tpu.memory_space<vmem>>, vector<1104x128xf32>,
    return
  }
  func.func @transform_0(%arg0: i32) -> (i32, i32) {
    %c0_i32 = arith.constant 0 : i32
    %c0_i32_0 = arith.constant 0 : i32
    return %arg0, %c0_i32 : i32, i32
  }
  func.func @transform_1(%arg0: i32) -> (i32, i32) {
    %c0_i32 = arith.constant 0 : i32
    %c0_i32_0 = arith.constant 0 : i32
    %c0_i32_1 = arith.constant 0 : i32
    return %c0_i32, %c0_i32_0 : i32, i32
  }
  func.func @transform_2(%arg0: i32) -> (i32, i32) {
    %c0_i32 = arith.constant 0 : i32
    %c0_i32_0 = arith.constant 0 : i32
    %c0_i32_1 = arith.constant 0 : i32
    return %c0_i32, %c0_i32_0 : i32, i32
  }
  func.func @transform_3(%arg0: i32) -> (i32, i32) {
    %c0_i32 = arith.constant 0 : i32
    %c0_i32_0 = arith.constant 0 : i32
    return %arg0, %c0_i32 : i32, i32
  }
}

</mosaic_0001>

<llo_original>
// kernel: conv_decoder_forward.6
$region0: #{conv_decoder_forward.6}
  #allocation0 [shape = 'u32[]', space=smem, size = 0x4, offset = 0x4, fixed_abs, tag = 'smem constant byte address 0x4 - core index']
  #allocation1 [shape = 'u32[144,128]{1,0:T(1,128)}', space=vmem, size = 0x12000, scoped, tag = 'internal scratch']
  %s0 = inlined_call_operand.vmem [shape: bf16[64,256], index: 0, kind: input, shape index: {}]
  %s1 = inlined_call_operand.hbm [shape: bf16[256,256], index: 1, kind: input, shape index: {}]
  %s2 = inlined_call_operand.hbm [shape: f32[1,256], index: 2, kind: input, shape index: {}]
  %s3 = inlined_call_operand.vmem [shape: bf16[64,256], index: 3, kind: output, shape index: {}]
  %s4 = sld [smem:[#allocation0]]
  $region53: #{conv_decoder_forward.6} parent=0
    _
  %s6 = ssub.s32 1, %s4
  %s7 = scalar_select 0, %s6, %s4
  $region1: #{conv_decoder_forward.6} parent=0
    #allocation2 [shape = 'u8[131072]{0}', space=vmem, size = 0x20000, scoped, tag = 'input window, operand 1, single buffered']
    #allocation3 [shape = 's32[2]{0}', space=sflag, size = 0x8, scoped, tag = 'scoped memory for conv_decoder_forward.6']
    #allocation4 [shape = 'u8[1024]{0}', space=vmem, size = 0x400, scoped, tag = 'input window, operand 2, single buffered']
    #allocation5 [shape = 's32[1]{0}', space=sflag, size = 0x4, scoped, tag = 'scoped memory for conv_decoder_forward.6']
    %8 = vsyncpa [#allocation3], 0
    %9 = vsyncpa [#allocation5], 0
    loop: start=0, step=1, limit=4
    $region2: #{conv_decoder_forward.6} parent=1 // loop_pre_header
      _
    $region3: #{conv_decoder_forward.6} parent=1 // loop_header
      %s11 = sphi 0, %s15
      %p12 = scmp.ge.s32.totalorder %s11, 4
      %s21 = sphi 0, %s23
      %s24 = sphi 0, %s21
      %s25 = sphi 0, %s24
      %s41 = sphi 0, %s25
      %s45 = sphi 0, %s45
      %s47 = sphi 0, %s45
      %s48 = sphi 0, %s47
      %s62 = sphi 0, %s48
      %s66 = sphi 0, %s66
      %s68 = sphi 0, %s66
      %s69 = sphi 0, %s68
      %s83 = sphi 0, %s69
      %s89 = sphi 0, %s91
      %s92 = sphi 0, %s89
      %s93 = sphi 0, %s92
      %s109 = sphi 0, %s93
    $region4: #{conv_decoder_forward.6} parent=1 // loop_header_branch
      %14 = sbr.rel (%p12) target = $region8
    $region5: #{conv_decoder_forward.6} parent=1 // loop_body
      %s16 = ssub.s32 %s11, 1
      %s17 = ssub.s32 %s11, 2
      %s18 = sadd.s32 %s11, 1
      %s19 = ssub.s32 %s11, %s18
      %p20 = scmp.eq.s32.totalorder %s19, 0
      %s22 = sadd.s32 %s21, 1
      %s23 = scalar_select %p20, %s21, %s22
      %p26 = pneg %p20
      %p27 = scmp.eq.s32.totalorder %s11, 1
      %p28 = por %p26, %p27
      %p29 = scmp.ne.s32.totalorder %s21, %s24
      %p30 = scmp.eq.s32.totalorder %s11, 0
      %p31 = por %p29, %p30
      %p32 = scmp.ne.s32.totalorder %s21, %s24
      %p33 = scmp.eq.s32.totalorder %s16, 1
      %p34 = por %p32, %p33
      %p35 = scmp.ne.s32.totalorder %s24, %s25
      %p36 = scmp.eq.s32.totalorder %s16, 0
      %p37 = por %p35, %p36
      %p38 = scmp.ne.s32.totalorder %s24, %s25
      %p39 = scmp.eq.s32.totalorder %s17, 1
      %p40 = por %p38, %p39
      %p42 = scmp.ne.s32.totalorder %s25, %s41
      %p43 = scmp.eq.s32.totalorder %s17, 0
      %p44 = por %p42, %p43
      %s46 = sadd.s32 %s45, 1
      %p49 = scmp.eq.s32.totalorder %s11, 1
      %p50 = scmp.ne.s32.totalorder %s45, %s47
      %p51 = scmp.eq.s32.totalorder %s11, 0
      %p52 = por %p50, %p51
      %p53 = scmp.ne.s32.totalorder %s45, %s47
      %p54 = scmp.eq.s32.totalorder %s16, 1
      %p55 = por %p53, %p54
      %p56 = scmp.ne.s32.totalorder %s47, %s48
      %p57 = scmp.eq.s32.totalorder %s16, 0
      %p58 = por %p56, %p57
      %p59 = scmp.ne.s32.totalorder %s47, %s48
      %p60 = scmp.eq.s32.totalorder %s17, 1
      %p61 = por %p59, %p60
      %p63 = scmp.ne.s32.totalorder %s48, %s62
      %p64 = scmp.eq.s32.totalorder %s17, 0
      %p65 = por %p63, %p64
      %s67 = sadd.s32 %s66, 1
      %p70 = scmp.eq.s32.totalorder %s11, 1
      %p71 = scmp.ne.s32.totalorder %s66, %s68
      %p72 = scmp.eq.s32.totalorder %s11, 0
      %p73 = por %p71, %p72
      %p74 = scmp.ne.s32.totalorder %s66, %s68
      %p75 = scmp.eq.s32.totalorder %s16, 1
      %p76 = por %p74, %p75
      %p77 = scmp.ne.s32.totalorder %s68, %s69
      %p78 = scmp.eq.s32.totalorder %s16, 0
      %p79 = por %p77, %p78
      %p80 = scmp.ne.s32.totalorder %s68, %s69
      %p81 = scmp.eq.s32.totalorder %s17, 1
      %p82 = por %p80, %p81
      %p84 = scmp.ne.s32.totalorder %s69, %s83
      %p85 = scmp.eq.s32.totalorder %s17, 0
      %p86 = por %p84, %p85
      %s87 = ssub.s32 %s11, %s18
      %p88 = scmp.eq.s32.totalorder %s87, 0
      %s90 = sadd.s32 %s89, 1
      %s91 = scalar_select %p88, %s89, %s90
      %p94 = pneg %p88
      %p95 = scmp.eq.s32.totalorder %s11, 1
      %p96 = por %p94, %p95
      %p97 = scmp.ne.s32.totalorder %s89, %s92
      %p98 = scmp.eq.s32.totalorder %s11, 0
      %p99 = por %p97, %p98
      %p100 = scmp.ne.s32.totalorder %s89, %s92
      %p101 = scmp.eq.s32.totalorder %s16, 1
      %p102 = por %p100, %p101
      %p103 = scmp.ne.s32.totalorder %s92, %s93
      %p104 = scmp.eq.s32.totalorder %s16, 0
      %p105 = por %p103, %p104
      %p106 = scmp.ne.s32.totalorder %s92, %s93
      %p107 = scmp.eq.s32.totalorder %s17, 1
      %p108 = por %p106, %p107
      %p110 = scmp.ne.s32.totalorder %s93, %s109
      %p111 = scmp.eq.s32.totalorder %s17, 0
      %p112 = por %p110, %p111
      %p113 = scmp.le.s32.totalorder 1, %s11
      %p114 = scmp.lt.s32.totalorder %s11, 3
      %p115 = pnand %p113, %p114
      %p116 = pneg %p115
      // Predicated region
      $region9: #{conv_decoder_forward.6} parent=5 // pred_check
        _
      $region10: #{conv_decoder_forward.6} parent=5 // pred_check_branch
        %118 = sbr.rel (%p115) target = $region12
      $region11: #{conv_decoder_forward.6} parent=5 // pred_region
        %s119 = ssub.s32 %s11, 1
        // Predicated region
        $region13: #{conv_decoder_forward.6} parent=11 // pred_check
          %p120 = pneg %p58
        $region14: #{conv_decoder_forward.6} parent=11 // pred_check_branch
          %122 = sbr.rel (%p120) target = $region16
        $region15: #{conv_decoder_forward.6} parent=11 // pred_region
          %s124 = ssub.s32 4096, 4096
          %125 = vsyncadd [#allocation3], %s124
          %s126 = sshll.u32 [#allocation2], 4
          %s127 = int_to_ptr.vmem [resolvable:$true] %s126
          %132 = dma.hbm_to_vmem [thread:$0]  %s1, 4096, %s127, [#allocation3], 128, 128, 8
        $region16: #{conv_decoder_forward.6} parent=11 // pred_fallthru
          _
        // Predicated region
        $region17: #{conv_decoder_forward.6} parent=11 // pred_check
          %p133 = pneg %p79
        $region18: #{conv_decoder_forward.6} parent=11 // pred_check_branch
          %135 = sbr.rel (%p133) target = $region20
        $region19: #{conv_decoder_forward.6} parent=11 // pred_region
          %s137 = ssub.s32 32, 32
          %138 = vsyncadd [#allocation5], %s137
          %s140 = sshll.u32 [#allocation4], 4
          %s141 = int_to_ptr.vmem [resolvable:$true] %s140
          %143 = dma.hbm_to_vmem [thread:$0]  %s2, 32, %s141, [#allocation5]
        $region20: #{conv_decoder_forward.6} parent=11 // pred_fallthru
          _
      $region12: #{conv_decoder_forward.6} parent=5 // pred_fallthru
        _
      %p144 = scmp.lt.s32.totalorder %s11, 2
      // Predicated region
      $region21: #{conv_decoder_forward.6} parent=5 // pred_check
        %p145 = pneg %p144
      $region22: #{conv_decoder_forward.6} parent=5 // pred_check_branch
        %147 = sbr.rel (%p145) target = $region24
      $region23: #{conv_decoder_forward.6} parent=5 // pred_region
        // Predicated region
        $region25: #{conv_decoder_forward.6} parent=23 // pred_check
          %p148 = pneg %p31
        $region26: #{conv_decoder_forward.6} parent=23 // pred_check_branch
          %150 = sbr.rel (%p148) target = $region28
        $region27: #{conv_decoder_forward.6} parent=23 // pred_region
          %s151 = smul.u32 4, %s11
          %p152 = scmp.lt.s32.totalorder %s151, 7
          %s153 = scalar_select %p152, %s151, 7
          %s154 = smul.addr %s153, 2
          %s155 = smul.addr %s154, 4
          %s156 = scalar_lea.vmem %s0, %s155
          %s157 = smul.u32 4, %s11
        $region28: #{conv_decoder_forward.6} parent=23 // pred_fallthru
          _
      $region24: #{conv_decoder_forward.6} parent=5 // pred_fallthru
        _
      %p158 = scmp.le.s32.totalorder 1, %s11
      %p159 = scmp.lt.s32.totalorder %s11, 3
      %p160 = pnand %p158, %p159
      %p161 = pneg %p160
      // Predicated region
      $region29: #{conv_decoder_forward.6} parent=5 // pred_check
        _
      $region30: #{conv_decoder_forward.6} parent=5 // pred_check_branch
        %163 = sbr.rel (%p160) target = $region32
      $region31: #{conv_decoder_forward.6} parent=5 // pred_region
        %s164 = ssub.s32 %s11, 1
        // Predicated region
        $region33: #{conv_decoder_forward.6} parent=31 // pred_check
          %p165 = pneg %p58
        $region34: #{conv_decoder_forward.6} parent=31 // pred_check_branch
          %167 = sbr.rel (%p165) target = $region36
        $region35: #{conv_decoder_forward.6} parent=31 // pred_region
          %168 = dma.done [#allocation3], 4096
        $region36: #{conv_decoder_forward.6} parent=31 // pred_fallthru
          _
        // Predicated region
        $region37: #{conv_decoder_forward.6} parent=31 // pred_check
          %p169 = pneg %p79
        $region38: #{conv_decoder_forward.6} parent=31 // pred_check_branch
          %171 = sbr.rel (%p169) target = $region40
        $region39: #{conv_decoder_forward.6} parent=31 // pred_region
          %172 = dma.done [#allocation5], 32
        $region40: #{conv_decoder_forward.6} parent=31 // pred_fallthru
          _
        %s173 = smul.u32 4, %s16
        %p174 = scmp.lt.s32.totalorder %s173, 7
        %s175 = scalar_select %p174, %s173, 7
        %s176 = smul.addr %s175, 2
        %s177 = smul.addr %s176, 4
        %s178 = scalar_lea.vmem %s0, %s177
        %p179 = pneg %p37
        %p180 = pneg %p34
        %p181 = pneg %p58
        %p182 = pneg %p55
        %p183 = pneg %p79
        %p184 = pneg %p76
        %p185 = pneg %p105
        %p186 = pneg %p102
        %s187 = smul.u32 4, %s16
        %p188 = scmp.lt.s32.totalorder %s187, 7
        %s189 = scalar_select %p188, %s187, 7
        %s190 = smul.addr %s189, 2
        %s191 = smul.addr %s190, 4
        %s192 = scalar_lea.vmem %s3, %s191
        %s193 = smul.u32 4, %s16
        %p194 = scmp.lt.s32.totalorder %s193, 7
        %s195 = scalar_select %p194, %s193, 7
        %s196 = smul.addr %s195, 2
        %s197 = smul.addr %s196, 4
        %s198 = scalar_lea.vmem %s0, %s197
        %s199 = smul.u32 4, %s16
        %s200 = smul.u32 4, %s16
        %p201 = scmp.lt.s32.totalorder %s200, 7
        %s202 = scalar_select %p201, %s200, 7
        %s203 = smul.addr %s202, 2
        %s204 = smul.addr %s203, 4
        %s205 = scalar_lea.vmem %s3, %s204
        %s206 = smul.u32 4, %s16
        %v207 = vld [vmem:[%s198] sm:$0xff]
        %v208 = vld [vmem:[%s198 + $0x8] sm:$0xff]
        %v209 = vld [vmem:[%s198 + $0x10] sm:$0xff]
        %v210 = vld [vmem:[%s198 + $0x18] sm:$0xff]
        %v211 = vld [vmem:[#allocation2] sm:$0xff]
        %v212 = vld [vmem:[#allocation2 + $0x8] sm:$0xff]
        %v213 = vld [vmem:[#allocation2 + $0x10] sm:$0xff]
        %v214 = vld [vmem:[#allocation2 + $0x18] sm:$0xff]
        %v215 = vld [vmem:[#allocation2 + $0x20] sm:$0xff]
        %v216 = vld [vmem:[#allocation2 + $0x28] sm:$0xff]
        %v217 = vld [vmem:[#allocation2 + $0x30] sm:$0xff]
        %v218 = vld [vmem:[#allocation2 + $0x38] sm:$0xff]
        %v219 = vld [vmem:[#allocation2 + $0x40] sm:$0xff]
        %v220 = vld [vmem:[#allocation2 + $0x48] sm:$0xff]
        %v221 = vld [vmem:[#allocation2 + $0x50] sm:$0xff]
        %v222 = vld [vmem:[#allocation2 + $0x58] sm:$0xff]
        %v223 = vld [vmem:[#allocation2 + $0x60] sm:$0xff]
        %v224 = vld [vmem:[#allocation2 + $0x68] sm:$0xff]
        %v225 = vld [vmem:[#allocation2 + $0x70] sm:$0xff]
        %v226 = vld [vmem:[#allocation2 + $0x78] sm:$0xff]
        %v227 = vld [vmem:[#allocation2 + $0x80] sm:$0xff]
        %v228 = vld [vmem:[#allocation2 + $0x88] sm:$0xff]
        %v229 = vld [vmem:[#allocation2 + $0x90] sm:$0xff]
        %v230 = vld [vmem:[#allocation2 + $0x98] sm:$0xff]
        %v231 = vld [vmem:[#allocation2 + $0xa0] sm:$0xff]
        %v232 = vld [vmem:[#allocation2 + $0xa8] sm:$0xff]
        %v233 = vld [vmem:[#allocation2 + $0xb0] sm:$0xff]
        %v234 = vld [vmem:[#allocation2 + $0xb8] sm:$0xff]
        %v235 = vld [vmem:[#allocation2 + $0xc0] sm:$0xff]
        %v236 = vld [vmem:[#allocation2 + $0xc8] sm:$0xff]
        %v237 = vld [vmem:[#allocation2 + $0xd0] sm:$0xff]
        %v238 = vld [vmem:[#allocation2 + $0xd8] sm:$0xff]
        %v239 = vld [vmem:[#allocation2 + $0xe0] sm:$0xff]
        %v240 = vld [vmem:[#allocation2 + $0xe8] sm:$0xff]
        %v241 = vld [vmem:[#allocation2 + $0xf0] sm:$0xff]
        %v242 = vld [vmem:[#allocation2 + $0xf8] sm:$0xff]
        %v243 = vld [vmem:[#allocation4] sm:$0x3]
        %v245 = vlaneseq
        %v246 = vshrl.u32 %v245, 7
        %v247 = vsub.s32 0, %v246
        %v248 = vrot.slane %v243, %v247
        %v249 = vlaneseq
        %v250 = vshrl.u32 %v249, 7
        %v251 = vsub.s32 1, %v250
        %v252 = vrot.slane %v243, %v251
        %v259 = vunpack.c.l.b16 %v207
        %v260 = vunpack.c.h.b16 %v207
        %v261 = vunpack.c.l.b16 %v208
        %v262 = vunpack.c.h.b16 %v208
        %v263 = vunpack.c.l.b16 %v209
        %v264 = vunpack.c.h.b16 %v209
        %v265 = vunpack.c.l.b16 %v210
        %v266 = vunpack.c.h.b16 %v210
        %v267 = vpack.c.b16 %v261, %v259
        %v268 = vpack.c.b16 %v262, %v260
        %v269 = vpack.c.b16 %v265, %v263
        %v270 = vpack.c.b16 %v266, %v264
        %v307 = vunpack.c.l.b16 %v211
        %v308 = vunpack.c.h.b16 %v211
        %v309 = vunpack.c.l.b16 %v212
        %v310 = vunpack.c.h.b16 %v212
        %v311 = vunpack.c.l.b16 %v213
        %v312 = vunpack.c.h.b16 %v213
        %v313 = vunpack.c.l.b16 %v214
        %v314 = vunpack.c.h.b16 %v214
        %v315 = vunpack.c.l.b16 %v215
        %v316 = vunpack.c.h.b16 %v215
        %v317 = vunpack.c.l.b16 %v216
        %v318 = vunpack.c.h.b16 %v216
        %v319 = vunpack.c.l.b16 %v217
        %v320 = vunpack.c.h.b16 %v217
        %v321 = vunpack.c.l.b16 %v218
        %v322 = vunpack.c.h.b16 %v218
        %v323 = vunpack.c.l.b16 %v219
        %v324 = vunpack.c.h.b16 %v219
        %v325 = vunpack.c.l.b16 %v220
        %v326 = vunpack.c.h.b16 %v220
        %v327 = vunpack.c.l.b16 %v221
        %v328 = vunpack.c.h.b16 %v221
        %v329 = vunpack.c.l.b16 %v222
        %v330 = vunpack.c.h.b16 %v222
        %v331 = vunpack.c.l.b16 %v223
        %v332 = vunpack.c.h.b16 %v223
        %v333 = vunpack.c.l.b16 %v224
        %v334 = vunpack.c.h.b16 %v224
        %v335 = vunpack.c.l.b16 %v225
        %v336 = vunpack.c.h.b16 %v225
        %v337 = vunpack.c.l.b16 %v226
        %v338 = vunpack.c.h.b16 %v226
        %v339 = vunpack.c.l.b16 %v227
        %v340 = vunpack.c.h.b16 %v227
        %v341 = vunpack.c.l.b16 %v228
        %v342 = vunpack.c.h.b16 %v228
        %v343 = vunpack.c.l.b16 %v229
        %v344 = vunpack.c.h.b16 %v229
        %v345 = vunpack.c.l.b16 %v230
        %v346 = vunpack.c.h.b16 %v230
        %v347 = vunpack.c.l.b16 %v231
        %v348 = vunpack.c.h.b16 %v231
        %v349 = vunpack.c.l.b16 %v232
        %v350 = vunpack.c.h.b16 %v232
        %v351 = vunpack.c.l.b16 %v233
        %v352 = vunpack.c.h.b16 %v233
        %v353 = vunpack.c.l.b16 %v234
        %v354 = vunpack.c.h.b16 %v234
        %v355 = vunpack.c.l.b16 %v235
        %v356 = vunpack.c.h.b16 %v235
        %v357 = vunpack.c.l.b16 %v236
        %v358 = vunpack.c.h.b16 %v236
        %v359 = vunpack.c.l.b16 %v237
        %v360 = vunpack.c.h.b16 %v237
        %v361 = vunpack.c.l.b16 %v238
        %v362 = vunpack.c.h.b16 %v238
        %v363 = vunpack.c.l.b16 %v239
        %v364 = vunpack.c.h.b16 %v239
        %v365 = vunpack.c.l.b16 %v240
        %v366 = vunpack.c.h.b16 %v240
        %v367 = vunpack.c.l.b16 %v241
        %v368 = vunpack.c.h.b16 %v241
        %v369 = vunpack.c.l.b16 %v242
        %v370 = vunpack.c.h.b16 %v242
        %v371 = vpack.c.b16 %v309, %v307
        %v372 = vpack.c.b16 %v310, %v308
        %v373 = vpack.c.b16 %v313, %v311
        %v374 = vpack.c.b16 %v314, %v312
        %v375 = vpack.c.b16 %v317, %v315
        %v376 = vpack.c.b16 %v318, %v316
        %v377 = vpack.c.b16 %v321, %v319
        %v378 = vpack.c.b16 %v322, %v320
        %v379 = vpack.c.b16 %v325, %v323
        %v380 = vpack.c.b16 %v326, %v324
        %v381 = vpack.c.b16 %v329, %v327
        %v382 = vpack.c.b16 %v330, %v328
        %v383 = vpack.c.b16 %v333, %v331
        %v384 = vpack.c.b16 %v334, %v332
        %v385 = vpack.c.b16 %v337, %v335
        %v386 = vpack.c.b16 %v338, %v336
        %v387 = vpack.c.b16 %v341, %v339
        %v388 = vpack.c.b16 %v342, %v340
        %v389 = vpack.c.b16 %v345, %v343
        %v390 = vpack.c.b16 %v346, %v344
        %v391 = vpack.c.b16 %v349, %v347
        %v392 = vpack.c.b16 %v350, %v348
        %v393 = vpack.c.b16 %v353, %v351
        %v394 = vpack.c.b16 %v354, %v352
        %v395 = vpack.c.b16 %v357, %v355
        %v396 = vpack.c.b16 %v358, %v356
        %v397 = vpack.c.b16 %v361, %v359
        %v398 = vpack.c.b16 %v362, %v360
        %v399 = vpack.c.b16 %v365, %v363
        %v400 = vpack.c.b16 %v366, %v364
        %v401 = vpack.c.b16 %v369, %v367
        %v402 = vpack.c.b16 %v370, %v368
        %435 = vmatprep.subr.bf16.mxu0 %v386
        %436 = vmatpush1.bf16.msra.mxu0 %v385
        %437 = vmatprep.subr.bf16.mxu0 %v384
        %438 = vmatpush1.bf16.msra.mxu0 %v383
        %439 = vmatprep.subr.bf16.mxu0 %v382
        %440 = vmatpush1.bf16.msra.mxu0 %v381
        %441 = vmatprep.subr.bf16.mxu0 %v380
        %442 = vmatpush1.bf16.msra.mxu0 %v379
        %443 = vmatprep.subr.bf16.mxu0 %v378
        %444 = vmatpush1.bf16.msra.mxu0 %v377
        %445 = vmatprep.subr.bf16.mxu0 %v376
        %446 = vmatpush1.bf16.msra.mxu0 %v375
        %447 = vmatprep.subr.bf16.mxu0 %v374
        %448 = vmatpush1.bf16.msra.mxu0 %v373
        %449 = vmatprep.subr.bf16.mxu0 %v372
        %450 = vmatpush1.bf16.msra.mxu0 %v371
        %451 = vmatprep.subr.bf16.mxu0 %v402
        %452 = vmatpush2.bf16.msra.mxu0 %v401
        %453 = vmatprep.subr.bf16.mxu0 %v400
        %454 = vmatpush2.bf16.msra.mxu0 %v399
        %455 = vmatprep.subr.bf16.mxu0 %v398
        %456 = vmatpush2.bf16.msra.mxu0 %v397
        %457 = vmatprep.subr.bf16.mxu0 %v396
        %458 = vmatpush2.bf16.msra.mxu0 %v395
        %459 = vmatprep.subr.bf16.mxu0 %v394
        %460 = vmatpush2.bf16.msra.mxu0 %v393
        %461 = vmatprep.subr.bf16.mxu0 %v392
        %462 = vmatpush2.bf16.msra.mxu0 %v391
        %463 = vmatprep.subr.bf16.mxu0 %v390
        %464 = vmatpush2.bf16.msra.mxu0 %v389
        %465 = vmatprep.subr.bf16.mxu0 %v388
        %466 = vmatpush2.bf16.msra.mxu0 %v387
        %467 = vmatprep.mubr.bf16.mxu0 %v268
        %468 = vmatmul.mubr.bf16.gmra.mxu0 %v267
        %v469 = vpop.f32.mrf.mxu0
        %v470 = vadd.f32 %v248, %v469
        %v471 = vpop.f32.mrf.mxu0
        %v472 = vadd.f32 %v252, %v471
        %v473 = vpop.f32.mrf.mxu0
        %v474 = vadd.f32 %v248, %v473
        %v475 = vpop.f32.mrf.mxu0
        %v476 = vadd.f32 %v252, %v475
        %477 = vmatprep.mubr.bf16.mxu0 %v270
        %478 = vmatmul.mubr.bf16.gmra.mxu0 %v269
        %v479 = vpop.f32.mrf.mxu0
        %v480 = vadd.f32 %v248, %v479
        %v481 = vpop.f32.mrf.mxu0
        %v482 = vadd.f32 %v252, %v481
        %v483 = vpop.f32.mrf.mxu0
        %v484 = vadd.f32 %v248, %v483
        %v485 = vpop.f32.mrf.mxu0
        %v486 = vadd.f32 %v252, %v485
        %487 = vdwg.mxu0
        %v488 = vmax.f32 %v470, 0.0
        %v489 = vmax.f32 %v472, 0.0
        %v490 = vmax.f32 %v474, 0.0
        %v491 = vmax.f32 %v476, 0.0
        %v492 = vmax.f32 %v480, 0.0
        %v493 = vmax.f32 %v482, 0.0
        %v494 = vmax.f32 %v484, 0.0
        %v495 = vmax.f32 %v486, 0.0
        %v496 = vpack.c.bf16 %v490, %v488
        %v497 = vpack.c.bf16 %v491, %v489
        %v498 = vpack.c.bf16 %v494, %v492
        %v499 = vpack.c.bf16 %v495, %v493
        %v504 = vunpack.c.l.b16 %v496
        %v505 = vunpack.c.l.b16 %v497
        %v506 = vunpack.c.h.b16 %v496
        %v507 = vunpack.c.h.b16 %v497
        %v508 = vunpack.c.l.b16 %v498
        %v509 = vunpack.c.l.b16 %v499
        %v510 = vunpack.c.h.b16 %v498
        %v511 = vunpack.c.h.b16 %v499
        %v512 = vpack.c.b16 %v505, %v504
        %v513 = vpack.c.b16 %v507, %v506
        %v514 = vpack.c.b16 %v509, %v508
        %v515 = vpack.c.b16 %v511, %v510
        %520 = vst [vmem:[%s205] sm:$0xff] %v512
        %521 = vst [vmem:[%s205 + $0x8] sm:$0xff] %v513
        %522 = vst [vmem:[%s205 + $0x10] sm:$0xff] %v514
        %523 = vst [vmem:[%s205 + $0x18] sm:$0xff] %v515
        %s524 = smul.u32 4, %s16
        %p525 = scmp.lt.s32.totalorder %s524, 7
        %s526 = scalar_select %p525, %s524, 7
        %s527 = smul.addr %s526, 2
        %s528 = smul.addr %s527, 4
        %s529 = scalar_lea.vmem %s3, %s528
        // Predicated region
        $region41: #{conv_decoder_forward.6} parent=31 // pred_check
          %p530 = pneg %p102
        $region42: #{conv_decoder_forward.6} parent=31 // pred_check_branch
          %532 = sbr.rel (%p530) target = $region44
        $region43: #{conv_decoder_forward.6} parent=31 // pred_region
          %s533 = smul.u32 4, %s16
        $region44: #{conv_decoder_forward.6} parent=31 // pred_fallthru
          _
      $region32: #{conv_decoder_forward.6} parent=5 // pred_fallthru
        _
      %p534 = scmp.le.s32.totalorder 2, %s11
      // Predicated region
      $region45: #{conv_decoder_forward.6} parent=5 // pred_check
        %p535 = pneg %p534
      $region46: #{conv_decoder_forward.6} parent=5 // pred_check_branch
        %537 = sbr.rel (%p535) target = $region48
      $region47: #{conv_decoder_forward.6} parent=5 // pred_region
        %s538 = ssub.s32 %s11, 2
        // Predicated region
        $region49: #{conv_decoder_forward.6} parent=47 // pred_check
          %p539 = pneg %p108
        $region50: #{conv_decoder_forward.6} parent=47 // pred_check_branch
          %541 = sbr.rel (%p539) target = $region52
        $region51: #{conv_decoder_forward.6} parent=47 // pred_region
          %s542 = smul.u32 4, %s17
          %p543 = scmp.lt.s32.totalorder %s542, 7
          %s544 = scalar_select %p543, %s542, 7
          %s545 = smul.addr %s544, 2
          %s546 = smul.addr %s545, 4
          %s547 = scalar_lea.vmem %s3, %s546
        $region52: #{conv_decoder_forward.6} parent=47 // pred_fallthru
          _
      $region48: #{conv_decoder_forward.6} parent=5 // pred_fallthru
        _
    $region6: #{conv_decoder_forward.6} parent=1 // loop_footer
      %s15 = sadd.s32 1, %s11
    $region7: #{conv_decoder_forward.6} parent=1 // loop_footer_branch
      %10 = sbr.rel target = $region3
    $region8: #{conv_decoder_forward.6} parent=1 // loop_exit
      _
    %548 = vsyncpa [#allocation3], 1
    %s549 = scalar_lea.sflag [#allocation3], 1
    %550 = vsyncpa %s549, 1
    %551 = vsyncpa [#allocation5], 1

// kernel: conv_decoder_forward.5
$region0: #{conv_decoder_forward.5}
  #allocation0 [shape = 'u32[]', space=smem, size = 0x4, offset = 0x4, fixed_abs, tag = 'smem constant byte address 0x4 - core index']
  #allocation1 [shape = 'u32[144,128]{1,0:T(1,128)}', space=vmem, size = 0x12000, scoped, tag = 'internal scratch']
  %s0 = inlined_call_operand.vmem [shape: bf16[2,32], index: 0, kind: input, shape index: {}]
  %s1 = inlined_call_operand.hbm [shape: bf16[32,512], index: 1, kind: input, shape index: {}]
  %s2 = inlined_call_operand.hbm [shape: f32[1,512], index: 2, kind: input, shape index: {}]
  %s3 = inlined_call_operand.hbm [shape: bf16[512,1024], index: 3, kind: input, shape index: {}]
  %s4 = inlined_call_operand.hbm [shape: f32[1,1024], index: 4, kind: input, shape index: {}]
  %s5 = inlined_call_operand.vmem [shape: bf16[2,1024], index: 5, kind: output, shape index: {}]
  %s6 = sld [smem:[#allocation0]]
  $region69: #{conv_decoder_forward.5} parent=0
    _
  %s8 = ssub.s32 1, %s6
  %s9 = scalar_select 0, %s8, %s6
  $region1: #{conv_decoder_forward.5} parent=0
    #allocation2 [shape = 'u8[32768]{0}', space=vmem, size = 0x8000, scoped, tag = 'input window, operand 1, single buffered']
    #allocation3 [shape = 's32[2]{0}', space=sflag, size = 0x8, scoped, tag = 'scoped memory for conv_decoder_forward.5']
    #allocation4 [shape = 'u8[2048]{0}', space=vmem, size = 0x800, scoped, tag = 'input window, operand 2, single buffered']
    #allocation5 [shape = 's32[1]{0}', space=sflag, size = 0x4, scoped, tag = 'scoped memory for conv_decoder_forward.5']
    #allocation6 [shape = 'u8[1048576]{0}', space=vmem, size = 0x100000, scoped, tag = 'input window, operand 3']
    #allocation7 [shape = 'u8[4096]{0}', space=vmem, size = 0x1000, scoped, tag = 'input window, operand 4']
    %10 = vsyncpa [#allocation3], 0
    %11 = vsyncpa [#allocation5], 0
    loop: start=0, step=1, limit=4
    $region2: #{conv_decoder_forward.5} parent=1 // loop_pre_header
      _
    $region3: #{conv_decoder_forward.5} parent=1 // loop_header
      %s13 = sphi 0, %s17
      %p14 = scmp.ge.s32.totalorder %s13, 4
      %s21 = sphi 0, %s21
      %s23 = sphi 0, %s21
      %s24 = sphi 0, %s23
      %s38 = sphi 0, %s24
      %s42 = sphi 0, %s42
      %s44 = sphi 0, %s42
      %s45 = sphi 0, %s44
      %s59 = sphi 0, %s45
      %s63 = sphi 0, %s63
      %s65 = sphi 0, %s63
      %s66 = sphi 0, %s65
      %s80 = sphi 0, %s66
      %s86 = sphi 0, %s88
      %s89 = sphi 0, %s86
      %s90 = sphi 0, %s89
      %s106 = sphi 0, %s90
      %s112 = sphi 0, %s114
      %s115 = sphi 0, %s112
      %s116 = sphi 0, %s115
      %s132 = sphi 0, %s116
      %s138 = sphi 0, %s140
      %s141 = sphi 0, %s138
      %s142 = sphi 0, %s141
      %s158 = sphi 0, %s142
    $region4: #{conv_decoder_forward.5} parent=1 // loop_header_branch
      %16 = sbr.rel (%p14) target = $region8
    $region5: #{conv_decoder_forward.5} parent=1 // loop_body
      %s18 = ssub.s32 %s13, 1
      %s19 = ssub.s32 %s13, 2
      %s20 = sadd.s32 %s13, 1
      %s22 = sadd.s32 %s21, 1
      %p25 = scmp.eq.s32.totalorder %s13, 1
      %p26 = scmp.ne.s32.totalorder %s21, %s23
      %p27 = scmp.eq.s32.totalorder %s13, 0
      %p28 = por %p26, %p27
      %p29 = scmp.ne.s32.totalorder %s21, %s23
      %p30 = scmp.eq.s32.totalorder %s18, 1
      %p31 = por %p29, %p30
      %p32 = scmp.ne.s32.totalorder %s23, %s24
      %p33 = scmp.eq.s32.totalorder %s18, 0
      %p34 = por %p32, %p33
      %p35 = scmp.ne.s32.totalorder %s23, %s24
      %p36 = scmp.eq.s32.totalorder %s19, 1
      %p37 = por %p35, %p36
      %p39 = scmp.ne.s32.totalorder %s24, %s38
      %p40 = scmp.eq.s32.totalorder %s19, 0
      %p41 = por %p39, %p40
      %s43 = sadd.s32 %s42, 1
      %p46 = scmp.eq.s32.totalorder %s13, 1
      %p47 = scmp.ne.s32.totalorder %s42, %s44
      %p48 = scmp.eq.s32.totalorder %s13, 0
      %p49 = por %p47, %p48
      %p50 = scmp.ne.s32.totalorder %s42, %s44
      %p51 = scmp.eq.s32.totalorder %s18, 1
      %p52 = por %p50, %p51
      %p53 = scmp.ne.s32.totalorder %s44, %s45
      %p54 = scmp.eq.s32.totalorder %s18, 0
      %p55 = por %p53, %p54
      %p56 = scmp.ne.s32.totalorder %s44, %s45
      %p57 = scmp.eq.s32.totalorder %s19, 1
      %p58 = por %p56, %p57
      %p60 = scmp.ne.s32.totalorder %s45, %s59
      %p61 = scmp.eq.s32.totalorder %s19, 0
      %p62 = por %p60, %p61
      %s64 = sadd.s32 %s63, 1
      %p67 = scmp.eq.s32.totalorder %s13, 1
      %p68 = scmp.ne.s32.totalorder %s63, %s65
      %p69 = scmp.eq.s32.totalorder %s13, 0
      %p70 = por %p68, %p69
      %p71 = scmp.ne.s32.totalorder %s63, %s65
      %p72 = scmp.eq.s32.totalorder %s18, 1
      %p73 = por %p71, %p72
      %p74 = scmp.ne.s32.totalorder %s65, %s66
      %p75 = scmp.eq.s32.totalorder %s18, 0
      %p76 = por %p74, %p75
      %p77 = scmp.ne.s32.totalorder %s65, %s66
      %p78 = scmp.eq.s32.totalorder %s19, 1
      %p79 = por %p77, %p78
      %p81 = scmp.ne.s32.totalorder %s66, %s80
      %p82 = scmp.eq.s32.totalorder %s19, 0
      %p83 = por %p81, %p82
      %s84 = ssub.s32 %s13, %s20
      %p85 = scmp.eq.s32.totalorder %s84, 0
      %s87 = sadd.s32 %s86, 1
      %s88 = scalar_select %p85, %s86, %s87
      %p91 = pneg %p85
      %p92 = scmp.eq.s32.totalorder %s13, 1
      %p93 = por %p91, %p92
      %p94 = scmp.ne.s32.totalorder %s86, %s89
      %p95 = scmp.eq.s32.totalorder %s13, 0
      %p96 = por %p94, %p95
      %p97 = scmp.ne.s32.totalorder %s86, %s89
      %p98 = scmp.eq.s32.totalorder %s18, 1
      %p99 = por %p97, %p98
      %p100 = scmp.ne.s32.totalorder %s89, %s90
      %p101 = scmp.eq.s32.totalorder %s18, 0
      %p102 = por %p100, %p101
      %p103 = scmp.ne.s32.totalorder %s89, %s90
      %p104 = scmp.eq.s32.totalorder %s19, 1
      %p105 = por %p103, %p104
      %p107 = scmp.ne.s32.totalorder %s90, %s106
      %p108 = scmp.eq.s32.totalorder %s19, 0
      %p109 = por %p107, %p108
      %s110 = ssub.s32 %s13, %s20
      %p111 = scmp.eq.s32.totalorder %s110, 0
      %s113 = sadd.s32 %s112, 1
      %s114 = scalar_select %p111, %s112, %s113
      %p117 = pneg %p111
      %p118 = scmp.eq.s32.totalorder %s13, 1
      %p119 = por %p117, %p118
      %p120 = scmp.ne.s32.totalorder %s112, %s115
      %p121 = scmp.eq.s32.totalorder %s13, 0
      %p122 = por %p120, %p121
      %p123 = scmp.ne.s32.totalorder %s112, %s115
      %p124 = scmp.eq.s32.totalorder %s18, 1
      %p125 = por %p123, %p124
      %p126 = scmp.ne.s32.totalorder %s115, %s116
      %p127 = scmp.eq.s32.totalorder %s18, 0
      %p128 = por %p126, %p127
      %p129 = scmp.ne.s32.totalorder %s115, %s116
      %p130 = scmp.eq.s32.totalorder %s19, 1
      %p131 = por %p129, %p130
      %p133 = scmp.ne.s32.totalorder %s116, %s132
      %p134 = scmp.eq.s32.totalorder %s19, 0
      %p135 = por %p133, %p134
      %s136 = ssub.s32 %s13, %s20
      %p137 = scmp.eq.s32.totalorder %s136, 0
      %s139 = sadd.s32 %s138, 1
      %s140 = scalar_select %p137, %s138, %s139
      %p143 = pneg %p137
      %p144 = scmp.eq.s32.totalorder %s13, 1
      %p145 = por %p143, %p144
      %p146 = scmp.ne.s32.totalorder %s138, %s141
      %p147 = scmp.eq.s32.totalorder %s13, 0
      %p148 = por %p146, %p147
      %p149 = scmp.ne.s32.totalorder %s138, %s141
      %p150 = scmp.eq.s32.totalorder %s18, 1
      %p151 = por %p149, %p150
      %p152 = scmp.ne.s32.totalorder %s141, %s142
      %p153 = scmp.eq.s32.totalorder %s18, 0
      %p154 = por %p152, %p153
      %p155 = scmp.ne.s32.totalorder %s141, %s142
      %p156 = scmp.eq.s32.totalorder %s19, 1
      %p157 = por %p155, %p156
      %p159 = scmp.ne.s32.totalorder %s142, %s158
      %p160 = scmp.eq.s32.totalorder %s19, 0
      %p161 = por %p159, %p160
      %p162 = scmp.le.s32.totalorder 1, %s13
      %p163 = scmp.lt.s32.totalorder %s13, 3
      %p164 = pnand %p162, %p163
      %p165 = pneg %p164
      // Predicated region
      $region9: #{conv_decoder_forward.5} parent=5 // pred_check
        _
      $region10: #{conv_decoder_forward.5} parent=5 // pred_check_branch
        %167 = sbr.rel (%p164) target = $region12
      $region11: #{conv_decoder_forward.5} parent=5 // pred_region
        %s168 = ssub.s32 %s13, 1
        // Predicated region
        $region13: #{conv_decoder_forward.5} parent=11 // pred_check
          %p169 = pneg %p34
        $region14: #{conv_decoder_forward.5} parent=11 // pred_check_branch
          %171 = sbr.rel (%p169) target = $region16
        $region15: #{conv_decoder_forward.5} parent=11 // pred_region
          _
        $region16: #{conv_decoder_forward.5} parent=11 // pred_fallthru
          _
        // Predicated region
        $region17: #{conv_decoder_forward.5} parent=11 // pred_check
          %p172 = pneg %p55
        $region18: #{conv_decoder_forward.5} parent=11 // pred_check_branch
          %174 = sbr.rel (%p172) target = $region20
        $region19: #{conv_decoder_forward.5} parent=11 // pred_region
          %s176 = ssub.s32 1024, 1024
          %177 = vsyncadd [#allocation3], %s176
          %s178 = sshll.u32 [#allocation2], 4
          %s179 = int_to_ptr.vmem [resolvable:$true] %s178
          %184 = dma.hbm_to_vmem [thread:$0]  %s1, 1024, %s179, [#allocation3], 256, 256, 16
        $region20: #{conv_decoder_forward.5} parent=11 // pred_fallthru
          _
        // Predicated region
        $region21: #{conv_decoder_forward.5} parent=11 // pred_check
          %p185 = pneg %p76
        $region22: #{conv_decoder_forward.5} parent=11 // pred_check_branch
          %187 = sbr.rel (%p185) target = $region24
        $region23: #{conv_decoder_forward.5} parent=11 // pred_region
          %s189 = ssub.s32 64, 64
          %190 = vsyncadd [#allocation5], %s189
          %s192 = sshll.u32 [#allocation4], 4
          %s193 = int_to_ptr.vmem [resolvable:$true] %s192
          %195 = dma.hbm_to_vmem [thread:$0]  %s2, 64, %s193, [#allocation5]
        $region24: #{conv_decoder_forward.5} parent=11 // pred_fallthru
          _
      $region12: #{conv_decoder_forward.5} parent=5 // pred_fallthru
        _
      %p196 = scmp.lt.s32.totalorder %s13, 2
      // Predicated region
      $region25: #{conv_decoder_forward.5} parent=5 // pred_check
        %p197 = pneg %p196
      $region26: #{conv_decoder_forward.5} parent=5 // pred_check_branch
        %199 = sbr.rel (%p197) target = $region28
      $region27: #{conv_decoder_forward.5} parent=5 // pred_region
        // Predicated region
        $region29: #{conv_decoder_forward.5} parent=27 // pred_check
          %p200 = pneg %p96
        $region30: #{conv_decoder_forward.5} parent=27 // pred_check_branch
          %202 = sbr.rel (%p200) target = $region32
        $region31: #{conv_decoder_forward.5} parent=27 // pred_region
          %s203 = sand.u32 %s13, 1
          %s204 = scalar_lea.sflag [#allocation3], %s203
          %s205 = sand.u32 %s86, 1
          %s206 = smul.addr %s205, 1024
          %s207 = scalar_lea.vmem [#allocation6], %s206
          %s208 = smul.u32 4, %s13
          %s210 = ssub.s32 16384, 16384
          %211 = vsyncadd %s204, %s210
          %s212 = smul.addr %s208, 64
          %s213 = scalar_lea.hbm %s3, %s212
          %s214 = sshll.u32 %s207, 4
          %s215 = int_to_ptr.vmem [resolvable:$true] %s214
          %220 = dma.hbm_to_vmem [thread:$0]  %s213, 16384, %s215, %s204, 512, 256, 16
        $region32: #{conv_decoder_forward.5} parent=27 // pred_fallthru
          _
        // Predicated region
        $region33: #{conv_decoder_forward.5} parent=27 // pred_check
          %p221 = pneg %p122
        $region34: #{conv_decoder_forward.5} parent=27 // pred_check_branch
          %223 = sbr.rel (%p221) target = $region36
        $region35: #{conv_decoder_forward.5} parent=27 // pred_region
          %s224 = sand.u32 %s13, 1
          %s225 = scalar_lea.sflag [#allocation3], %s224
          %s226 = sand.u32 %s112, 1
          %s227 = smul.addr %s226, 4
          %s228 = scalar_lea.vmem [#allocation7], %s227
          %s229 = smul.u32 4, %s13
          %s231 = ssub.s32 64, 64
          %232 = vsyncadd %s225, %s231
          %s233 = smul.addr %s229, 16
          %s234 = scalar_lea.hbm %s4, %s233
          %s236 = sshll.u32 %s228, 4
          %s237 = int_to_ptr.vmem [resolvable:$true] %s236
          %239 = dma.hbm_to_vmem [thread:$0]  %s234, 64, %s237, %s225
        $region36: #{conv_decoder_forward.5} parent=27 // pred_fallthru
          _
      $region28: #{conv_decoder_forward.5} parent=5 // pred_fallthru
        _
      %p240 = scmp.le.s32.totalorder 1, %s13
      %p241 = scmp.lt.s32.totalorder %s13, 3
      %p242 = pnand %p240, %p241
      %p243 = pneg %p242
      // Predicated region
      $region37: #{conv_decoder_forward.5} parent=5 // pred_check
        _
      $region38: #{conv_decoder_forward.5} parent=5 // pred_check_branch
        %245 = sbr.rel (%p242) target = $region40
      $region39: #{conv_decoder_forward.5} parent=5 // pred_region
        %s246 = ssub.s32 %s13, 1
        // Predicated region
        $region41: #{conv_decoder_forward.5} parent=39 // pred_check
          %p247 = pneg %p55
        $region42: #{conv_decoder_forward.5} parent=39 // pred_check_branch
          %249 = sbr.rel (%p247) target = $region44
        $region43: #{conv_decoder_forward.5} parent=39 // pred_region
          %250 = dma.done [#allocation3], 1024
        $region44: #{conv_decoder_forward.5} parent=39 // pred_fallthru
          _
        // Predicated region
        $region45: #{conv_decoder_forward.5} parent=39 // pred_check
          %p251 = pneg %p76
        $region46: #{conv_decoder_forward.5} parent=39 // pred_check_branch
          %253 = sbr.rel (%p251) target = $region48
        $region47: #{conv_decoder_forward.5} parent=39 // pred_region
          %254 = dma.done [#allocation5], 64
        $region48: #{conv_decoder_forward.5} parent=39 // pred_fallthru
          _
        %s255 = sand.u32 %s18, 1
        %s256 = scalar_lea.sflag [#allocation3], %s255
        %s257 = sand.u32 %s89, 1
        %s258 = smul.addr %s257, 1024
        %s259 = scalar_lea.vmem [#allocation6], %s258
        // Predicated region
        $region49: #{conv_decoder_forward.5} parent=39 // pred_check
          %p260 = pneg %p102
        $region50: #{conv_decoder_forward.5} parent=39 // pred_check_branch
          %262 = sbr.rel (%p260) target = $region52
        $region51: #{conv_decoder_forward.5} parent=39 // pred_region
          %263 = dma.done %s256, 16384
        $region52: #{conv_decoder_forward.5} parent=39 // pred_fallthru
          _
        %s264 = sand.u32 %s18, 1
        %s265 = scalar_lea.sflag [#allocation3], %s264
        %s266 = sand.u32 %s115, 1
        %s267 = smul.addr %s266, 4
        %s268 = scalar_lea.vmem [#allocation7], %s267
        // Predicated region
        $region53: #{conv_decoder_forward.5} parent=39 // pred_check
          %p269 = pneg %p128
        $region54: #{conv_decoder_forward.5} parent=39 // pred_check_branch
          %271 = sbr.rel (%p269) target = $region56
        $region55: #{conv_decoder_forward.5} parent=39 // pred_region
          %272 = dma.done %s265, 64
        $region56: #{conv_decoder_forward.5} parent=39 // pred_fallthru
          _
        %p273 = pneg %p34
        %p274 = pneg %p31
        %p275 = pneg %p55
        %p276 = pneg %p52
        %p277 = pneg %p76
        %p278 = pneg %p73
        %s279 = sand.u32 %s18, 1
        %s280 = scalar_lea.sflag [#allocation3], %s279
        %s281 = sand.u32 %s89, 1
        %s282 = smul.addr %s281, 1024
        %s283 = scalar_lea.vmem [#allocation6], %s282
        %p284 = pneg %p102
        %p285 = pneg %p99
        %s286 = sand.u32 %s18, 1
        %s287 = scalar_lea.sflag [#allocation3], %s286
        %s288 = sand.u32 %s115, 1
        %s289 = smul.addr %s288, 4
        %s290 = scalar_lea.vmem [#allocation7], %s289
        %p291 = pneg %p128
        %p292 = pneg %p125
        %p293 = pneg %p154
        %p294 = pneg %p151
        %s295 = smul.u32 4, %s18
        %p296 = scmp.lt.s32.totalorder %s295, 7
        %s297 = scalar_select %p296, %s295, 7
        %s298 = scalar_lea.vmem %s5, %s297
        %s299 = smul.u32 4, %s18
        %s300 = smul.u32 4, %s18
        %s301 = smul.u32 4, %s18
        %p302 = scmp.lt.s32.totalorder %s301, 7
        %s303 = scalar_select %p302, %s301, 7
        %s304 = scalar_lea.vmem %s5, %s303
        %s305 = smul.u32 4, %s18
        %v307 = vld [vmem:[%s0] sm:$0x1]
        %v308 = vld [vmem:[#allocation2] sm:$0xff]
        %v309 = vld [vmem:[#allocation2 + $0x8] sm:$0xff]
        %v310 = vld [vmem:[#allocation2 + $0x10] sm:$0xff]
        %v311 = vld [vmem:[#allocation2 + $0x18] sm:$0xff]
        %v312 = vld [vmem:[#allocation2 + $0x20] sm:$0xff]
        %v313 = vld [vmem:[#allocation2 + $0x28] sm:$0xff]
        %v314 = vld [vmem:[#allocation2 + $0x30] sm:$0xff]
        %v315 = vld [vmem:[#allocation2 + $0x38] sm:$0xff]
        %v316 = vld [vmem:[#allocation4] sm:$0xf]
        %v318 = vlaneseq
        %v319 = vshrl.u32 %v318, 7
        %v320 = vsub.s32 0, %v319
        %v321 = vrot.slane %v316, %v320
        %v322 = vlaneseq
        %v323 = vshrl.u32 %v322, 7
        %v324 = vsub.s32 1, %v323
        %v325 = vrot.slane %v316, %v324
        %v326 = vlaneseq
        %v327 = vshrl.u32 %v326, 7
        %v328 = vsub.s32 2, %v327
        %v329 = vrot.slane %v316, %v328
        %v330 = vlaneseq
        %v331 = vshrl.u32 %v330, 7
        %v332 = vsub.s32 3, %v331
        %v333 = vrot.slane %v316, %v332
        %v346 = vunpack.c.l.b16 %v308
        %v347 = vunpack.c.h.b16 %v308
        %v348 = vunpack.c.l.b16 %v309
        %v349 = vunpack.c.h.b16 %v309
        %v350 = vunpack.c.l.b16 %v310
        %v351 = vunpack.c.h.b16 %v310
        %v352 = vunpack.c.l.b16 %v311
        %v353 = vunpack.c.h.b16 %v311
        %v354 = vunpack.c.l.b16 %v312
        %v355 = vunpack.c.h.b16 %v312
        %v356 = vunpack.c.l.b16 %v313
        %v357 = vunpack.c.h.b16 %v313
        %v358 = vunpack.c.l.b16 %v314
        %v359 = vunpack.c.h.b16 %v314
        %v360 = vunpack.c.l.b16 %v315
        %v361 = vunpack.c.h.b16 %v315
        %v362 = vpack.c.b16 %v350, %v346
        %v363 = vpack.c.b16 %v351, %v347
        %v364 = vpack.c.b16 %v352, %v348
        %v365 = vpack.c.b16 %v353, %v349
        %v366 = vpack.c.b16 %v358, %v354
        %v367 = vpack.c.b16 %v359, %v355
        %v368 = vpack.c.b16 %v360, %v356
        %v369 = vpack.c.b16 %v361, %v357
        %vm378 = vcmask 261120
        %v380 = vsel %vm378, %v307, 0
        %382 = vmatprep.subr.bf16.mxu0 0
        %383 = vmatpush1.bf16.msra.mxu0 0
        %384 = vmatprep.subr.bf16.mxu0 0
        %385 = vmatpush1.bf16.msra.mxu0 0
        %386 = vmatprep.subr.bf16.mxu0 0
        %387 = vmatpush1.bf16.msra.mxu0 0
        %388 = vmatprep.subr.bf16.mxu0 0
        %389 = vmatpush1.bf16.msra.mxu0 0
        %390 = vmatprep.subr.bf16.mxu0 0
        %391 = vmatpush1.bf16.msra.mxu0 0
        %392 = vmatprep.subr.bf16.mxu0 0
        %393 = vmatpush1.bf16.msra.mxu0 0
        %394 = vmatprep.subr.bf16.mxu0 %v367
        %395 = vmatpush1.bf16.msra.mxu0 %v366
        %396 = vmatprep.subr.bf16.mxu0 %v363
        %397 = vmatpush1.bf16.msra.mxu0 %v362
        %398 = vmatprep.subr.bf16.mxu0 0
        %399 = vmatpush2.bf16.msra.mxu0 0
        %400 = vmatprep.subr.bf16.mxu0 0
        %401 = vmatpush2.bf16.msra.mxu0 0
        %402 = vmatprep.subr.bf16.mxu0 0
        %403 = vmatpush2.bf16.msra.mxu0 0
        %404 = vmatprep.subr.bf16.mxu0 0
        %405 = vmatpush2.bf16.msra.mxu0 0
        %406 = vmatprep.subr.bf16.mxu0 0
        %407 = vmatpush2.bf16.msra.mxu0 0
        %408 = vmatprep.subr.bf16.mxu0 0
        %409 = vmatpush2.bf16.msra.mxu0 0
        %410 = vmatprep.subr.bf16.mxu0 0
        %411 = vmatpush2.bf16.msra.mxu0 0
        %412 = vmatprep.subr.bf16.mxu0 0
        %413 = vmatpush2.bf16.msra.mxu0 0
        %414 = vmatprep.mubr.bf16.mxu0 0
        %415 = vmatmul.mubr.bf16.gmra.mxu0 %v380
        %v416 = vpop.f32.mrf.mxu0
        %v417 = vadd.f32 %v321, %v416
        %v418 = vpop.f32.mrf.mxu0
        %v419 = vadd.f32 %v325, %v418
        %v420 = vpop.f32.mrf.mxu0
        %v421 = vpop.f32.mrf.mxu0
        %422 = vdwg.mxu0
        %423 = vmatprep.subr.bf16.mxu0 0
        %424 = vmatpush1.bf16.msra.mxu0 0
        %425 = vmatprep.subr.bf16.mxu0 0
        %426 = vmatpush1.bf16.msra.mxu0 0
        %427 = vmatprep.subr.bf16.mxu0 0
        %428 = vmatpush1.bf16.msra.mxu0 0
        %429 = vmatprep.subr.bf16.mxu0 0
        %430 = vmatpush1.bf16.msra.mxu0 0
        %431 = vmatprep.subr.bf16.mxu0 0
        %432 = vmatpush1.bf16.msra.mxu0 0
        %433 = vmatprep.subr.bf16.mxu0 0
        %434 = vmatpush1.bf16.msra.mxu0 0
        %435 = vmatprep.subr.bf16.mxu0 %v369
        %436 = vmatpush1.bf16.msra.mxu0 %v368
        %437 = vmatprep.subr.bf16.mxu0 %v365
        %438 = vmatpush1.bf16.msra.mxu0 %v364
        %439 = vmatprep.subr.bf16.mxu0 0
        %440 = vmatpush2.bf16.msra.mxu0 0
        %441 = vmatprep.subr.bf16.mxu0 0
        %442 = vmatpush2.bf16.msra.mxu0 0
        %443 = vmatprep.subr.bf16.mxu0 0
        %444 = vmatpush2.bf16.msra.mxu0 0
        %445 = vmatprep.subr.bf16.mxu0 0
        %446 = vmatpush2.bf16.msra.mxu0 0
        %447 = vmatprep.subr.bf16.mxu0 0
        %448 = vmatpush2.bf16.msra.mxu0 0
        %449 = vmatprep.subr.bf16.mxu0 0
        %450 = vmatpush2.bf16.msra.mxu0 0
        %451 = vmatprep.subr.bf16.mxu0 0
        %452 = vmatpush2.bf16.msra.mxu0 0
        %453 = vmatprep.subr.bf16.mxu0 0
        %454 = vmatpush2.bf16.msra.mxu0 0
        %455 = vmatprep.mubr.bf16.mxu0 0
        %456 = vmatmul.mubr.bf16.gmra.mxu0 %v380
        %v457 = vpop.f32.mrf.mxu0
        %v458 = vadd.f32 %v329, %v457
        %v459 = vpop.f32.mrf.mxu0
        %v460 = vadd.f32 %v333, %v459
        %v461 = vpop.f32.mrf.mxu0
        %v462 = vpop.f32.mrf.mxu0
        %463 = vdwg.mxu0
        %v464 = vmax.f32 %v417, 0.0
        %v465 = vmax.f32 %v419, 0.0
        %v466 = vmax.f32 %v458, 0.0
        %v467 = vmax.f32 %v460, 0.0
        %v468 = vpack.c.bf16 %v464, %v464
        %v469 = vpack.c.bf16 %v465, %v465
        %v470 = vpack.c.bf16 %v466, %v466
        %v471 = vpack.c.bf16 %v467, %v467
        %v472 = vld [vmem:[%s259] sm:$0xff]
        %v473 = vld [vmem:[%s259 + $0x8] sm:$0xff]
        %v474 = vld [vmem:[%s259 + $0x10] sm:$0xff]
        %v475 = vld [vmem:[%s259 + $0x18] sm:$0xff]
        %v476 = vld [vmem:[%s259 + $0x20] sm:$0xff]
        %v477 = vld [vmem:[%s259 + $0x28] sm:$0xff]
        %v478 = vld [vmem:[%s259 + $0x30] sm:$0xff]
        %v479 = vld [vmem:[%s259 + $0x38] sm:$0xff]
        %v480 = vld [vmem:[%s259 + $0x40] sm:$0xff]
        %v481 = vld [vmem:[%s259 + $0x48] sm:$0xff]
        %v482 = vld [vmem:[%s259 + $0x50] sm:$0xff]
        %v483 = vld [vmem:[%s259 + $0x58] sm:$0xff]
        %v484 = vld [vmem:[%s259 + $0x60] sm:$0xff]
        %v485 = vld [vmem:[%s259 + $0x68] sm:$0xff]
        %v486 = vld [vmem:[%s259 + $0x70] sm:$0xff]
        %v487 = vld [vmem:[%s259 + $0x78] sm:$0xff]
        %v488 = vld [vmem:[%s259 + $0x80] sm:$0xff]
        %v489 = vld [vmem:[%s259 + $0x88] sm:$0xff]
        %v490 = vld [vmem:[%s259 + $0x90] sm:$0xff]
        %v491 = vld [vmem:[%s259 + $0x98] sm:$0xff]
        %v492 = vld [vmem:[%s259 + $0xa0] sm:$0xff]
        %v493 = vld [vmem:[%s259 + $0xa8] sm:$0xff]
        %v494 = vld [vmem:[%s259 + $0xb0] sm:$0xff]
        %v495 = vld [vmem:[%s259 + $0xb8] sm:$0xff]
        %v496 = vld [vmem:[%s259 + $0xc0] sm:$0xff]
        %v497 = vld [vmem:[%s259 + $0xc8] sm:$0xff]
        %v498 = vld [vmem:[%s259 + $0xd0] sm:$0xff]
        %v499 = vld [vmem:[%s259 + $0xd8] sm:$0xff]
        %v500 = vld [vmem:[%s259 + $0xe0] sm:$0xff]
        %v501 = vld [vmem:[%s259 + $0xe8] sm:$0xff]
        %v502 = vld [vmem:[%s259 + $0xf0] sm:$0xff]
        %v503 = vld [vmem:[%s259 + $0xf8] sm:$0xff]
        %v504 = vld [vmem:[%s259 + $0x100] sm:$0xff]
        %v505 = vld [vmem:[%s259 + $0x108] sm:$0xff]
        %v506 = vld [vmem:[%s259 + $0x110] sm:$0xff]
        %v507 = vld [vmem:[%s259 + $0x118] sm:$0xff]
        %v508 = vld [vmem:[%s259 + $0x120] sm:$0xff]
        %v509 = vld [vmem:[%s259 + $0x128] sm:$0xff]
        %v510 = vld [vmem:[%s259 + $0x130] sm:$0xff]
        %v511 = vld [vmem:[%s259 + $0x138] sm:$0xff]
        %v512 = vld [vmem:[%s259 + $0x140] sm:$0xff]
        %v513 = vld [vmem:[%s259 + $0x148] sm:$0xff]
        %v514 = vld [vmem:[%s259 + $0x150] sm:$0xff]
        %v515 = vld [vmem:[%s259 + $0x158] sm:$0xff]
        %v516 = vld [vmem:[%s259 + $0x160] sm:$0xff]
        %v517 = vld [vmem:[%s259 + $0x168] sm:$0xff]
        %v518 = vld [vmem:[%s259 + $0x170] sm:$0xff]
        %v519 = vld [vmem:[%s259 + $0x178] sm:$0xff]
        %v520 = vld [vmem:[%s259 + $0x180] sm:$0xff]
        %v521 = vld [vmem:[%s259 + $0x188] sm:$0xff]
        %v522 = vld [vmem:[%s259 + $0x190] sm:$0xff]
        %v523 = vld [vmem:[%s259 + $0x198] sm:$0xff]
        %v524 = vld [vmem:[%s259 + $0x1a0] sm:$0xff]
        %v525 = vld [vmem:[%s259 + $0x1a8] sm:$0xff]
        %v526 = vld [vmem:[%s259 + $0x1b0] sm:$0xff]
        %v527 = vld [vmem:[%s259 + $0x1b8] sm:$0xff]
        %v528 = vld [vmem:[%s259 + $0x1c0] sm:$0xff]
        %v529 = vld [vmem:[%s259 + $0x1c8] sm:$0xff]
        %v530 = vld [vmem:[%s259 + $0x1d0] sm:$0xff]
        %v531 = vld [vmem:[%s259 + $0x1d8] sm:$0xff]
        %v532 = vld [vmem:[%s259 + $0x1e0] sm:$0xff]
        %v533 = vld [vmem:[%s259 + $0x1e8] sm:$0xff]
        %v534 = vld [vmem:[%s259 + $0x1f0] sm:$0xff]
        %v535 = vld [vmem:[%s259 + $0x1f8] sm:$0xff]
        %v536 = vld [vmem:[%s259 + $0x200] sm:$0xff]
        %v537 = vld [vmem:[%s259 + $0x208] sm:$0xff]
        %v538 = vld [vmem:[%s259 + $0x210] sm:$0xff]
        %v539 = vld [vmem:[%s259 + $0x218] sm:$0xff]
        %v540 = vld [vmem:[%s259 + $0x220] sm:$0xff]
        %v541 = vld [vmem:[%s259 + $0x228] sm:$0xff]
        %v542 = vld [vmem:[%s259 + $0x230] sm:$0xff]
        %v543 = vld [vmem:[%s259 + $0x238] sm:$0xff]
        %v544 = vld [vmem:[%s259 + $0x240] sm:$0xff]
        %v545 = vld [vmem:[%s259 + $0x248] sm:$0xff]
        %v546 = vld [vmem:[%s259 + $0x250] sm:$0xff]
        %v547 = vld [vmem:[%s259 + $0x258] sm:$0xff]
        %v548 = vld [vmem:[%s259 + $0x260] sm:$0xff]
        %v549 = vld [vmem:[%s259 + $0x268] sm:$0xff]
        %v550 = vld [vmem:[%s259 + $0x270] sm:$0xff]
        %v551 = vld [vmem:[%s259 + $0x278] sm:$0xff]
        %v552 = vld [vmem:[%s259 + $0x280] sm:$0xff]
        %v553 = vld [vmem:[%s259 + $0x288] sm:$0xff]
        %v554 = vld [vmem:[%s259 + $0x290] sm:$0xff]
        %v555 = vld [vmem:[%s259 + $0x298] sm:$0xff]
        %v556 = vld [vmem:[%s259 + $0x2a0] sm:$0xff]
        %v557 = vld [vmem:[%s259 + $0x2a8] sm:$0xff]
        %v558 = vld [vmem:[%s259 + $0x2b0] sm:$0xff]
        %v559 = vld [vmem:[%s259 + $0x2b8] sm:$0xff]
        %v560 = vld [vmem:[%s259 + $0x2c0] sm:$0xff]
        %v561 = vld [vmem:[%s259 + $0x2c8] sm:$0xff]
        %v562 = vld [vmem:[%s259 + $0x2d0] sm:$0xff]
        %v563 = vld [vmem:[%s259 + $0x2d8] sm:$0xff]
        %v564 = vld [vmem:[%s259 + $0x2e0] sm:$0xff]
        %v565 = vld [vmem:[%s259 + $0x2e8] sm:$0xff]
        %v566 = vld [vmem:[%s259 + $0x2f0] sm:$0xff]
        %v567 = vld [vmem:[%s259 + $0x2f8] sm:$0xff]
        %v568 = vld [vmem:[%s259 + $0x300] sm:$0xff]
        %v569 = vld [vmem:[%s259 + $0x308] sm:$0xff]
        %v570 = vld [vmem:[%s259 + $0x310] sm:$0xff]
        %v571 = vld [vmem:[%s259 + $0x318] sm:$0xff]
        %v572 = vld [vmem:[%s259 + $0x320] sm:$0xff]
        %v573 = vld [vmem:[%s259 + $0x328] sm:$0xff]
        %v574 = vld [vmem:[%s259 + $0x330] sm:$0xff]
        %v575 = vld [vmem:[%s259 + $0x338] sm:$0xff]
        %v576 = vld [vmem:[%s259 + $0x340] sm:$0xff]
        %v577 = vld [vmem:[%s259 + $0x348] sm:$0xff]
        %v578 = vld [vmem:[%s259 + $0x350] sm:$0xff]
        %v579 = vld [vmem:[%s259 + $0x358] sm:$0xff]
        %v580 = vld [vmem:[%s259 + $0x360] sm:$0xff]
        %v581 = vld [vmem:[%s259 + $0x368] sm:$0xff]
        %v582 = vld [vmem:[%s259 + $0x370] sm:$0xff]
        %v583 = vld [vmem:[%s259 + $0x378] sm:$0xff]
        %v584 = vld [vmem:[%s259 + $0x380] sm:$0xff]
        %v585 = vld [vmem:[%s259 + $0x388] sm:$0xff]
        %v586 = vld [vmem:[%s259 + $0x390] sm:$0xff]
        %v587 = vld [vmem:[%s259 + $0x398] sm:$0xff]
        %v588 = vld [vmem:[%s259 + $0x3a0] sm:$0xff]
        %v589 = vld [vmem:[%s259 + $0x3a8] sm:$0xff]
        %v590 = vld [vmem:[%s259 + $0x3b0] sm:$0xff]
        %v591 = vld [vmem:[%s259 + $0x3b8] sm:$0xff]
        %v592 = vld [vmem:[%s259 + $0x3c0] sm:$0xff]
        %v593 = vld [vmem:[%s259 + $0x3c8] sm:$0xff]
        %v594 = vld [vmem:[%s259 + $0x3d0] sm:$0xff]
        %v595 = vld [vmem:[%s259 + $0x3d8] sm:$0xff]
        %v596 = vld [vmem:[%s259 + $0x3e0] sm:$0xff]
        %v597 = vld [vmem:[%s259 + $0x3e8] sm:$0xff]
        %v598 = vld [vmem:[%s259 + $0x3f0] sm:$0xff]
        %v599 = vld [vmem:[%s259 + $0x3f8] sm:$0xff]
        %v600 = vld [vmem:[%s268] sm:$0xf]
        %v602 = vlaneseq
        %v603 = vshrl.u32 %v602, 7
        %v604 = vsub.s32 0, %v603
        %v605 = vrot.slane %v600, %v604
        %v606 = vlaneseq
        %v607 = vshrl.u32 %v606, 7
        %v608 = vsub.s32 1, %v607
        %v609 = vrot.slane %v600, %v608
        %v610 = vlaneseq
        %v611 = vshrl.u32 %v610, 7
        %v612 = vsub.s32 2, %v611
        %v613 = vrot.slane %v600, %v612
        %v614 = vlaneseq
        %v615 = vshrl.u32 %v614, 7
        %v616 = vsub.s32 3, %v615
        %v617 = vrot.slane %v600, %v616
        %v750 = vunpack.c.l.b16 %v472
        %v751 = vunpack.c.h.b16 %v472
        %v752 = vunpack.c.l.b16 %v473
        %v753 = vunpack.c.h.b16 %v473
        %v754 = vunpack.c.l.b16 %v474
        %v755 = vunpack.c.h.b16 %v474
        %v756 = vunpack.c.l.b16 %v475
        %v757 = vunpack.c.h.b16 %v475
        %v758 = vunpack.c.l.b16 %v476
        %v759 = vunpack.c.h.b16 %v476
        %v760 = vunpack.c.l.b16 %v477
        %v761 = vunpack.c.h.b16 %v477
        %v762 = vunpack.c.l.b16 %v478
        %v763 = vunpack.c.h.b16 %v478
        %v764 = vunpack.c.l.b16 %v479
        %v765 = vunpack.c.h.b16 %v479
        %v766 = vunpack.c.l.b16 %v480
        %v767 = vunpack.c.h.b16 %v480
        %v768 = vunpack.c.l.b16 %v481
        %v769 = vunpack.c.h.b16 %v481
        %v770 = vunpack.c.l.b16 %v482
        %v771 = vunpack.c.h.b16 %v482
        %v772 = vunpack.c.l.b16 %v483
        %v773 = vunpack.c.h.b16 %v483
        %v774 = vunpack.c.l.b16 %v484
        %v775 = vunpack.c.h.b16 %v484
        %v776 = vunpack.c.l.b16 %v485
        %v777 = vunpack.c.h.b16 %v485
        %v778 = vunpack.c.l.b16 %v486
        %v779 = vunpack.c.h.b16 %v486
        %v780 = vunpack.c.l.b16 %v487
        %v781 = vunpack.c.h.b16 %v487
        %v782 = vunpack.c.l.b16 %v488
        %v783 = vunpack.c.h.b16 %v488
        %v784 = vunpack.c.l.b16 %v489
        %v785 = vunpack.c.h.b16 %v489
        %v786 = vunpack.c.l.b16 %v490
        %v787 = vunpack.c.h.b16 %v490
        %v788 = vunpack.c.l.b16 %v491
        %v789 = vunpack.c.h.b16 %v491
        %v790 = vunpack.c.l.b16 %v492
        %v791 = vunpack.c.h.b16 %v492
        %v792 = vunpack.c.l.b16 %v493
        %v793 = vunpack.c.h.b16 %v493
        %v794 = vunpack.c.l.b16 %v494
        %v795 = vunpack.c.h.b16 %v494
        %v796 = vunpack.c.l.b16 %v495
        %v797 = vunpack.c.h.b16 %v495
        %v798 = vunpack.c.l.b16 %v496
        %v799 = vunpack.c.h.b16 %v496
        %v800 = vunpack.c.l.b16 %v497
        %v801 = vunpack.c.h.b16 %v497
        %v802 = vunpack.c.l.b16 %v498
        %v803 = vunpack.c.h.b16 %v498
        %v804 = vunpack.c.l.b16 %v499
        %v805 = vunpack.c.h.b16 %v499
        %v806 = vunpack.c.l.b16 %v500
        %v807 = vunpack.c.h.b16 %v500
        %v808 = vunpack.c.l.b16 %v501
        %v809 = vunpack.c.h.b16 %v501
        %v810 = vunpack.c.l.b16 %v502
        %v811 = vunpack.c.h.b16 %v502
        %v812 = vunpack.c.l.b16 %v503
        %v813 = vunpack.c.h.b16 %v503
        %v814 = vunpack.c.l.b16 %v504
        %v815 = vunpack.c.h.b16 %v504
        %v816 = vunpack.c.l.b16 %v505
        %v817 = vunpack.c.h.b16 %v505
        %v818 = vunpack.c.l.b16 %v506
        %v819 = vunpack.c.h.b16 %v506
        %v820 = vunpack.c.l.b16 %v507
        %v821 = vunpack.c.h.b16 %v507
        %v822 = vunpack.c.l.b16 %v508
        %v823 = vunpack.c.h.b16 %v508
        %v824 = vunpack.c.l.b16 %v509
        %v825 = vunpack.c.h.b16 %v509
        %v826 = vunpack.c.l.b16 %v510
        %v827 = vunpack.c.h.b16 %v510
        %v828 = vunpack.c.l.b16 %v511
        %v829 = vunpack.c.h.b16 %v511
        %v830 = vunpack.c.l.b16 %v512
        %v831 = vunpack.c.h.b16 %v512
        %v832 = vunpack.c.l.b16 %v513
        %v833 = vunpack.c.h.b16 %v513
        %v834 = vunpack.c.l.b16 %v514
        %v835 = vunpack.c.h.b16 %v514
        %v836 = vunpack.c.l.b16 %v515
        %v837 = vunpack.c.h.b16 %v515
        %v838 = vunpack.c.l.b16 %v516
        %v839 = vunpack.c.h.b16 %v516
        %v840 = vunpack.c.l.b16 %v517
        %v841 = vunpack.c.h.b16 %v517
        %v842 = vunpack.c.l.b16 %v518
        %v843 = vunpack.c.h.b16 %v518
        %v844 = vunpack.c.l.b16 %v519
        %v845 = vunpack.c.h.b16 %v519
        %v846 = vunpack.c.l.b16 %v520
        %v847 = vunpack.c.h.b16 %v520
        %v848 = vunpack.c.l.b16 %v521
        %v849 = vunpack.c.h.b16 %v521
        %v850 = vunpack.c.l.b16 %v522
        %v851 = vunpack.c.h.b16 %v522
        %v852 = vunpack.c.l.b16 %v523
        %v853 = vunpack.c.h.b16 %v523
        %v854 = vunpack.c.l.b16 %v524
        %v855 = vunpack.c.h.b16 %v524
        %v856 = vunpack.c.l.b16 %v525
        %v857 = vunpack.c.h.b16 %v525
        %v858 = vunpack.c.l.b16 %v526
        %v859 = vunpack.c.h.b16 %v526
        %v860 = vunpack.c.l.b16 %v527
        %v861 = vunpack.c.h.b16 %v527
        %v862 = vunpack.c.l.b16 %v528
        %v863 = vunpack.c.h.b16 %v528
        %v864 = vunpack.c.l.b16 %v529
        %v865 = vunpack.c.h.b16 %v529
        %v866 = vunpack.c.l.b16 %v530
        %v867 = vunpack.c.h.b16 %v530
        %v868 = vunpack.c.l.b16 %v531
        %v869 = vunpack.c.h.b16 %v531
        %v870 = vunpack.c.l.b16 %v532
        %v871 = vunpack.c.h.b16 %v532
        %v872 = vunpack.c.l.b16 %v533
        %v873 = vunpack.c.h.b16 %v533
        %v874 = vunpack.c.l.b16 %v534
        %v875 = vunpack.c.h.b16 %v534
        %v876 = vunpack.c.l.b16 %v535
        %v877 = vunpack.c.h.b16 %v535
        %v878 = vunpack.c.l.b16 %v536
        %v879 = vunpack.c.h.b16 %v536
        %v880 = vunpack.c.l.b16 %v537
        %v881 = vunpack.c.h.b16 %v537
        %v882 = vunpack.c.l.b16 %v538
        %v883 = vunpack.c.h.b16 %v538
        %v884 = vunpack.c.l.b16 %v539
        %v885 = vunpack.c.h.b16 %v539
        %v886 = vunpack.c.l.b16 %v540
        %v887 = vunpack.c.h.b16 %v540
        %v888 = vunpack.c.l.b16 %v541
        %v889 = vunpack.c.h.b16 %v541
        %v890 = vunpack.c.l.b16 %v542
        %v891 = vunpack.c.h.b16 %v542
        %v892 = vunpack.c.l.b16 %v543
        %v893 = vunpack.c.h.b16 %v543
        %v894 = vunpack.c.l.b16 %v544
        %v895 = vunpack.c.h.b16 %v544
        %v896 = vunpack.c.l.b16 %v545
        %v897 = vunpack.c.h.b16 %v545
        %v898 = vunpack.c.l.b16 %v546
        %v899 = vunpack.c.h.b16 %v546
        %v900 = vunpack.c.l.b16 %v547
        %v901 = vunpack.c.h.b16 %v547
        %v902 = vunpack.c.l.b16 %v548
        %v903 = vunpack.c.h.b16 %v548
        %v904 = vunpack.c.l.b16 %v549
        %v905 = vunpack.c.h.b16 %v549
        %v906 = vunpack.c.l.b16 %v550
        %v907 = vunpack.c.h.b16 %v550
        %v908 = vunpack.c.l.b16 %v551
        %v909 = vunpack.c.h.b16 %v551
        %v910 = vunpack.c.l.b16 %v552
        %v911 = vunpack.c.h.b16 %v552
        %v912 = vunpack.c.l.b16 %v553
        %v913 = vunpack.c.h.b16 %v553
        %v914 = vunpack.c.l.b16 %v554
        %v915 = vunpack.c.h.b16 %v554
        %v916 = vunpack.c.l.b16 %v555
        %v917 = vunpack.c.h.b16 %v555
        %v918 = vunpack.c.l.b16 %v556
        %v919 = vunpack.c.h.b16 %v556
        %v920 = vunpack.c.l.b16 %v557
        %v921 = vunpack.c.h.b16 %v557
        %v922 = vunpack.c.l.b16 %v558
        %v923 = vunpack.c.h.b16 %v558
        %v924 = vunpack.c.l.b16 %v559
        %v925 = vunpack.c.h.b16 %v559
        %v926 = vunpack.c.l.b16 %v560
        %v927 = vunpack.c.h.b16 %v560
        %v928 = vunpack.c.l.b16 %v561
        %v929 = vunpack.c.h.b16 %v561
        %v930 = vunpack.c.l.b16 %v562
        %v931 = vunpack.c.h.b16 %v562
        %v932 = vunpack.c.l.b16 %v563
        %v933 = vunpack.c.h.b16 %v563
        %v934 = vunpack.c.l.b16 %v564
        %v935 = vunpack.c.h.b16 %v564
        %v936 = vunpack.c.l.b16 %v565
        %v937 = vunpack.c.h.b16 %v565
        %v938 = vunpack.c.l.b16 %v566
        %v939 = vunpack.c.h.b16 %v566
        %v940 = vunpack.c.l.b16 %v567
        %v941 = vunpack.c.h.b16 %v567
        %v942 = vunpack.c.l.b16 %v568
        %v943 = vunpack.c.h.b16 %v568
        %v944 = vunpack.c.l.b16 %v569
        %v945 = vunpack.c.h.b16 %v569
        %v946 = vunpack.c.l.b16 %v570
        %v947 = vunpack.c.h.b16 %v570
        %v948 = vunpack.c.l.b16 %v571
        %v949 = vunpack.c.h.b16 %v571
        %v950 = vunpack.c.l.b16 %v572
        %v951 = vunpack.c.h.b16 %v572
        %v952 = vunpack.c.l.b16 %v573
        %v953 = vunpack.c.h.b16 %v573
        %v954 = vunpack.c.l.b16 %v574
        %v955 = vunpack.c.h.b16 %v574
        %v956 = vunpack.c.l.b16 %v575
        %v957 = vunpack.c.h.b16 %v575
        %v958 = vunpack.c.l.b16 %v576
        %v959 = vunpack.c.h.b16 %v576
        %v960 = vunpack.c.l.b16 %v577
        %v961 = vunpack.c.h.b16 %v577
        %v962 = vunpack.c.l.b16 %v578
        %v963 = vunpack.c.h.b16 %v578
        %v964 = vunpack.c.l.b16 %v579
        %v965 = vunpack.c.h.b16 %v579
        %v966 = vunpack.c.l.b16 %v580
        %v967 = vunpack.c.h.b16 %v580
        %v968 = vunpack.c.l.b16 %v581
        %v969 = vunpack.c.h.b16 %v581
        %v970 = vunpack.c.l.b16 %v582
        %v971 = vunpack.c.h.b16 %v582
        %v972 = vunpack.c.l.b16 %v583
        %v973 = vunpack.c.h.b16 %v583
        %v974 = vunpack.c.l.b16 %v584
        %v975 = vunpack.c.h.b16 %v584
        %v976 = vunpack.c.l.b16 %v585
        %v977 = vunpack.c.h.b16 %v585
        %v978 = vunpack.c.l.b16 %v586
        %v979 = vunpack.c.h.b16 %v586
        %v980 = vunpack.c.l.b16 %v587
        %v981 = vunpack.c.h.b16 %v587
        %v982 = vunpack.c.l.b16 %v588
        %v983 = vunpack.c.h.b16 %v588
        %v984 = vunpack.c.l.b16 %v589
        %v985 = vunpack.c.h.b16 %v589
        %v986 = vunpack.c.l.b16 %v590
        %v987 = vunpack.c.h.b16 %v590
        %v988 = vunpack.c.l.b16 %v591
        %v989 = vunpack.c.h.b16 %v591
        %v990 = vunpack.c.l.b16 %v592
        %v991 = vunpack.c.h.b16 %v592
        %v992 = vunpack.c.l.b16 %v593
        %v993 = vunpack.c.h.b16 %v593
        %v994 = vunpack.c.l.b16 %v594
        %v995 = vunpack.c.h.b16 %v594
        %v996 = vunpack.c.l.b16 %v595
        %v997 = vunpack.c.h.b16 %v595
        %v998 = vunpack.c.l.b16 %v596
        %v999 = vunpack.c.h.b16 %v596
        %v1000 = vunpack.c.l.b16 %v597
        %v1001 = vunpack.c.h.b16 %v597
        %v1002 = vunpack.c.l.b16 %v598
        %v1003 = vunpack.c.h.b16 %v598
        %v1004 = vunpack.c.l.b16 %v599
        %v1005 = vunpack.c.h.b16 %v599
        %v1006 = vpack.c.b16 %v754, %v750
        %v1007 = vpack.c.b16 %v755, %v751
        %v1008 = vpack.c.b16 %v756, %v752
        %v1009 = vpack.c.b16 %v757, %v753
        %v1010 = vpack.c.b16 %v762, %v758
        %v1011 = vpack.c.b16 %v763, %v759
        %v1012 = vpack.c.b16 %v764, %v760
        %v1013 = vpack.c.b16 %v765, %v761
        %v1014 = vpack.c.b16 %v770, %v766
        %v1015 = vpack.c.b16 %v771, %v767
        %v1016 = vpack.c.b16 %v772, %v768
        %v1017 = vpack.c.b16 %v773, %v769
        %v1018 = vpack.c.b16 %v778, %v774
        %v1019 = vpack.c.b16 %v779, %v775
        %v1020 = vpack.c.b16 %v780, %v776
        %v1021 = vpack.c.b16 %v781, %v777
        %v1022 = vpack.c.b16 %v786, %v782
        %v1023 = vpack.c.b16 %v787, %v783
        %v1024 = vpack.c.b16 %v788, %v784
        %v1025 = vpack.c.b16 %v789, %v785
        %v1026 = vpack.c.b16 %v794, %v790
        %v1027 = vpack.c.b16 %v795, %v791
        %v1028 = vpack.c.b16 %v796, %v792
        %v1029 = vpack.c.b16 %v797, %v793
        %v1030 = vpack.c.b16 %v802, %v798
        %v1031 = vpack.c.b16 %v803, %v799
        %v1032 = vpack.c.b16 %v804, %v800
        %v1033 = vpack.c.b16 %v805, %v801
        %v1034 = vpack.c.b16 %v810, %v806
        %v1035 = vpack.c.b16 %v811, %v807
        %v1036 = vpack.c.b16 %v812, %v808
        %v1037 = vpack.c.b16 %v813, %v809
        %v1038 = vpack.c.b16 %v818, %v814
        %v1039 = vpack.c.b16 %v819, %v815
        %v1040 = vpack.c.b16 %v820, %v816
        %v1041 = vpack.c.b16 %v821, %v817
        %v1042 = vpack.c.b16 %v826, %v822
        %v1043 = vpack.c.b16 %v827, %v823
        %v1044 = vpack.c.b16 %v828, %v824
        %v1045 = vpack.c.b16 %v829, %v825
        %v1046 = vpack.c.b16 %v834, %v830
        %v1047 = vpack.c.b16 %v835, %v831
        %v1048 = vpack.c.b16 %v836, %v832
        %v1049 = vpack.c.b16 %v837, %v833
        %v1050 = vpack.c.b16 %v842, %v838
        %v1051 = vpack.c.b16 %v843, %v839
        %v1052 = vpack.c.b16 %v844, %v840
        %v1053 = vpack.c.b16 %v845, %v841
        %v1054 = vpack.c.b16 %v850, %v846
        %v1055 = vpack.c.b16 %v851, %v847
        %v1056 = vpack.c.b16 %v852, %v848
        %v1057 = vpack.c.b16 %v853, %v849
        %v1058 = vpack.c.b16 %v858, %v854
        %v1059 = vpack.c.b16 %v859, %v855
        %v1060 = vpack.c.b16 %v860, %v856
        %v1061 = vpack.c.b16 %v861, %v857
        %v1062 = vpack.c.b16 %v866, %v862
        %v1063 = vpack.c.b16 %v867, %v863
        %v1064 = vpack.c.b16 %v868, %v864
        %v1065 = vpack.c.b16 %v869, %v865
        %v1066 = vpack.c.b16 %v874, %v870
        %v1067 = vpack.c.b16 %v875, %v871
        %v1068 = vpack.c.b16 %v876, %v872
        %v1069 = vpack.c.b16 %v877, %v873
        %v1070 = vpack.c.b16 %v882, %v878
        %v1071 = vpack.c.b16 %v883, %v879
        %v1072 = vpack.c.b16 %v884, %v880
        %v1073 = vpack.c.b16 %v885, %v881
        %v1074 = vpack.c.b16 %v890, %v886
        %v1075 = vpack.c.b16 %v891, %v887
        %v1076 = vpack.c.b16 %v892, %v888
        %v1077 = vpack.c.b16 %v893, %v889
        %v1078 = vpack.c.b16 %v898, %v894
        %v1079 = vpack.c.b16 %v899, %v895
        %v1080 = vpack.c.b16 %v900, %v896
        %v1081 = vpack.c.b16 %v901, %v897
        %v1082 = vpack.c.b16 %v906, %v902
        %v1083 = vpack.c.b16 %v907, %v903
        %v1084 = vpack.c.b16 %v908, %v904
        %v1085 = vpack.c.b16 %v909, %v905
        %v1086 = vpack.c.b16 %v914, %v910
        %v1087 = vpack.c.b16 %v915, %v911
        %v1088 = vpack.c.b16 %v916, %v912
        %v1089 = vpack.c.b16 %v917, %v913
        %v1090 = vpack.c.b16 %v922, %v918
        %v1091 = vpack.c.b16 %v923, %v919
        %v1092 = vpack.c.b16 %v924, %v920
        %v1093 = vpack.c.b16 %v925, %v921
        %v1094 = vpack.c.b16 %v930, %v926
        %v1095 = vpack.c.b16 %v931, %v927
        %v1096 = vpack.c.b16 %v932, %v928
        %v1097 = vpack.c.b16 %v933, %v929
        %v1098 = vpack.c.b16 %v938, %v934
        %v1099 = vpack.c.b16 %v939, %v935
        %v1100 = vpack.c.b16 %v940, %v936
        %v1101 = vpack.c.b16 %v941, %v937
        %v1102 = vpack.c.b16 %v946, %v942
        %v1103 = vpack.c.b16 %v947, %v943
        %v1104 = vpack.c.b16 %v948, %v944
        %v1105 = vpack.c.b16 %v949, %v945
        %v1106 = vpack.c.b16 %v954, %v950
        %v1107 = vpack.c.b16 %v955, %v951
        %v1108 = vpack.c.b16 %v956, %v952
        %v1109 = vpack.c.b16 %v957, %v953
        %v1110 = vpack.c.b16 %v962, %v958
        %v1111 = vpack.c.b16 %v963, %v959
        %v1112 = vpack.c.b16 %v964, %v960
        %v1113 = vpack.c.b16 %v965, %v961
        %v1114 = vpack.c.b16 %v970, %v966
        %v1115 = vpack.c.b16 %v971, %v967
        %v1116 = vpack.c.b16 %v972, %v968
        %v1117 = vpack.c.b16 %v973, %v969
        %v1118 = vpack.c.b16 %v978, %v974
        %v1119 = vpack.c.b16 %v979, %v975
        %v1120 = vpack.c.b16 %v980, %v976
        %v1121 = vpack.c.b16 %v981, %v977
        %v1122 = vpack.c.b16 %v986, %v982
        %v1123 = vpack.c.b16 %v987, %v983
        %v1124 = vpack.c.b16 %v988, %v984
        %v1125 = vpack.c.b16 %v989, %v985
        %v1126 = vpack.c.b16 %v994, %v990
        %v1127 = vpack.c.b16 %v995, %v991
        %v1128 = vpack.c.b16 %v996, %v992
        %v1129 = vpack.c.b16 %v997, %v993
        %v1130 = vpack.c.b16 %v1002, %v998
        %v1131 = vpack.c.b16 %v1003, %v999
        %v1132 = vpack.c.b16 %v1004, %v1000
        %v1133 = vpack.c.b16 %v1005, %v1001
        %1262 = vmatprep.subr.bf16.mxu0 %v1035
        %1263 = vmatpush1.bf16.msra.mxu0 %v1034
        %1264 = vmatprep.subr.bf16.mxu0 %v1031
        %1265 = vmatpush1.bf16.msra.mxu0 %v1030
        %1266 = vmatprep.subr.bf16.mxu0 %v1027
        %1267 = vmatpush1.bf16.msra.mxu0 %v1026
        %1268 = vmatprep.subr.bf16.mxu0 %v1023
        %1269 = vmatpush1.bf16.msra.mxu0 %v1022
        %1270 = vmatprep.subr.bf16.mxu0 %v1019
        %1271 = vmatpush1.bf16.msra.mxu0 %v1018
        %1272 = vmatprep.subr.bf16.mxu0 %v1015
        %1273 = vmatpush1.bf16.msra.mxu0 %v1014
        %1274 = vmatprep.subr.bf16.mxu0 %v1011
        %1275 = vmatpush1.bf16.msra.mxu0 %v1010
        %1276 = vmatprep.subr.bf16.mxu0 %v1007
        %1277 = vmatpush1.bf16.msra.mxu0 %v1006
        %1278 = vmatprep.subr.bf16.mxu0 %v1067
        %1279 = vmatpush2.bf16.msra.mxu0 %v1066
        %1280 = vmatprep.subr.bf16.mxu0 %v1063
        %1281 = vmatpush2.bf16.msra.mxu0 %v1062
        %1282 = vmatprep.subr.bf16.mxu0 %v1059
        %1283 = vmatpush2.bf16.msra.mxu0 %v1058
        %1284 = vmatprep.subr.bf16.mxu0 %v1055
        %1285 = vmatpush2.bf16.msra.mxu0 %v1054
        %1286 = vmatprep.subr.bf16.mxu0 %v1051
        %1287 = vmatpush2.bf16.msra.mxu0 %v1050
        %1288 = vmatprep.subr.bf16.mxu0 %v1047
        %1289 = vmatpush2.bf16.msra.mxu0 %v1046
        %1290 = vmatprep.subr.bf16.mxu0 %v1043
        %1291 = vmatpush2.bf16.msra.mxu0 %v1042
        %1292 = vmatprep.subr.bf16.mxu0 %v1039
        %1293 = vmatpush2.bf16.msra.mxu0 %v1038
        %1294 = vmatprep.mubr.bf16.mxu0 %v469
        %1295 = vmatmul.mubr.bf16.gmra.mxu0 %v468
        %v1296 = vpop.f32.mrf.mxu0
        %v1297 = vadd.f32 %v605, %v1296
        %v1298 = vpop.f32.mrf.mxu0
        %v1299 = vadd.f32 %v609, %v1298
        %v1300 = vpop.f32.mrf.mxu0
        %v1301 = vpop.f32.mrf.mxu0
        %1302 = vdwg.mxu0
        %1303 = vmatprep.subr.bf16.mxu0 %v1099
        %1304 = vmatpush1.bf16.msra.mxu0 %v1098
        %1305 = vmatprep.subr.bf16.mxu0 %v1095
        %1306 = vmatpush1.bf16.msra.mxu0 %v1094
        %1307 = vmatprep.subr.bf16.mxu0 %v1091
        %1308 = vmatpush1.bf16.msra.mxu0 %v1090
        %1309 = vmatprep.subr.bf16.mxu0 %v1087
        %1310 = vmatpush1.bf16.msra.mxu0 %v1086
        %1311 = vmatprep.subr.bf16.mxu0 %v1083
        %1312 = vmatpush1.bf16.msra.mxu0 %v1082
        %1313 = vmatprep.subr.bf16.mxu0 %v1079
        %1314 = vmatpush1.bf16.msra.mxu0 %v1078
        %1315 = vmatprep.subr.bf16.mxu0 %v1075
        %1316 = vmatpush1.bf16.msra.mxu0 %v1074
        %1317 = vmatprep.subr.bf16.mxu0 %v1071
        %1318 = vmatpush1.bf16.msra.mxu0 %v1070
        %1319 = vmatprep.subr.bf16.mxu0 %v1131
        %1320 = vmatpush2.bf16.msra.mxu0 %v1130
        %1321 = vmatprep.subr.bf16.mxu0 %v1127
        %1322 = vmatpush2.bf16.msra.mxu0 %v1126
        %1323 = vmatprep.subr.bf16.mxu0 %v1123
        %1324 = vmatpush2.bf16.msra.mxu0 %v1122
        %1325 = vmatprep.subr.bf16.mxu0 %v1119
        %1326 = vmatpush2.bf16.msra.mxu0 %v1118
        %1327 = vmatprep.subr.bf16.mxu0 %v1115
        %1328 = vmatpush2.bf16.msra.mxu0 %v1114
        %1329 = vmatprep.subr.bf16.mxu0 %v1111
        %1330 = vmatpush2.bf16.msra.mxu0 %v1110
        %1331 = vmatprep.subr.bf16.mxu0 %v1107
        %1332 = vmatpush2.bf16.msra.mxu0 %v1106
        %1333 = vmatprep.subr.bf16.mxu0 %v1103
        %1334 = vmatpush2.bf16.msra.mxu0 %v1102
        %1335 = vmatprep.mubr.bf16.mxu0 %v471
        %1336 = vmatmul.mubr.bf16.gmra.mxu0 %v470
        %v1337 = vpop.f32.mrf.mxu0
        %v1338 = vadd.f32 %v1297, %v1337
        %v1339 = vpop.f32.mrf.mxu0
        %v1340 = vadd.f32 %v1299, %v1339
        %v1341 = vpop.f32.mrf.mxu0
        %v1342 = vpop.f32.mrf.mxu0
        %1343 = vdwg.mxu0
        %1344 = vmatprep.subr.bf16.mxu0 %v1037
        %1345 = vmatpush1.bf16.msra.mxu0 %v1036
        %1346 = vmatprep.subr.bf16.mxu0 %v1033
        %1347 = vmatpush1.bf16.msra.mxu0 %v1032
        %1348 = vmatprep.subr.bf16.mxu0 %v1029
        %1349 = vmatpush1.bf16.msra.mxu0 %v1028
        %1350 = vmatprep.subr.bf16.mxu0 %v1025
        %1351 = vmatpush1.bf16.msra.mxu0 %v1024
        %1352 = vmatprep.subr.bf16.mxu0 %v1021
        %1353 = vmatpush1.bf16.msra.mxu0 %v1020
        %1354 = vmatprep.subr.bf16.mxu0 %v1017
        %1355 = vmatpush1.bf16.msra.mxu0 %v1016
        %1356 = vmatprep.subr.bf16.mxu0 %v1013
        %1357 = vmatpush1.bf16.msra.mxu0 %v1012
        %1358 = vmatprep.subr.bf16.mxu0 %v1009
        %1359 = vmatpush1.bf16.msra.mxu0 %v1008
        %1360 = vmatprep.subr.bf16.mxu0 %v1069
        %1361 = vmatpush2.bf16.msra.mxu0 %v1068
        %1362 = vmatprep.subr.bf16.mxu0 %v1065
        %1363 = vmatpush2.bf16.msra.mxu0 %v1064
        %1364 = vmatprep.subr.bf16.mxu0 %v1061
        %1365 = vmatpush2.bf16.msra.mxu0 %v1060
        %1366 = vmatprep.subr.bf16.mxu0 %v1057
        %1367 = vmatpush2.bf16.msra.mxu0 %v1056
        %1368 = vmatprep.subr.bf16.mxu0 %v1053
        %1369 = vmatpush2.bf16.msra.mxu0 %v1052
        %1370 = vmatprep.subr.bf16.mxu0 %v1049
        %1371 = vmatpush2.bf16.msra.mxu0 %v1048
        %1372 = vmatprep.subr.bf16.mxu0 %v1045
        %1373 = vmatpush2.bf16.msra.mxu0 %v1044
        %1374 = vmatprep.subr.bf16.mxu0 %v1041
        %1375 = vmatpush2.bf16.msra.mxu0 %v1040
        %1376 = vmatprep.mubr.bf16.mxu0 %v469
        %1377 = vmatmul.mubr.bf16.gmra.mxu0 %v468
        %v1378 = vpop.f32.mrf.mxu0
        %v1379 = vadd.f32 %v613, %v1378
        %v1380 = vpop.f32.mrf.mxu0
        %v1381 = vadd.f32 %v617, %v1380
        %v1382 = vpop.f32.mrf.mxu0
        %v1383 = vpop.f32.mrf.mxu0
        %1384 = vdwg.mxu0
        %1385 = vmatprep.subr.bf16.mxu0 %v1101
        %1386 = vmatpush1.bf16.msra.mxu0 %v1100
        %1387 = vmatprep.subr.bf16.mxu0 %v1097
        %1388 = vmatpush1.bf16.msra.mxu0 %v1096
        %1389 = vmatprep.subr.bf16.mxu0 %v1093
        %1390 = vmatpush1.bf16.msra.mxu0 %v1092
        %1391 = vmatprep.subr.bf16.mxu0 %v1089
        %1392 = vmatpush1.bf16.msra.mxu0 %v1088
        %1393 = vmatprep.subr.bf16.mxu0 %v1085
        %1394 = vmatpush1.bf16.msra.mxu0 %v1084
        %1395 = vmatprep.subr.bf16.mxu0 %v1081
        %1396 = vmatpush1.bf16.msra.mxu0 %v1080
        %1397 = vmatprep.subr.bf16.mxu0 %v1077
        %1398 = vmatpush1.bf16.msra.mxu0 %v1076
        %1399 = vmatprep.subr.bf16.mxu0 %v1073
        %1400 = vmatpush1.bf16.msra.mxu0 %v1072
        %1401 = vmatprep.subr.bf16.mxu0 %v1133
        %1402 = vmatpush2.bf16.msra.mxu0 %v1132
        %1403 = vmatprep.subr.bf16.mxu0 %v1129
        %1404 = vmatpush2.bf16.msra.mxu0 %v1128
        %1405 = vmatprep.subr.bf16.mxu0 %v1125
        %1406 = vmatpush2.bf16.msra.mxu0 %v1124
        %1407 = vmatprep.subr.bf16.mxu0 %v1121
        %1408 = vmatpush2.bf16.msra.mxu0 %v1120
        %1409 = vmatprep.subr.bf16.mxu0 %v1117
        %1410 = vmatpush2.bf16.msra.mxu0 %v1116
        %1411 = vmatprep.subr.bf16.mxu0 %v1113
        %1412 = vmatpush2.bf16.msra.mxu0 %v1112
        %1413 = vmatprep.subr.bf16.mxu0 %v1109
        %1414 = vmatpush2.bf16.msra.mxu0 %v1108
        %1415 = vmatprep.subr.bf16.mxu0 %v1105
        %1416 = vmatpush2.bf16.msra.mxu0 %v1104
        %1417 = vmatprep.mubr.bf16.mxu0 %v471
        %1418 = vmatmul.mubr.bf16.gmra.mxu0 %v470
        %v1419 = vpop.f32.mrf.mxu0
        %v1420 = vadd.f32 %v1379, %v1419
        %v1421 = vpop.f32.mrf.mxu0
        %v1422 = vadd.f32 %v1381, %v1421
        %v1423 = vpop.f32.mrf.mxu0
        %v1424 = vpop.f32.mrf.mxu0
        %1425 = vdwg.mxu0
        %v1426 = vmax.f32 %v1338, 0.0
        %v1427 = vmax.f32 %v1340, 0.0
        %v1428 = vmax.f32 %v1420, 0.0
        %v1429 = vmax.f32 %v1422, 0.0
        %v1430 = vpack.c.bf16 %v1426, %v1426
        %v1431 = vpack.c.bf16 %v1427, %v1427
        %v1432 = vpack.c.bf16 %v1428, %v1428
        %v1433 = vpack.c.bf16 %v1429, %v1429
        %v1438 = vcombine.low %v1430, %v1431
        %v1439 = vcombine.low %v1432, %v1433
        %v1441 = vunpack.c.l.s4 1966171168
        %v1442 = vunpack.c.0.s8 %v1441
        %v1443 = vlaneseq
        %v1444 = vshrl.u32 %v1443, 7
        %v1445 = vsub.s32 %v1442, %v1444
        %v1446 = vrot.slane %v1438, %v1445
        %v1448 = vunpack.c.l.s4 1966171168
        %v1449 = vunpack.c.0.s8 %v1448
        %v1450 = vlaneseq
        %v1451 = vshrl.u32 %v1450, 7
        %v1452 = vsub.s32 %v1449, %v1451
        %v1453 = vrot.slane %v1439, %v1452
        %v1454 = vcombine.low %v1446, %v1453
        %v1456 = vunpack.c.l.s4 1966171168
        %v1457 = vunpack.c.0.s8 %v1456
        %v1458 = vlaneseq
        %v1459 = vshrl.u32 %v1458, 7
        %v1460 = vsub.s32 %v1457, %v1459
        %v1461 = vrot.slane %v1454, %v1460
        %1463 = vst [vmem:[%s304] sm:$0xf] %v1461
        %s1464 = smul.u32 4, %s18
        %p1465 = scmp.lt.s32.totalorder %s1464, 7
        %s1466 = scalar_select %p1465, %s1464, 7
        %s1467 = scalar_lea.vmem %s5, %s1466
        // Predicated region
        $region57: #{conv_decoder_forward.5} parent=39 // pred_check
          %p1468 = pneg %p151
        $region58: #{conv_decoder_forward.5} parent=39 // pred_check_branch
          %1470 = sbr.rel (%p1468) target = $region60
        $region59: #{conv_decoder_forward.5} parent=39 // pred_region
          %s1471 = smul.u32 4, %s18
        $region60: #{conv_decoder_forward.5} parent=39 // pred_fallthru
          _
      $region40: #{conv_decoder_forward.5} parent=5 // pred_fallthru
        _
      %p1472 = scmp.le.s32.totalorder 2, %s13
      // Predicated region
      $region61: #{conv_decoder_forward.5} parent=5 // pred_check
        %p1473 = pneg %p1472
      $region62: #{conv_decoder_forward.5} parent=5 // pred_check_branch
        %1475 = sbr.rel (%p1473) target = $region64
      $region63: #{conv_decoder_forward.5} parent=5 // pred_region
        %s1476 = ssub.s32 %s13, 2
        // Predicated region
        $region65: #{conv_decoder_forward.5} parent=63 // pred_check
          %p1477 = pneg %p157
        $region66: #{conv_decoder_forward.5} parent=63 // pred_check_branch
          %1479 = sbr.rel (%p1477) target = $region68
        $region67: #{conv_decoder_forward.5} parent=63 // pred_region
          %s1480 = smul.u32 4, %s19
          %p1481 = scmp.lt.s32.totalorder %s1480, 7
          %s1482 = scalar_select %p1481, %s1480, 7
          %s1483 = scalar_lea.vmem %s5, %s1482
        $region68: #{conv_decoder_forward.5} parent=63 // pred_fallthru
          _
      $region64: #{conv_decoder_forward.5} parent=5 // pred_fallthru
        _
    $region6: #{conv_decoder_forward.5} parent=1 // loop_footer
      %s17 = sadd.s32 1, %s13
    $region7: #{conv_decoder_forward.5} parent=1 // loop_footer_branch
      %12 = sbr.rel target = $region3
    $region8: #{conv_decoder_forward.5} parent=1 // loop_exit
      _
    %1484 = vsyncpa [#allocation3], 1
    %s1485 = scalar_lea.sflag [#allocation3], 1
    %1486 = vsyncpa %s1485, 1
    %1487 = vsyncpa [#allocation5], 1

// kernel: conv_decoder_forward.7
$region0: #{conv_decoder_forward.7}
  #allocation0 [shape = 'u32[]', space=smem, size = 0x4, offset = 0x4, fixed_abs, tag = 'smem constant byte address 0x4 - core index']
  #allocation1 [shape = 'u32[144,128]{1,0:T(1,128)}', space=vmem, size = 0x12000, scoped, tag = 'internal scratch']
  %s0 = inlined_call_operand.vmem [shape: bf16[192,256], index: 0, kind: input, shape index: {}]
  %s1 = inlined_call_operand.hbm [shape: bf16[256,128], index: 1, kind: input, shape index: {}]
  %s2 = inlined_call_operand.hbm [shape: f32[1,128], index: 2, kind: input, shape index: {}]
  %s3 = inlined_call_operand.vmem [shape: bf16[192,128], index: 3, kind: output, shape index: {}]
  %s4 = sld [smem:[#allocation0]]
  $region53: #{conv_decoder_forward.7} parent=0
    _
  %s6 = ssub.s32 1, %s4
  %s7 = scalar_select 0, %s6, %s4
  $region1: #{conv_decoder_forward.7} parent=0
    #allocation2 [shape = 'u8[65536]{0}', space=vmem, size = 0x10000, scoped, tag = 'input window, operand 1, single buffered']
    #allocation3 [shape = 's32[2]{0}', space=sflag, size = 0x8, scoped, tag = 'scoped memory for conv_decoder_forward.7']
    #allocation4 [shape = 'u8[512]{0}', space=vmem, size = 0x400, scoped, tag = 'input window, operand 2, single buffered']
    #allocation5 [shape = 's32[1]{0}', space=sflag, size = 0x4, scoped, tag = 'scoped memory for conv_decoder_forward.7']
    %8 = vsyncpa [#allocation3], 0
    %9 = vsyncpa [#allocation5], 0
    loop: start=0, step=1, limit=4
    $region2: #{conv_decoder_forward.7} parent=1 // loop_pre_header
      _
    $region3: #{conv_decoder_forward.7} parent=1 // loop_header
      %s11 = sphi 0, %s15
      %p12 = scmp.ge.s32.totalorder %s11, 4
      %s21 = sphi 0, %s23
      %s24 = sphi 0, %s21
      %s25 = sphi 0, %s24
      %s41 = sphi 0, %s25
      %s45 = sphi 0, %s45
      %s47 = sphi 0, %s45
      %s48 = sphi 0, %s47
      %s62 = sphi 0, %s48
      %s66 = sphi 0, %s66
      %s68 = sphi 0, %s66
      %s69 = sphi 0, %s68
      %s83 = sphi 0, %s69
      %s89 = sphi 0, %s91
      %s92 = sphi 0, %s89
      %s93 = sphi 0, %s92
      %s109 = sphi 0, %s93
    $region4: #{conv_decoder_forward.7} parent=1 // loop_header_branch
      %14 = sbr.rel (%p12) target = $region8
    $region5: #{conv_decoder_forward.7} parent=1 // loop_body
      %s16 = ssub.s32 %s11, 1
      %s17 = ssub.s32 %s11, 2
      %s18 = sadd.s32 %s11, 1
      %s19 = ssub.s32 %s11, %s18
      %p20 = scmp.eq.s32.totalorder %s19, 0
      %s22 = sadd.s32 %s21, 1
      %s23 = scalar_select %p20, %s21, %s22
      %p26 = pneg %p20
      %p27 = scmp.eq.s32.totalorder %s11, 1
      %p28 = por %p26, %p27
      %p29 = scmp.ne.s32.totalorder %s21, %s24
      %p30 = scmp.eq.s32.totalorder %s11, 0
      %p31 = por %p29, %p30
      %p32 = scmp.ne.s32.totalorder %s21, %s24
      %p33 = scmp.eq.s32.totalorder %s16, 1
      %p34 = por %p32, %p33
      %p35 = scmp.ne.s32.totalorder %s24, %s25
      %p36 = scmp.eq.s32.totalorder %s16, 0
      %p37 = por %p35, %p36
      %p38 = scmp.ne.s32.totalorder %s24, %s25
      %p39 = scmp.eq.s32.totalorder %s17, 1
      %p40 = por %p38, %p39
      %p42 = scmp.ne.s32.totalorder %s25, %s41
      %p43 = scmp.eq.s32.totalorder %s17, 0
      %p44 = por %p42, %p43
      %s46 = sadd.s32 %s45, 1
      %p49 = scmp.eq.s32.totalorder %s11, 1
      %p50 = scmp.ne.s32.totalorder %s45, %s47
      %p51 = scmp.eq.s32.totalorder %s11, 0
      %p52 = por %p50, %p51
      %p53 = scmp.ne.s32.totalorder %s45, %s47
      %p54 = scmp.eq.s32.totalorder %s16, 1
      %p55 = por %p53, %p54
      %p56 = scmp.ne.s32.totalorder %s47, %s48
      %p57 = scmp.eq.s32.totalorder %s16, 0
      %p58 = por %p56, %p57
      %p59 = scmp.ne.s32.totalorder %s47, %s48
      %p60 = scmp.eq.s32.totalorder %s17, 1
      %p61 = por %p59, %p60
      %p63 = scmp.ne.s32.totalorder %s48, %s62
      %p64 = scmp.eq.s32.totalorder %s17, 0
      %p65 = por %p63, %p64
      %s67 = sadd.s32 %s66, 1
      %p70 = scmp.eq.s32.totalorder %s11, 1
      %p71 = scmp.ne.s32.totalorder %s66, %s68
      %p72 = scmp.eq.s32.totalorder %s11, 0
      %p73 = por %p71, %p72
      %p74 = scmp.ne.s32.totalorder %s66, %s68
      %p75 = scmp.eq.s32.totalorder %s16, 1
      %p76 = por %p74, %p75
      %p77 = scmp.ne.s32.totalorder %s68, %s69
      %p78 = scmp.eq.s32.totalorder %s16, 0
      %p79 = por %p77, %p78
      %p80 = scmp.ne.s32.totalorder %s68, %s69
      %p81 = scmp.eq.s32.totalorder %s17, 1
      %p82 = por %p80, %p81
      %p84 = scmp.ne.s32.totalorder %s69, %s83
      %p85 = scmp.eq.s32.totalorder %s17, 0
      %p86 = por %p84, %p85
      %s87 = ssub.s32 %s11, %s18
      %p88 = scmp.eq.s32.totalorder %s87, 0
      %s90 = sadd.s32 %s89, 1
      %s91 = scalar_select %p88, %s89, %s90
      %p94 = pneg %p88
      %p95 = scmp.eq.s32.totalorder %s11, 1
      %p96 = por %p94, %p95
      %p97 = scmp.ne.s32.totalorder %s89, %s92
      %p98 = scmp.eq.s32.totalorder %s11, 0
      %p99 = por %p97, %p98
      %p100 = scmp.ne.s32.totalorder %s89, %s92
      %p101 = scmp.eq.s32.totalorder %s16, 1
      %p102 = por %p100, %p101
      %p103 = scmp.ne.s32.totalorder %s92, %s93
      %p104 = scmp.eq.s32.totalorder %s16, 0
      %p105 = por %p103, %p104
      %p106 = scmp.ne.s32.totalorder %s92, %s93
      %p107 = scmp.eq.s32.totalorder %s17, 1
      %p108 = por %p106, %p107
      %p110 = scmp.ne.s32.totalorder %s93, %s109
      %p111 = scmp.eq.s32.totalorder %s17, 0
      %p112 = por %p110, %p111
      %p113 = scmp.le.s32.totalorder 1, %s11
      %p114 = scmp.lt.s32.totalorder %s11, 3
      %p115 = pnand %p113, %p114
      %p116 = pneg %p115
      // Predicated region
      $region9: #{conv_decoder_forward.7} parent=5 // pred_check
        _
      $region10: #{conv_decoder_forward.7} parent=5 // pred_check_branch
        %118 = sbr.rel (%p115) target = $region12
      $region11: #{conv_decoder_forward.7} parent=5 // pred_region
        %s119 = ssub.s32 %s11, 1
        // Predicated region
        $region13: #{conv_decoder_forward.7} parent=11 // pred_check
          %p120 = pneg %p58
        $region14: #{conv_decoder_forward.7} parent=11 // pred_check_branch
          %122 = sbr.rel (%p120) target = $region16
        $region15: #{conv_decoder_forward.7} parent=11 // pred_region
          %s124 = ssub.s32 2048, 2048
          %125 = vsyncadd [#allocation3], %s124
          %s126 = sshll.u32 [#allocation2], 4
          %s127 = int_to_ptr.vmem [resolvable:$true] %s126
          %132 = dma.hbm_to_vmem [thread:$0]  %s1, 2048, %s127, [#allocation3], 64, 64, 4
        $region16: #{conv_decoder_forward.7} parent=11 // pred_fallthru
          _
        // Predicated region
        $region17: #{conv_decoder_forward.7} parent=11 // pred_check
          %p133 = pneg %p79
        $region18: #{conv_decoder_forward.7} parent=11 // pred_check_branch
          %135 = sbr.rel (%p133) target = $region20
        $region19: #{conv_decoder_forward.7} parent=11 // pred_region
          %s137 = ssub.s32 16, 16
          %138 = vsyncadd [#allocation5], %s137
          %s140 = sshll.u32 [#allocation4], 4
          %s141 = int_to_ptr.vmem [resolvable:$true] %s140
          %143 = dma.hbm_to_vmem [thread:$0]  %s2, 16, %s141, [#allocation5]
        $region20: #{conv_decoder_forward.7} parent=11 // pred_fallthru
          _
      $region12: #{conv_decoder_forward.7} parent=5 // pred_fallthru
        _
      %p144 = scmp.lt.s32.totalorder %s11, 2
      // Predicated region
      $region21: #{conv_decoder_forward.7} parent=5 // pred_check
        %p145 = pneg %p144
      $region22: #{conv_decoder_forward.7} parent=5 // pred_check_branch
        %147 = sbr.rel (%p145) target = $region24
      $region23: #{conv_decoder_forward.7} parent=5 // pred_region
        // Predicated region
        $region25: #{conv_decoder_forward.7} parent=23 // pred_check
          %p148 = pneg %p31
        $region26: #{conv_decoder_forward.7} parent=23 // pred_check_branch
          %150 = sbr.rel (%p148) target = $region28
        $region27: #{conv_decoder_forward.7} parent=23 // pred_region
          %s151 = smul.u32 12, %s11
          %p152 = scmp.lt.s32.totalorder %s151, 23
          %s153 = scalar_select %p152, %s151, 23
          %s154 = smul.addr %s153, 2
          %s155 = smul.addr %s154, 4
          %s156 = scalar_lea.vmem %s0, %s155
          %s157 = smul.u32 12, %s11
        $region28: #{conv_decoder_forward.7} parent=23 // pred_fallthru
          _
      $region24: #{conv_decoder_forward.7} parent=5 // pred_fallthru
        _
      %p158 = scmp.le.s32.totalorder 1, %s11
      %p159 = scmp.lt.s32.totalorder %s11, 3
      %p160 = pnand %p158, %p159
      %p161 = pneg %p160
      // Predicated region
      $region29: #{conv_decoder_forward.7} parent=5 // pred_check
        _
      $region30: #{conv_decoder_forward.7} parent=5 // pred_check_branch
        %163 = sbr.rel (%p160) target = $region32
      $region31: #{conv_decoder_forward.7} parent=5 // pred_region
        %s164 = ssub.s32 %s11, 1
        // Predicated region
        $region33: #{conv_decoder_forward.7} parent=31 // pred_check
          %p165 = pneg %p58
        $region34: #{conv_decoder_forward.7} parent=31 // pred_check_branch
          %167 = sbr.rel (%p165) target = $region36
        $region35: #{conv_decoder_forward.7} parent=31 // pred_region
          %168 = dma.done [#allocation3], 2048
        $region36: #{conv_decoder_forward.7} parent=31 // pred_fallthru
          _
        // Predicated region
        $region37: #{conv_decoder_forward.7} parent=31 // pred_check
          %p169 = pneg %p79
        $region38: #{conv_decoder_forward.7} parent=31 // pred_check_branch
          %171 = sbr.rel (%p169) target = $region40
        $region39: #{conv_decoder_forward.7} parent=31 // pred_region
          %172 = dma.done [#allocation5], 16
        $region40: #{conv_decoder_forward.7} parent=31 // pred_fallthru
          _
        %s173 = smul.u32 12, %s16
        %p174 = scmp.lt.s32.totalorder %s173, 23
        %s175 = scalar_select %p174, %s173, 23
        %s176 = smul.addr %s175, 2
        %s177 = smul.addr %s176, 4
        %s178 = scalar_lea.vmem %s0, %s177
        %p179 = pneg %p37
        %p180 = pneg %p34
        %p181 = pneg %p58
        %p182 = pneg %p55
        %p183 = pneg %p79
        %p184 = pneg %p76
        %p185 = pneg %p105
        %p186 = pneg %p102
        %s187 = smul.u32 12, %s16
        %p188 = scmp.lt.s32.totalorder %s187, 23
        %s189 = scalar_select %p188, %s187, 23
        %s190 = smul.addr %s189, 4
        %s191 = scalar_lea.vmem %s3, %s190
        %s192 = smul.u32 12, %s16
        %p193 = scmp.lt.s32.totalorder %s192, 23
        %s194 = scalar_select %p193, %s192, 23
        %s195 = smul.addr %s194, 2
        %s196 = smul.addr %s195, 4
        %s197 = scalar_lea.vmem %s0, %s196
        %s198 = smul.u32 12, %s16
        %s199 = smul.u32 12, %s16
        %p200 = scmp.lt.s32.totalorder %s199, 23
        %s201 = scalar_select %p200, %s199, 23
        %s202 = smul.addr %s201, 4
        %s203 = scalar_lea.vmem %s3, %s202
        %s204 = smul.u32 12, %s16
        %v206 = vld [vmem:[%s197] sm:$0xff]
        %v207 = vld [vmem:[%s197 + $0x8] sm:$0xff]
        %v208 = vld [vmem:[%s197 + $0x10] sm:$0xff]
        %v209 = vld [vmem:[%s197 + $0x18] sm:$0xff]
        %v210 = vld [vmem:[%s197 + $0x20] sm:$0xff]
        %v211 = vld [vmem:[%s197 + $0x28] sm:$0xff]
        %v212 = vld [vmem:[%s197 + $0x30] sm:$0xff]
        %v213 = vld [vmem:[%s197 + $0x38] sm:$0xff]
        %v214 = vld [vmem:[%s197 + $0x40] sm:$0xff]
        %v215 = vld [vmem:[%s197 + $0x48] sm:$0xff]
        %v216 = vld [vmem:[%s197 + $0x50] sm:$0xff]
        %v217 = vld [vmem:[%s197 + $0x58] sm:$0xff]
        %v218 = vld [vmem:[#allocation2] sm:$0xf]
        %v219 = vld [vmem:[#allocation2 + $0x4] sm:$0xf]
        %v220 = vld [vmem:[#allocation2 + $0x8] sm:$0xf]
        %v221 = vld [vmem:[#allocation2 + $0xc] sm:$0xf]
        %v222 = vld [vmem:[#allocation2 + $0x10] sm:$0xf]
        %v223 = vld [vmem:[#allocation2 + $0x14] sm:$0xf]
        %v224 = vld [vmem:[#allocation2 + $0x18] sm:$0xf]
        %v225 = vld [vmem:[#allocation2 + $0x1c] sm:$0xf]
        %v226 = vld [vmem:[#allocation2 + $0x20] sm:$0xf]
        %v227 = vld [vmem:[#allocation2 + $0x24] sm:$0xf]
        %v228 = vld [vmem:[#allocation2 + $0x28] sm:$0xf]
        %v229 = vld [vmem:[#allocation2 + $0x2c] sm:$0xf]
        %v230 = vld [vmem:[#allocation2 + $0x30] sm:$0xf]
        %v231 = vld [vmem:[#allocation2 + $0x34] sm:$0xf]
        %v232 = vld [vmem:[#allocation2 + $0x38] sm:$0xf]
        %v233 = vld [vmem:[#allocation2 + $0x3c] sm:$0xf]
        %v234 = vld [vmem:[#allocation2 + $0x40] sm:$0xf]
        %v235 = vld [vmem:[#allocation2 + $0x44] sm:$0xf]
        %v236 = vld [vmem:[#allocation2 + $0x48] sm:$0xf]
        %v237 = vld [vmem:[#allocation2 + $0x4c] sm:$0xf]
        %v238 = vld [vmem:[#allocation2 + $0x50] sm:$0xf]
        %v239 = vld [vmem:[#allocation2 + $0x54] sm:$0xf]
        %v240 = vld [vmem:[#allocation2 + $0x58] sm:$0xf]
        %v241 = vld [vmem:[#allocation2 + $0x5c] sm:$0xf]
        %v242 = vld [vmem:[#allocation2 + $0x60] sm:$0xf]
        %v243 = vld [vmem:[#allocation2 + $0x64] sm:$0xf]
        %v244 = vld [vmem:[#allocation2 + $0x68] sm:$0xf]
        %v245 = vld [vmem:[#allocation2 + $0x6c] sm:$0xf]
        %v246 = vld [vmem:[#allocation2 + $0x70] sm:$0xf]
        %v247 = vld [vmem:[#allocation2 + $0x74] sm:$0xf]
        %v248 = vld [vmem:[#allocation2 + $0x78] sm:$0xf]
        %v249 = vld [vmem:[#allocation2 + $0x7c] sm:$0xf]
        %v250 = vld [vmem:[#allocation4] sm:$0x1]
        %v252 = vlaneseq
        %v253 = vshrl.u32 %v252, 7
        %v254 = vsub.s32 0, %v253
        %v255 = vrot.slane %v250, %v254
        %v269 = vunpack.c.l.b16 %v206
        %v270 = vunpack.c.h.b16 %v206
        %v271 = vunpack.c.l.b16 %v207
        %v272 = vunpack.c.h.b16 %v207
        %v273 = vunpack.c.l.b16 %v208
        %v274 = vunpack.c.h.b16 %v208
        %v275 = vunpack.c.l.b16 %v209
        %v276 = vunpack.c.h.b16 %v209
        %v277 = vunpack.c.l.b16 %v210
        %v278 = vunpack.c.h.b16 %v210
        %v279 = vunpack.c.l.b16 %v211
        %v280 = vunpack.c.h.b16 %v211
        %v281 = vunpack.c.l.b16 %v212
        %v282 = vunpack.c.h.b16 %v212
        %v283 = vunpack.c.l.b16 %v213
        %v284 = vunpack.c.h.b16 %v213
        %v285 = vunpack.c.l.b16 %v214
        %v286 = vunpack.c.h.b16 %v214
        %v287 = vunpack.c.l.b16 %v215
        %v288 = vunpack.c.h.b16 %v215
        %v289 = vunpack.c.l.b16 %v216
        %v290 = vunpack.c.h.b16 %v216
        %v291 = vunpack.c.l.b16 %v217
        %v292 = vunpack.c.h.b16 %v217
        %v293 = vpack.c.b16 %v271, %v269
        %v294 = vpack.c.b16 %v272, %v270
        %v295 = vpack.c.b16 %v275, %v273
        %v296 = vpack.c.b16 %v276, %v274
        %v297 = vpack.c.b16 %v279, %v277
        %v298 = vpack.c.b16 %v280, %v278
        %v299 = vpack.c.b16 %v283, %v281
        %v300 = vpack.c.b16 %v284, %v282
        %v301 = vpack.c.b16 %v287, %v285
        %v302 = vpack.c.b16 %v288, %v286
        %v303 = vpack.c.b16 %v291, %v289
        %v304 = vpack.c.b16 %v292, %v290
        %v349 = vunpack.c.l.b16 %v218
        %v350 = vunpack.c.l.b16 %v219
        %v351 = vunpack.c.l.b16 %v220
        %v352 = vunpack.c.l.b16 %v221
        %v353 = vunpack.c.l.b16 %v222
        %v354 = vunpack.c.l.b16 %v223
        %v355 = vunpack.c.l.b16 %v224
        %v356 = vunpack.c.l.b16 %v225
        %v357 = vunpack.c.l.b16 %v226
        %v358 = vunpack.c.l.b16 %v227
        %v359 = vunpack.c.l.b16 %v228
        %v360 = vunpack.c.l.b16 %v229
        %v361 = vunpack.c.l.b16 %v230
        %v362 = vunpack.c.l.b16 %v231
        %v363 = vunpack.c.l.b16 %v232
        %v364 = vunpack.c.l.b16 %v233
        %v365 = vunpack.c.l.b16 %v234
        %v366 = vunpack.c.l.b16 %v235
        %v367 = vunpack.c.l.b16 %v236
        %v368 = vunpack.c.l.b16 %v237
        %v369 = vunpack.c.l.b16 %v238
        %v370 = vunpack.c.l.b16 %v239
        %v371 = vunpack.c.l.b16 %v240
        %v372 = vunpack.c.l.b16 %v241
        %v373 = vunpack.c.l.b16 %v242
        %v374 = vunpack.c.l.b16 %v243
        %v375 = vunpack.c.l.b16 %v244
        %v376 = vunpack.c.l.b16 %v245
        %v377 = vunpack.c.l.b16 %v246
        %v378 = vunpack.c.l.b16 %v247
        %v379 = vunpack.c.l.b16 %v248
        %v380 = vunpack.c.l.b16 %v249
        %v381 = vpack.c.b16 %v350, %v349
        %v382 = vpack.c.b16 %v352, %v351
        %v383 = vpack.c.b16 %v354, %v353
        %v384 = vpack.c.b16 %v356, %v355
        %v385 = vpack.c.b16 %v358, %v357
        %v386 = vpack.c.b16 %v360, %v359
        %v387 = vpack.c.b16 %v362, %v361
        %v388 = vpack.c.b16 %v364, %v363
        %v389 = vpack.c.b16 %v366, %v365
        %v390 = vpack.c.b16 %v368, %v367
        %v391 = vpack.c.b16 %v370, %v369
        %v392 = vpack.c.b16 %v372, %v371
        %v393 = vpack.c.b16 %v374, %v373
        %v394 = vpack.c.b16 %v376, %v375
        %v395 = vpack.c.b16 %v378, %v377
        %v396 = vpack.c.b16 %v380, %v379
        %413 = vmatprep.subr.bf16.mxu0 0
        %414 = vmatpush1.bf16.msra.mxu0 %v388
        %415 = vmatprep.subr.bf16.mxu0 0
        %416 = vmatpush1.bf16.msra.mxu0 %v387
        %417 = vmatprep.subr.bf16.mxu0 0
        %418 = vmatpush1.bf16.msra.mxu0 %v386
        %419 = vmatprep.subr.bf16.mxu0 0
        %420 = vmatpush1.bf16.msra.mxu0 %v385
        %421 = vmatprep.subr.bf16.mxu0 0
        %422 = vmatpush1.bf16.msra.mxu0 %v384
        %423 = vmatprep.subr.bf16.mxu0 0
        %424 = vmatpush1.bf16.msra.mxu0 %v383
        %425 = vmatprep.subr.bf16.mxu0 0
        %426 = vmatpush1.bf16.msra.mxu0 %v382
        %427 = vmatprep.subr.bf16.mxu0 0
        %428 = vmatpush1.bf16.msra.mxu0 %v381
        %429 = vmatprep.subr.bf16.mxu0 0
        %430 = vmatpush2.bf16.msra.mxu0 %v396
        %431 = vmatprep.subr.bf16.mxu0 0
        %432 = vmatpush2.bf16.msra.mxu0 %v395
        %433 = vmatprep.subr.bf16.mxu0 0
        %434 = vmatpush2.bf16.msra.mxu0 %v394
        %435 = vmatprep.subr.bf16.mxu0 0
        %436 = vmatpush2.bf16.msra.mxu0 %v393
        %437 = vmatprep.subr.bf16.mxu0 0
        %438 = vmatpush2.bf16.msra.mxu0 %v392
        %439 = vmatprep.subr.bf16.mxu0 0
        %440 = vmatpush2.bf16.msra.mxu0 %v391
        %441 = vmatprep.subr.bf16.mxu0 0
        %442 = vmatpush2.bf16.msra.mxu0 %v390
        %443 = vmatprep.subr.bf16.mxu0 0
        %444 = vmatpush2.bf16.msra.mxu0 %v389
        %445 = vmatprep.mubr.bf16.mxu0 %v294
        %446 = vmatmul.mubr.bf16.gmra.mxu0 %v293
        %v447 = vpop.f32.mrf.mxu0
        %v448 = vadd.f32 %v255, %v447
        %v449 = vpop.f32.mrf.mxu0
        %v450 = vpop.f32.mrf.mxu0
        %v451 = vadd.f32 %v255, %v450
        %v452 = vpop.f32.mrf.mxu0
        %453 = vmatprep.mubr.bf16.mxu0 %v296
        %454 = vmatmul.mubr.bf16.gmra.mxu0 %v295
        %v455 = vpop.f32.mrf.mxu0
        %v456 = vadd.f32 %v255, %v455
        %v457 = vpop.f32.mrf.mxu0
        %v458 = vpop.f32.mrf.mxu0
        %v459 = vadd.f32 %v255, %v458
        %v460 = vpop.f32.mrf.mxu0
        %461 = vmatprep.mubr.bf16.mxu0 %v298
        %462 = vmatmul.mubr.bf16.gmra.mxu0 %v297
        %v463 = vpop.f32.mrf.mxu0
        %v464 = vadd.f32 %v255, %v463
        %v465 = vpop.f32.mrf.mxu0
        %v466 = vpop.f32.mrf.mxu0
        %v467 = vadd.f32 %v255, %v466
        %v468 = vpop.f32.mrf.mxu0
        %469 = vmatprep.mubr.bf16.mxu0 %v300
        %470 = vmatmul.mubr.bf16.gmra.mxu0 %v299
        %v471 = vpop.f32.mrf.mxu0
        %v472 = vadd.f32 %v255, %v471
        %v473 = vpop.f32.mrf.mxu0
        %v474 = vpop.f32.mrf.mxu0
        %v475 = vadd.f32 %v255, %v474
        %v476 = vpop.f32.mrf.mxu0
        %477 = vmatprep.mubr.bf16.mxu0 %v302
        %478 = vmatmul.mubr.bf16.gmra.mxu0 %v301
        %v479 = vpop.f32.mrf.mxu0
        %v480 = vadd.f32 %v255, %v479
        %v481 = vpop.f32.mrf.mxu0
        %v482 = vpop.f32.mrf.mxu0
        %v483 = vadd.f32 %v255, %v482
        %v484 = vpop.f32.mrf.mxu0
        %485 = vmatprep.mubr.bf16.mxu0 %v304
        %486 = vmatmul.mubr.bf16.gmra.mxu0 %v303
        %v487 = vpop.f32.mrf.mxu0
        %v488 = vadd.f32 %v255, %v487
        %v489 = vpop.f32.mrf.mxu0
        %v490 = vpop.f32.mrf.mxu0
        %v491 = vadd.f32 %v255, %v490
        %v492 = vpop.f32.mrf.mxu0
        %493 = vdwg.mxu0
        %v494 = vmax.f32 %v448, 0.0
        %v495 = vmax.f32 %v451, 0.0
        %v496 = vmax.f32 %v456, 0.0
        %v497 = vmax.f32 %v459, 0.0
        %v498 = vmax.f32 %v464, 0.0
        %v499 = vmax.f32 %v467, 0.0
        %v500 = vmax.f32 %v472, 0.0
        %v501 = vmax.f32 %v475, 0.0
        %v502 = vmax.f32 %v480, 0.0
        %v503 = vmax.f32 %v483, 0.0
        %v504 = vmax.f32 %v488, 0.0
        %v505 = vmax.f32 %v491, 0.0
        %v506 = vpack.c.bf16 %v495, %v494
        %v507 = vpack.c.bf16 %v497, %v496
        %v508 = vpack.c.bf16 %v499, %v498
        %v509 = vpack.c.bf16 %v501, %v500
        %v510 = vpack.c.bf16 %v503, %v502
        %v511 = vpack.c.bf16 %v505, %v504
        %v518 = vunpack.c.l.b16 %v506
        %v519 = vunpack.c.h.b16 %v506
        %v520 = vunpack.c.l.b16 %v507
        %v521 = vunpack.c.h.b16 %v507
        %v522 = vunpack.c.l.b16 %v508
        %v523 = vunpack.c.h.b16 %v508
        %v524 = vunpack.c.l.b16 %v509
        %v525 = vunpack.c.h.b16 %v509
        %v526 = vunpack.c.l.b16 %v510
        %v527 = vunpack.c.h.b16 %v510
        %v528 = vunpack.c.l.b16 %v511
        %v529 = vunpack.c.h.b16 %v511
        %v530 = vpack.c.b16 %v518, %v518
        %v531 = vpack.c.b16 %v519, %v519
        %v532 = vpack.c.b16 %v520, %v520
        %v533 = vpack.c.b16 %v521, %v521
        %v534 = vpack.c.b16 %v522, %v522
        %v535 = vpack.c.b16 %v523, %v523
        %v536 = vpack.c.b16 %v524, %v524
        %v537 = vpack.c.b16 %v525, %v525
        %v538 = vpack.c.b16 %v526, %v526
        %v539 = vpack.c.b16 %v527, %v527
        %v540 = vpack.c.b16 %v528, %v528
        %v541 = vpack.c.b16 %v529, %v529
        %554 = vst [vmem:[%s203] sm:$0xf] %v530
        %555 = vst [vmem:[%s203 + $0x4] sm:$0xf] %v531
        %556 = vst [vmem:[%s203 + $0x8] sm:$0xf] %v532
        %557 = vst [vmem:[%s203 + $0xc] sm:$0xf] %v533
        %558 = vst [vmem:[%s203 + $0x10] sm:$0xf] %v534
        %559 = vst [vmem:[%s203 + $0x14] sm:$0xf] %v535
        %560 = vst [vmem:[%s203 + $0x18] sm:$0xf] %v536
        %561 = vst [vmem:[%s203 + $0x1c] sm:$0xf] %v537
        %562 = vst [vmem:[%s203 + $0x20] sm:$0xf] %v538
        %563 = vst [vmem:[%s203 + $0x24] sm:$0xf] %v539
        %564 = vst [vmem:[%s203 + $0x28] sm:$0xf] %v540
        %565 = vst [vmem:[%s203 + $0x2c] sm:$0xf] %v541
        %s566 = smul.u32 12, %s16
        %p567 = scmp.lt.s32.totalorder %s566, 23
        %s568 = scalar_select %p567, %s566, 23
        %s569 = smul.addr %s568, 4
        %s570 = scalar_lea.vmem %s3, %s569
        // Predicated region
        $region41: #{conv_decoder_forward.7} parent=31 // pred_check
          %p571 = pneg %p102
        $region42: #{conv_decoder_forward.7} parent=31 // pred_check_branch
          %573 = sbr.rel (%p571) target = $region44
        $region43: #{conv_decoder_forward.7} parent=31 // pred_region
          %s574 = smul.u32 12, %s16
        $region44: #{conv_decoder_forward.7} parent=31 // pred_fallthru
          _
      $region32: #{conv_decoder_forward.7} parent=5 // pred_fallthru
        _
      %p575 = scmp.le.s32.totalorder 2, %s11
      // Predicated region
      $region45: #{conv_decoder_forward.7} parent=5 // pred_check
        %p576 = pneg %p575
      $region46: #{conv_decoder_forward.7} parent=5 // pred_check_branch
        %578 = sbr.rel (%p576) target = $region48
      $region47: #{conv_decoder_forward.7} parent=5 // pred_region
        %s579 = ssub.s32 %s11, 2
        // Predicated region
        $region49: #{conv_decoder_forward.7} parent=47 // pred_check
          %p580 = pneg %p108
        $region50: #{conv_decoder_forward.7} parent=47 // pred_check_branch
          %582 = sbr.rel (%p580) target = $region52
        $region51: #{conv_decoder_forward.7} parent=47 // pred_region
          %s583 = smul.u32 12, %s17
          %p584 = scmp.lt.s32.totalorder %s583, 23
          %s585 = scalar_select %p584, %s583, 23
          %s586 = smul.addr %s585, 4
          %s587 = scalar_lea.vmem %s3, %s586
        $region52: #{conv_decoder_forward.7} parent=47 // pred_fallthru
          _
      $region48: #{conv_decoder_forward.7} parent=5 // pred_fallthru
        _
    $region6: #{conv_decoder_forward.7} parent=1 // loop_footer
      %s15 = sadd.s32 1, %s11
    $region7: #{conv_decoder_forward.7} parent=1 // loop_footer_branch
      %10 = sbr.rel target = $region3
    $region8: #{conv_decoder_forward.7} parent=1 // loop_exit
      _
    %588 = vsyncpa [#allocation3], 1
    %s589 = scalar_lea.sflag [#allocation3], 1
    %590 = vsyncpa %s589, 1
    %591 = vsyncpa [#allocation5], 1

// kernel: conv_decoder_forward.8
$region0: #{conv_decoder_forward.8}
  #allocation0 [shape = 'u32[]', space=smem, size = 0x4, offset = 0x4, fixed_abs, tag = 'smem constant byte address 0x4 - core index']
  #allocation1 [shape = 'u32[144,128]{1,0:T(1,128)}', space=vmem, size = 0x12000, scoped, tag = 'internal scratch']
  %s0 = inlined_call_operand.vmem [shape: bf16[608,128], index: 0, kind: input, shape index: {}]
  %s1 = inlined_call_operand.vmem [shape: bf16[128,128], index: 1, kind: input, shape index: {}]
  %s2 = inlined_call_operand.vmem [shape: f32[1,128], index: 2, kind: input, shape index: {}]
  %s3 = inlined_call_operand.vmem [shape: bf16[608,128], index: 3, kind: output, shape index: {}]
  %s4 = sld [smem:[#allocation0]]
  $region45: #{conv_decoder_forward.8} parent=0
    _
  %s6 = ssub.s32 1, %s4
  %s7 = scalar_select 0, %s6, %s4
  loop: start=0, step=1, limit=4
  $region2: #{conv_decoder_forward.8} parent=0 // loop_pre_header
    _
  $region3: #{conv_decoder_forward.8} parent=0 // loop_header
    %s9 = sphi 0, %s13
    %p10 = scmp.ge.s32.totalorder %s9, 4
    %s19 = sphi 0, %s21
    %s22 = sphi 0, %s19
    %s23 = sphi 0, %s22
    %s39 = sphi 0, %s23
    %s43 = sphi 0, %s43
    %s45 = sphi 0, %s43
    %s46 = sphi 0, %s45
    %s60 = sphi 0, %s46
    %s64 = sphi 0, %s64
    %s66 = sphi 0, %s64
    %s67 = sphi 0, %s66
    %s81 = sphi 0, %s67
    %s87 = sphi 0, %s89
    %s90 = sphi 0, %s87
    %s91 = sphi 0, %s90
    %s107 = sphi 0, %s91
  $region4: #{conv_decoder_forward.8} parent=0 // loop_header_branch
    %12 = sbr.rel (%p10) target = $region8
  $region5: #{conv_decoder_forward.8} parent=0 // loop_body
    %s14 = ssub.s32 %s9, 1
    %s15 = ssub.s32 %s9, 2
    %s16 = sadd.s32 %s9, 1
    %s17 = ssub.s32 %s9, %s16
    %p18 = scmp.eq.s32.totalorder %s17, 0
    %s20 = sadd.s32 %s19, 1
    %s21 = scalar_select %p18, %s19, %s20
    %p24 = pneg %p18
    %p25 = scmp.eq.s32.totalorder %s9, 1
    %p26 = por %p24, %p25
    %p27 = scmp.ne.s32.totalorder %s19, %s22
    %p28 = scmp.eq.s32.totalorder %s9, 0
    %p29 = por %p27, %p28
    %p30 = scmp.ne.s32.totalorder %s19, %s22
    %p31 = scmp.eq.s32.totalorder %s14, 1
    %p32 = por %p30, %p31
    %p33 = scmp.ne.s32.totalorder %s22, %s23
    %p34 = scmp.eq.s32.totalorder %s14, 0
    %p35 = por %p33, %p34
    %p36 = scmp.ne.s32.totalorder %s22, %s23
    %p37 = scmp.eq.s32.totalorder %s15, 1
    %p38 = por %p36, %p37
    %p40 = scmp.ne.s32.totalorder %s23, %s39
    %p41 = scmp.eq.s32.totalorder %s15, 0
    %p42 = por %p40, %p41
    %s44 = sadd.s32 %s43, 1
    %p47 = scmp.eq.s32.totalorder %s9, 1
    %p48 = scmp.ne.s32.totalorder %s43, %s45
    %p49 = scmp.eq.s32.totalorder %s9, 0
    %p50 = por %p48, %p49
    %p51 = scmp.ne.s32.totalorder %s43, %s45
    %p52 = scmp.eq.s32.totalorder %s14, 1
    %p53 = por %p51, %p52
    %p54 = scmp.ne.s32.totalorder %s45, %s46
    %p55 = scmp.eq.s32.totalorder %s14, 0
    %p56 = por %p54, %p55
    %p57 = scmp.ne.s32.totalorder %s45, %s46
    %p58 = scmp.eq.s32.totalorder %s15, 1
    %p59 = por %p57, %p58
    %p61 = scmp.ne.s32.totalorder %s46, %s60
    %p62 = scmp.eq.s32.totalorder %s15, 0
    %p63 = por %p61, %p62
    %s65 = sadd.s32 %s64, 1
    %p68 = scmp.eq.s32.totalorder %s9, 1
    %p69 = scmp.ne.s32.totalorder %s64, %s66
    %p70 = scmp.eq.s32.totalorder %s9, 0
    %p71 = por %p69, %p70
    %p72 = scmp.ne.s32.totalorder %s64, %s66
    %p73 = scmp.eq.s32.totalorder %s14, 1
    %p74 = por %p72, %p73
    %p75 = scmp.ne.s32.totalorder %s66, %s67
    %p76 = scmp.eq.s32.totalorder %s14, 0
    %p77 = por %p75, %p76
    %p78 = scmp.ne.s32.totalorder %s66, %s67
    %p79 = scmp.eq.s32.totalorder %s15, 1
    %p80 = por %p78, %p79
    %p82 = scmp.ne.s32.totalorder %s67, %s81
    %p83 = scmp.eq.s32.totalorder %s15, 0
    %p84 = por %p82, %p83
    %s85 = ssub.s32 %s9, %s16
    %p86 = scmp.eq.s32.totalorder %s85, 0
    %s88 = sadd.s32 %s87, 1
    %s89 = scalar_select %p86, %s87, %s88
    %p92 = pneg %p86
    %p93 = scmp.eq.s32.totalorder %s9, 1
    %p94 = por %p92, %p93
    %p95 = scmp.ne.s32.totalorder %s87, %s90
    %p96 = scmp.eq.s32.totalorder %s9, 0
    %p97 = por %p95, %p96
    %p98 = scmp.ne.s32.totalorder %s87, %s90
    %p99 = scmp.eq.s32.totalorder %s14, 1
    %p100 = por %p98, %p99
    %p101 = scmp.ne.s32.totalorder %s90, %s91
    %p102 = scmp.eq.s32.totalorder %s14, 0
    %p103 = por %p101, %p102
    %p104 = scmp.ne.s32.totalorder %s90, %s91
    %p105 = scmp.eq.s32.totalorder %s15, 1
    %p106 = por %p104, %p105
    %p108 = scmp.ne.s32.totalorder %s91, %s107
    %p109 = scmp.eq.s32.totalorder %s15, 0
    %p110 = por %p108, %p109
    %p111 = scmp.le.s32.totalorder 1, %s9
    %p112 = scmp.lt.s32.totalorder %s9, 3
    %p113 = pnand %p111, %p112
    %p114 = pneg %p113
    // Predicated region
    $region9: #{conv_decoder_forward.8} parent=5 // pred_check
      _
    $region10: #{conv_decoder_forward.8} parent=5 // pred_check_branch
      %116 = sbr.rel (%p113) target = $region12
    $region11: #{conv_decoder_forward.8} parent=5 // pred_region
      %s117 = ssub.s32 %s9, 1
      // Predicated region
      $region13: #{conv_decoder_forward.8} parent=11 // pred_check
        %p118 = pneg %p56
      $region14: #{conv_decoder_forward.8} parent=11 // pred_check_branch
        %120 = sbr.rel (%p118) target = $region16
      $region15: #{conv_decoder_forward.8} parent=11 // pred_region
        _
      $region16: #{conv_decoder_forward.8} parent=11 // pred_fallthru
        _
      // Predicated region
      $region17: #{conv_decoder_forward.8} parent=11 // pred_check
        %p121 = pneg %p77
      $region18: #{conv_decoder_forward.8} parent=11 // pred_check_branch
        %123 = sbr.rel (%p121) target = $region20
      $region19: #{conv_decoder_forward.8} parent=11 // pred_region
        _
      $region20: #{conv_decoder_forward.8} parent=11 // pred_fallthru
        _
    $region12: #{conv_decoder_forward.8} parent=5 // pred_fallthru
      _
    %p124 = scmp.lt.s32.totalorder %s9, 2
    // Predicated region
    $region21: #{conv_decoder_forward.8} parent=5 // pred_check
      %p125 = pneg %p124
    $region22: #{conv_decoder_forward.8} parent=5 // pred_check_branch
      %127 = sbr.rel (%p125) target = $region24
    $region23: #{conv_decoder_forward.8} parent=5 // pred_region
      // Predicated region
      $region25: #{conv_decoder_forward.8} parent=23 // pred_check
        %p128 = pneg %p29
      $region26: #{conv_decoder_forward.8} parent=23 // pred_check_branch
        %130 = sbr.rel (%p128) target = $region28
      $region27: #{conv_decoder_forward.8} parent=23 // pred_region
        %s131 = smul.u32 38, %s9
        %p132 = scmp.lt.s32.totalorder %s131, 75
        %s133 = scalar_select %p132, %s131, 75
        %s134 = smul.addr %s133, 4
        %s135 = scalar_lea.vmem %s0, %s134
        %s136 = smul.u32 38, %s9
      $region28: #{conv_decoder_forward.8} parent=23 // pred_fallthru
        _
    $region24: #{conv_decoder_forward.8} parent=5 // pred_fallthru
      _
    %p137 = scmp.le.s32.totalorder 1, %s9
    %p138 = scmp.lt.s32.totalorder %s9, 3
    %p139 = pnand %p137, %p138
    %p140 = pneg %p139
    // Predicated region
    $region29: #{conv_decoder_forward.8} parent=5 // pred_check
      _
    $region30: #{conv_decoder_forward.8} parent=5 // pred_check_branch
      %142 = sbr.rel (%p139) target = $region32
    $region31: #{conv_decoder_forward.8} parent=5 // pred_region
      %s143 = ssub.s32 %s9, 1
      %s144 = smul.u32 38, %s14
      %p145 = scmp.lt.s32.totalorder %s144, 75
      %s146 = scalar_select %p145, %s144, 75
      %s147 = smul.addr %s146, 4
      %s148 = scalar_lea.vmem %s0, %s147
      %p149 = pneg %p35
      %p150 = pneg %p32
      %p151 = pneg %p56
      %p152 = pneg %p53
      %p153 = pneg %p77
      %p154 = pneg %p74
      %p155 = pneg %p103
      %p156 = pneg %p100
      %s157 = smul.u32 38, %s14
      %p158 = scmp.lt.s32.totalorder %s157, 75
      %s159 = scalar_select %p158, %s157, 75
      %s160 = smul.addr %s159, 4
      %s161 = scalar_lea.vmem %s3, %s160
      %s162 = smul.u32 38, %s14
      %p163 = scmp.lt.s32.totalorder %s162, 75
      %s164 = scalar_select %p163, %s162, 75
      %s165 = smul.addr %s164, 4
      %s166 = scalar_lea.vmem %s0, %s165
      %s167 = smul.u32 38, %s14
      %s168 = smul.u32 38, %s14
      %p169 = scmp.lt.s32.totalorder %s168, 75
      %s170 = scalar_select %p169, %s168, 75
      %s171 = smul.addr %s170, 4
      %s172 = scalar_lea.vmem %s3, %s171
      %s173 = smul.u32 38, %s14
      %v175 = vld [vmem:[%s166] sm:$0xf]
      %v176 = vld [vmem:[%s166 + $0x4] sm:$0xf]
      %v177 = vld [vmem:[%s166 + $0x8] sm:$0xf]
      %v178 = vld [vmem:[%s166 + $0xc] sm:$0xf]
      %v179 = vld [vmem:[%s166 + $0x10] sm:$0xf]
      %v180 = vld [vmem:[%s166 + $0x14] sm:$0xf]
      %v181 = vld [vmem:[%s166 + $0x18] sm:$0xf]
      %v182 = vld [vmem:[%s166 + $0x1c] sm:$0xf]
      %v183 = vld [vmem:[%s166 + $0x20] sm:$0xf]
      %v184 = vld [vmem:[%s166 + $0x24] sm:$0xf]
      %v185 = vld [vmem:[%s166 + $0x28] sm:$0xf]
      %v186 = vld [vmem:[%s166 + $0x2c] sm:$0xf]
      %v187 = vld [vmem:[%s166 + $0x30] sm:$0xf]
      %v188 = vld [vmem:[%s166 + $0x34] sm:$0xf]
      %v189 = vld [vmem:[%s166 + $0x38] sm:$0xf]
      %v190 = vld [vmem:[%s166 + $0x3c] sm:$0xf]
      %v191 = vld [vmem:[%s166 + $0x40] sm:$0xf]
      %v192 = vld [vmem:[%s166 + $0x44] sm:$0xf]
      %v193 = vld [vmem:[%s166 + $0x48] sm:$0xf]
      %v194 = vld [vmem:[%s166 + $0x4c] sm:$0xf]
      %v195 = vld [vmem:[%s166 + $0x50] sm:$0xf]
      %v196 = vld [vmem:[%s166 + $0x54] sm:$0xf]
      %v197 = vld [vmem:[%s166 + $0x58] sm:$0xf]
      %v198 = vld [vmem:[%s166 + $0x5c] sm:$0xf]
      %v199 = vld [vmem:[%s166 + $0x60] sm:$0xf]
      %v200 = vld [vmem:[%s166 + $0x64] sm:$0xf]
      %v201 = vld [vmem:[%s166 + $0x68] sm:$0xf]
      %v202 = vld [vmem:[%s166 + $0x6c] sm:$0xf]
      %v203 = vld [vmem:[%s166 + $0x70] sm:$0xf]
      %v204 = vld [vmem:[%s166 + $0x74] sm:$0xf]
      %v205 = vld [vmem:[%s166 + $0x78] sm:$0xf]
      %v206 = vld [vmem:[%s166 + $0x7c] sm:$0xf]
      %v207 = vld [vmem:[%s166 + $0x80] sm:$0xf]
      %v208 = vld [vmem:[%s166 + $0x84] sm:$0xf]
      %v209 = vld [vmem:[%s166 + $0x88] sm:$0xf]
      %v210 = vld [vmem:[%s166 + $0x8c] sm:$0xf]
      %v211 = vld [vmem:[%s166 + $0x90] sm:$0xf]
      %v212 = vld [vmem:[%s166 + $0x94] sm:$0xf]
      %v213 = vld [vmem:[%s1] sm:$0xf]
      %v214 = vld [vmem:[%s1 + $0x4] sm:$0xf]
      %v215 = vld [vmem:[%s1 + $0x8] sm:$0xf]
      %v216 = vld [vmem:[%s1 + $0xc] sm:$0xf]
      %v217 = vld [vmem:[%s1 + $0x10] sm:$0xf]
      %v218 = vld [vmem:[%s1 + $0x14] sm:$0xf]
      %v219 = vld [vmem:[%s1 + $0x18] sm:$0xf]
      %v220 = vld [vmem:[%s1 + $0x1c] sm:$0xf]
      %v221 = vld [vmem:[%s1 + $0x20] sm:$0xf]
      %v222 = vld [vmem:[%s1 + $0x24] sm:$0xf]
      %v223 = vld [vmem:[%s1 + $0x28] sm:$0xf]
      %v224 = vld [vmem:[%s1 + $0x2c] sm:$0xf]
      %v225 = vld [vmem:[%s1 + $0x30] sm:$0xf]
      %v226 = vld [vmem:[%s1 + $0x34] sm:$0xf]
      %v227 = vld [vmem:[%s1 + $0x38] sm:$0xf]
      %v228 = vld [vmem:[%s1 + $0x3c] sm:$0xf]
      %v229 = vld [vmem:[%s2] sm:$0x1]
      %v231 = vlaneseq
      %v232 = vshrl.u32 %v231, 7
      %v233 = vsub.s32 0, %v232
      %v234 = vrot.slane %v229, %v233
      %v274 = vunpack.c.l.b16 %v175
      %v275 = vunpack.c.l.b16 %v176
      %v276 = vunpack.c.l.b16 %v177
      %v277 = vunpack.c.l.b16 %v178
      %v278 = vunpack.c.l.b16 %v179
      %v279 = vunpack.c.l.b16 %v180
      %v280 = vunpack.c.l.b16 %v181
      %v281 = vunpack.c.l.b16 %v182
      %v282 = vunpack.c.l.b16 %v183
      %v283 = vunpack.c.l.b16 %v184
      %v284 = vunpack.c.l.b16 %v185
      %v285 = vunpack.c.l.b16 %v186
      %v286 = vunpack.c.l.b16 %v187
      %v287 = vunpack.c.l.b16 %v188
      %v288 = vunpack.c.l.b16 %v189
      %v289 = vunpack.c.l.b16 %v190
      %v290 = vunpack.c.l.b16 %v191
      %v291 = vunpack.c.l.b16 %v192
      %v292 = vunpack.c.l.b16 %v193
      %v293 = vunpack.c.l.b16 %v194
      %v294 = vunpack.c.l.b16 %v195
      %v295 = vunpack.c.l.b16 %v196
      %v296 = vunpack.c.l.b16 %v197
      %v297 = vunpack.c.l.b16 %v198
      %v298 = vunpack.c.l.b16 %v199
      %v299 = vunpack.c.l.b16 %v200
      %v300 = vunpack.c.l.b16 %v201
      %v301 = vunpack.c.l.b16 %v202
      %v302 = vunpack.c.l.b16 %v203
      %v303 = vunpack.c.l.b16 %v204
      %v304 = vunpack.c.l.b16 %v205
      %v305 = vunpack.c.l.b16 %v206
      %v306 = vunpack.c.l.b16 %v207
      %v307 = vunpack.c.l.b16 %v208
      %v308 = vunpack.c.l.b16 %v209
      %v309 = vunpack.c.l.b16 %v210
      %v310 = vunpack.c.l.b16 %v211
      %v311 = vunpack.c.l.b16 %v212
      %v312 = vpack.c.b16 %v275, %v274
      %v313 = vpack.c.b16 %v277, %v276
      %v314 = vpack.c.b16 %v279, %v278
      %v315 = vpack.c.b16 %v281, %v280
      %v316 = vpack.c.b16 %v283, %v282
      %v317 = vpack.c.b16 %v285, %v284
      %v318 = vpack.c.b16 %v287, %v286
      %v319 = vpack.c.b16 %v289, %v288
      %v320 = vpack.c.b16 %v291, %v290
      %v321 = vpack.c.b16 %v293, %v292
      %v322 = vpack.c.b16 %v295, %v294
      %v323 = vpack.c.b16 %v297, %v296
      %v324 = vpack.c.b16 %v299, %v298
      %v325 = vpack.c.b16 %v301, %v300
      %v326 = vpack.c.b16 %v303, %v302
      %v327 = vpack.c.b16 %v305, %v304
      %v328 = vpack.c.b16 %v307, %v306
      %v329 = vpack.c.b16 %v309, %v308
      %v330 = vpack.c.b16 %v311, %v310
      %v366 = vunpack.c.l.b16 %v213
      %v367 = vunpack.c.l.b16 %v214
      %v368 = vunpack.c.l.b16 %v215
      %v369 = vunpack.c.l.b16 %v216
      %v370 = vunpack.c.l.b16 %v217
      %v371 = vunpack.c.l.b16 %v218
      %v372 = vunpack.c.l.b16 %v219
      %v373 = vunpack.c.l.b16 %v220
      %v374 = vunpack.c.l.b16 %v221
      %v375 = vunpack.c.l.b16 %v222
      %v376 = vunpack.c.l.b16 %v223
      %v377 = vunpack.c.l.b16 %v224
      %v378 = vunpack.c.l.b16 %v225
      %v379 = vunpack.c.l.b16 %v226
      %v380 = vunpack.c.l.b16 %v227
      %v381 = vunpack.c.l.b16 %v228
      %v382 = vpack.c.b16 %v367, %v366
      %v383 = vpack.c.b16 %v369, %v368
      %v384 = vpack.c.b16 %v371, %v370
      %v385 = vpack.c.b16 %v373, %v372
      %v386 = vpack.c.b16 %v375, %v374
      %v387 = vpack.c.b16 %v377, %v376
      %v388 = vpack.c.b16 %v379, %v378
      %v389 = vpack.c.b16 %v381, %v380
      %398 = vmatprep.subr.bf16.mxu0 0
      %399 = vmatpush1.bf16.msra.mxu0 %v389
      %400 = vmatprep.subr.bf16.mxu0 0
      %401 = vmatpush1.bf16.msra.mxu0 %v388
      %402 = vmatprep.subr.bf16.mxu0 0
      %403 = vmatpush1.bf16.msra.mxu0 %v387
      %404 = vmatprep.subr.bf16.mxu0 0
      %405 = vmatpush1.bf16.msra.mxu0 %v386
      %406 = vmatprep.subr.bf16.mxu0 0
      %407 = vmatpush1.bf16.msra.mxu0 %v385
      %408 = vmatprep.subr.bf16.mxu0 0
      %409 = vmatpush1.bf16.msra.mxu0 %v384
      %410 = vmatprep.subr.bf16.mxu0 0
      %411 = vmatpush1.bf16.msra.mxu0 %v383
      %412 = vmatprep.subr.bf16.mxu0 0
      %413 = vmatpush1.bf16.msra.mxu0 %v382
      %414 = vmatprep.subr.bf16.mxu0 0
      %415 = vmatpush2.bf16.msra.mxu0 0
      %416 = vmatprep.subr.bf16.mxu0 0
      %417 = vmatpush2.bf16.msra.mxu0 0
      %418 = vmatprep.subr.bf16.mxu0 0
      %419 = vmatpush2.bf16.msra.mxu0 0
      %420 = vmatprep.subr.bf16.mxu0 0
      %421 = vmatpush2.bf16.msra.mxu0 0
      %422 = vmatprep.subr.bf16.mxu0 0
      %423 = vmatpush2.bf16.msra.mxu0 0
      %424 = vmatprep.subr.bf16.mxu0 0
      %425 = vmatpush2.bf16.msra.mxu0 0
      %426 = vmatprep.subr.bf16.mxu0 0
      %427 = vmatpush2.bf16.msra.mxu0 0
      %428 = vmatprep.subr.bf16.mxu0 0
      %429 = vmatpush2.bf16.msra.mxu0 0
      %430 = vmatprep.mubr.bf16.mxu0 0
      %431 = vmatmul.mubr.bf16.gmra.mxu0 %v312
      %v432 = vpop.f32.mrf.mxu0
      %v433 = vadd.f32 %v234, %v432
      %v434 = vpop.f32.mrf.mxu0
      %v435 = vpop.f32.mrf.mxu0
      %v436 = vadd.f32 %v234, %v435
      %v437 = vpop.f32.mrf.mxu0
      %438 = vmatprep.mubr.bf16.mxu0 0
      %439 = vmatmul.mubr.bf16.gmra.mxu0 %v313
      %v440 = vpop.f32.mrf.mxu0
      %v441 = vadd.f32 %v234, %v440
      %v442 = vpop.f32.mrf.mxu0
      %v443 = vpop.f32.mrf.mxu0
      %v444 = vadd.f32 %v234, %v443
      %v445 = vpop.f32.mrf.mxu0
      %446 = vmatprep.mubr.bf16.mxu0 0
      %447 = vmatmul.mubr.bf16.gmra.mxu0 %v314
      %v448 = vpop.f32.mrf.mxu0
      %v449 = vadd.f32 %v234, %v448
      %v450 = vpop.f32.mrf.mxu0
      %v451 = vpop.f32.mrf.mxu0
      %v452 = vadd.f32 %v234, %v451
      %v453 = vpop.f32.mrf.mxu0
      %454 = vmatprep.mubr.bf16.mxu0 0
      %455 = vmatmul.mubr.bf16.gmra.mxu0 %v315
      %v456 = vpop.f32.mrf.mxu0
      %v457 = vadd.f32 %v234, %v456
      %v458 = vpop.f32.mrf.mxu0
      %v459 = vpop.f32.mrf.mxu0
      %v460 = vadd.f32 %v234, %v459
      %v461 = vpop.f32.mrf.mxu0
      %462 = vmatprep.mubr.bf16.mxu0 0
      %463 = vmatmul.mubr.bf16.gmra.mxu0 %v316
      %v464 = vpop.f32.mrf.mxu0
      %v465 = vadd.f32 %v234, %v464
      %v466 = vpop.f32.mrf.mxu0
      %v467 = vpop.f32.mrf.mxu0
      %v468 = vadd.f32 %v234, %v467
      %v469 = vpop.f32.mrf.mxu0
      %470 = vmatprep.mubr.bf16.mxu0 0
      %471 = vmatmul.mubr.bf16.gmra.mxu0 %v317
      %v472 = vpop.f32.mrf.mxu0
      %v473 = vadd.f32 %v234, %v472
      %v474 = vpop.f32.mrf.mxu0
      %v475 = vpop.f32.mrf.mxu0
      %v476 = vadd.f32 %v234, %v475
      %v477 = vpop.f32.mrf.mxu0
      %478 = vmatprep.mubr.bf16.mxu0 0
      %479 = vmatmul.mubr.bf16.gmra.mxu0 %v318
      %v480 = vpop.f32.mrf.mxu0
      %v481 = vadd.f32 %v234, %v480
      %v482 = vpop.f32.mrf.mxu0
      %v483 = vpop.f32.mrf.mxu0
      %v484 = vadd.f32 %v234, %v483
      %v485 = vpop.f32.mrf.mxu0
      %486 = vmatprep.mubr.bf16.mxu0 0
      %487 = vmatmul.mubr.bf16.gmra.mxu0 %v319
      %v488 = vpop.f32.mrf.mxu0
      %v489 = vadd.f32 %v234, %v488
      %v490 = vpop.f32.mrf.mxu0
      %v491 = vpop.f32.mrf.mxu0
      %v492 = vadd.f32 %v234, %v491
      %v493 = vpop.f32.mrf.mxu0
      %494 = vmatprep.mubr.bf16.mxu0 0
      %495 = vmatmul.mubr.bf16.gmra.mxu0 %v320
      %v496 = vpop.f32.mrf.mxu0
      %v497 = vadd.f32 %v234, %v496
      %v498 = vpop.f32.mrf.mxu0
      %v499 = vpop.f32.mrf.mxu0
      %v500 = vadd.f32 %v234, %v499
      %v501 = vpop.f32.mrf.mxu0
      %502 = vmatprep.mubr.bf16.mxu0 0
      %503 = vmatmul.mubr.bf16.gmra.mxu0 %v321
      %v504 = vpop.f32.mrf.mxu0
      %v505 = vadd.f32 %v234, %v504
      %v506 = vpop.f32.mrf.mxu0
      %v507 = vpop.f32.mrf.mxu0
      %v508 = vadd.f32 %v234, %v507
      %v509 = vpop.f32.mrf.mxu0
      %510 = vmatprep.mubr.bf16.mxu0 0
      %511 = vmatmul.mubr.bf16.gmra.mxu0 %v322
      %v512 = vpop.f32.mrf.mxu0
      %v513 = vadd.f32 %v234, %v512
      %v514 = vpop.f32.mrf.mxu0
      %v515 = vpop.f32.mrf.mxu0
      %v516 = vadd.f32 %v234, %v515
      %v517 = vpop.f32.mrf.mxu0
      %518 = vmatprep.mubr.bf16.mxu0 0
      %519 = vmatmul.mubr.bf16.gmra.mxu0 %v323
      %v520 = vpop.f32.mrf.mxu0
      %v521 = vadd.f32 %v234, %v520
      %v522 = vpop.f32.mrf.mxu0
      %v523 = vpop.f32.mrf.mxu0
      %v524 = vadd.f32 %v234, %v523
      %v525 = vpop.f32.mrf.mxu0
      %526 = vmatprep.mubr.bf16.mxu0 0
      %527 = vmatmul.mubr.bf16.gmra.mxu0 %v324
      %v528 = vpop.f32.mrf.mxu0
      %v529 = vadd.f32 %v234, %v528
      %v530 = vpop.f32.mrf.mxu0
      %v531 = vpop.f32.mrf.mxu0
      %v532 = vadd.f32 %v234, %v531
      %v533 = vpop.f32.mrf.mxu0
      %534 = vmatprep.mubr.bf16.mxu0 0
      %535 = vmatmul.mubr.bf16.gmra.mxu0 %v325
      %v536 = vpop.f32.mrf.mxu0
      %v537 = vadd.f32 %v234, %v536
      %v538 = vpop.f32.mrf.mxu0
      %v539 = vpop.f32.mrf.mxu0
      %v540 = vadd.f32 %v234, %v539
      %v541 = vpop.f32.mrf.mxu0
      %542 = vmatprep.mubr.bf16.mxu0 0
      %543 = vmatmul.mubr.bf16.gmra.mxu0 %v326
      %v544 = vpop.f32.mrf.mxu0
      %v545 = vadd.f32 %v234, %v544
      %v546 = vpop.f32.mrf.mxu0
      %v547 = vpop.f32.mrf.mxu0
      %v548 = vadd.f32 %v234, %v547
      %v549 = vpop.f32.mrf.mxu0
      %550 = vmatprep.mubr.bf16.mxu0 0
      %551 = vmatmul.mubr.bf16.gmra.mxu0 %v327
      %v552 = vpop.f32.mrf.mxu0
      %v553 = vadd.f32 %v234, %v552
      %v554 = vpop.f32.mrf.mxu0
      %v555 = vpop.f32.mrf.mxu0
      %v556 = vadd.f32 %v234, %v555
      %v557 = vpop.f32.mrf.mxu0
      %558 = vmatprep.mubr.bf16.mxu0 0
      %559 = vmatmul.mubr.bf16.gmra.mxu0 %v328
      %v560 = vpop.f32.mrf.mxu0
      %v561 = vadd.f32 %v234, %v560
      %v562 = vpop.f32.mrf.mxu0
      %v563 = vpop.f32.mrf.mxu0
      %v564 = vadd.f32 %v234, %v563
      %v565 = vpop.f32.mrf.mxu0
      %566 = vmatprep.mubr.bf16.mxu0 0
      %567 = vmatmul.mubr.bf16.gmra.mxu0 %v329
      %v568 = vpop.f32.mrf.mxu0
      %v569 = vadd.f32 %v234, %v568
      %v570 = vpop.f32.mrf.mxu0
      %v571 = vpop.f32.mrf.mxu0
      %v572 = vadd.f32 %v234, %v571
      %v573 = vpop.f32.mrf.mxu0
      %574 = vmatprep.mubr.bf16.mxu0 0
      %575 = vmatmul.mubr.bf16.gmra.mxu0 %v330
      %v576 = vpop.f32.mrf.mxu0
      %v577 = vadd.f32 %v234, %v576
      %v578 = vpop.f32.mrf.mxu0
      %v579 = vpop.f32.mrf.mxu0
      %v580 = vadd.f32 %v234, %v579
      %v581 = vpop.f32.mrf.mxu0
      %582 = vdwg.mxu0
      %v583 = vmax.f32 %v433, 0.0
      %v584 = vmax.f32 %v436, 0.0
      %v585 = vmax.f32 %v441, 0.0
      %v586 = vmax.f32 %v444, 0.0
      %v587 = vmax.f32 %v449, 0.0
      %v588 = vmax.f32 %v452, 0.0
      %v589 = vmax.f32 %v457, 0.0
      %v590 = vmax.f32 %v460, 0.0
      %v591 = vmax.f32 %v465, 0.0
      %v592 = vmax.f32 %v468, 0.0
      %v593 = vmax.f32 %v473, 0.0
      %v594 = vmax.f32 %v476, 0.0
      %v595 = vmax.f32 %v481, 0.0
      %v596 = vmax.f32 %v484, 0.0
      %v597 = vmax.f32 %v489, 0.0
      %v598 = vmax.f32 %v492, 0.0
      %v599 = vmax.f32 %v497, 0.0
      %v600 = vmax.f32 %v500, 0.0
      %v601 = vmax.f32 %v505, 0.0
      %v602 = vmax.f32 %v508, 0.0
      %v603 = vmax.f32 %v513, 0.0
      %v604 = vmax.f32 %v516, 0.0
      %v605 = vmax.f32 %v521, 0.0
      %v606 = vmax.f32 %v524, 0.0
      %v607 = vmax.f32 %v529, 0.0
      %v608 = vmax.f32 %v532, 0.0
      %v609 = vmax.f32 %v537, 0.0
      %v610 = vmax.f32 %v540, 0.0
      %v611 = vmax.f32 %v545, 0.0
      %v612 = vmax.f32 %v548, 0.0
      %v613 = vmax.f32 %v553, 0.0
      %v614 = vmax.f32 %v556, 0.0
      %v615 = vmax.f32 %v561, 0.0
      %v616 = vmax.f32 %v564, 0.0
      %v617 = vmax.f32 %v569, 0.0
      %v618 = vmax.f32 %v572, 0.0
      %v619 = vmax.f32 %v577, 0.0
      %v620 = vmax.f32 %v580, 0.0
      %v621 = vpack.c.bf16 %v584, %v583
      %v622 = vpack.c.bf16 %v586, %v585
      %v623 = vpack.c.bf16 %v588, %v587
      %v624 = vpack.c.bf16 %v590, %v589
      %v625 = vpack.c.bf16 %v592, %v591
      %v626 = vpack.c.bf16 %v594, %v593
      %v627 = vpack.c.bf16 %v596, %v595
      %v628 = vpack.c.bf16 %v598, %v597
      %v629 = vpack.c.bf16 %v600, %v599
      %v630 = vpack.c.bf16 %v602, %v601
      %v631 = vpack.c.bf16 %v604, %v603
      %v632 = vpack.c.bf16 %v606, %v605
      %v633 = vpack.c.bf16 %v608, %v607
      %v634 = vpack.c.bf16 %v610, %v609
      %v635 = vpack.c.bf16 %v612, %v611
      %v636 = vpack.c.bf16 %v614, %v613
      %v637 = vpack.c.bf16 %v616, %v615
      %v638 = vpack.c.bf16 %v618, %v617
      %v639 = vpack.c.bf16 %v620, %v619
      %v659 = vunpack.c.l.b16 %v621
      %v660 = vunpack.c.h.b16 %v621
      %v661 = vunpack.c.l.b16 %v622
      %v662 = vunpack.c.h.b16 %v622
      %v663 = vunpack.c.l.b16 %v623
      %v664 = vunpack.c.h.b16 %v623
      %v665 = vunpack.c.l.b16 %v624
      %v666 = vunpack.c.h.b16 %v624
      %v667 = vunpack.c.l.b16 %v625
      %v668 = vunpack.c.h.b16 %v625
      %v669 = vunpack.c.l.b16 %v626
      %v670 = vunpack.c.h.b16 %v626
      %v671 = vunpack.c.l.b16 %v627
      %v672 = vunpack.c.h.b16 %v627
      %v673 = vunpack.c.l.b16 %v628
      %v674 = vunpack.c.h.b16 %v628
      %v675 = vunpack.c.l.b16 %v629
      %v676 = vunpack.c.h.b16 %v629
      %v677 = vunpack.c.l.b16 %v630
      %v678 = vunpack.c.h.b16 %v630
      %v679 = vunpack.c.l.b16 %v631
      %v680 = vunpack.c.h.b16 %v631
      %v681 = vunpack.c.l.b16 %v632
      %v682 = vunpack.c.h.b16 %v632
      %v683 = vunpack.c.l.b16 %v633
      %v684 = vunpack.c.h.b16 %v633
      %v685 = vunpack.c.l.b16 %v634
      %v686 = vunpack.c.h.b16 %v634
      %v687 = vunpack.c.l.b16 %v635
      %v688 = vunpack.c.h.b16 %v635
      %v689 = vunpack.c.l.b16 %v636
      %v690 = vunpack.c.h.b16 %v636
      %v691 = vunpack.c.l.b16 %v637
      %v692 = vunpack.c.h.b16 %v637
      %v693 = vunpack.c.l.b16 %v638
      %v694 = vunpack.c.h.b16 %v638
      %v695 = vunpack.c.l.b16 %v639
      %v696 = vunpack.c.h.b16 %v639
      %v697 = vpack.c.b16 %v659, %v659
      %v698 = vpack.c.b16 %v660, %v660
      %v699 = vpack.c.b16 %v661, %v661
      %v700 = vpack.c.b16 %v662, %v662
      %v701 = vpack.c.b16 %v663, %v663
      %v702 = vpack.c.b16 %v664, %v664
      %v703 = vpack.c.b16 %v665, %v665
      %v704 = vpack.c.b16 %v666, %v666
      %v705 = vpack.c.b16 %v667, %v667
      %v706 = vpack.c.b16 %v668, %v668
      %v707 = vpack.c.b16 %v669, %v669
      %v708 = vpack.c.b16 %v670, %v670
      %v709 = vpack.c.b16 %v671, %v671
      %v710 = vpack.c.b16 %v672, %v672
      %v711 = vpack.c.b16 %v673, %v673
      %v712 = vpack.c.b16 %v674, %v674
      %v713 = vpack.c.b16 %v675, %v675
      %v714 = vpack.c.b16 %v676, %v676
      %v715 = vpack.c.b16 %v677, %v677
      %v716 = vpack.c.b16 %v678, %v678
      %v717 = vpack.c.b16 %v679, %v679
      %v718 = vpack.c.b16 %v680, %v680
      %v719 = vpack.c.b16 %v681, %v681
      %v720 = vpack.c.b16 %v682, %v682
      %v721 = vpack.c.b16 %v683, %v683
      %v722 = vpack.c.b16 %v684, %v684
      %v723 = vpack.c.b16 %v685, %v685
      %v724 = vpack.c.b16 %v686, %v686
      %v725 = vpack.c.b16 %v687, %v687
      %v726 = vpack.c.b16 %v688, %v688
      %v727 = vpack.c.b16 %v689, %v689
      %v728 = vpack.c.b16 %v690, %v690
      %v729 = vpack.c.b16 %v691, %v691
      %v730 = vpack.c.b16 %v692, %v692
      %v731 = vpack.c.b16 %v693, %v693
      %v732 = vpack.c.b16 %v694, %v694
      %v733 = vpack.c.b16 %v695, %v695
      %v734 = vpack.c.b16 %v696, %v696
      %773 = vst [vmem:[%s172] sm:$0xf] %v697
      %774 = vst [vmem:[%s172 + $0x4] sm:$0xf] %v698
      %775 = vst [vmem:[%s172 + $0x8] sm:$0xf] %v699
      %776 = vst [vmem:[%s172 + $0xc] sm:$0xf] %v700
      %777 = vst [vmem:[%s172 + $0x10] sm:$0xf] %v701
      %778 = vst [vmem:[%s172 + $0x14] sm:$0xf] %v702
      %779 = vst [vmem:[%s172 + $0x18] sm:$0xf] %v703
      %780 = vst [vmem:[%s172 + $0x1c] sm:$0xf] %v704
      %781 = vst [vmem:[%s172 + $0x20] sm:$0xf] %v705
      %782 = vst [vmem:[%s172 + $0x24] sm:$0xf] %v706
      %783 = vst [vmem:[%s172 + $0x28] sm:$0xf] %v707
      %784 = vst [vmem:[%s172 + $0x2c] sm:$0xf] %v708
      %785 = vst [vmem:[%s172 + $0x30] sm:$0xf] %v709
      %786 = vst [vmem:[%s172 + $0x34] sm:$0xf] %v710
      %787 = vst [vmem:[%s172 + $0x38] sm:$0xf] %v711
      %788 = vst [vmem:[%s172 + $0x3c] sm:$0xf] %v712
      %789 = vst [vmem:[%s172 + $0x40] sm:$0xf] %v713
      %790 = vst [vmem:[%s172 + $0x44] sm:$0xf] %v714
      %791 = vst [vmem:[%s172 + $0x48] sm:$0xf] %v715
      %792 = vst [vmem:[%s172 + $0x4c] sm:$0xf] %v716
      %793 = vst [vmem:[%s172 + $0x50] sm:$0xf] %v717
      %794 = vst [vmem:[%s172 + $0x54] sm:$0xf] %v718
      %795 = vst [vmem:[%s172 + $0x58] sm:$0xf] %v719
      %796 = vst [vmem:[%s172 + $0x5c] sm:$0xf] %v720
      %797 = vst [vmem:[%s172 + $0x60] sm:$0xf] %v721
      %798 = vst [vmem:[%s172 + $0x64] sm:$0xf] %v722
      %799 = vst [vmem:[%s172 + $0x68] sm:$0xf] %v723
      %800 = vst [vmem:[%s172 + $0x6c] sm:$0xf] %v724
      %801 = vst [vmem:[%s172 + $0x70] sm:$0xf] %v725
      %802 = vst [vmem:[%s172 + $0x74] sm:$0xf] %v726
      %803 = vst [vmem:[%s172 + $0x78] sm:$0xf] %v727
      %804 = vst [vmem:[%s172 + $0x7c] sm:$0xf] %v728
      %805 = vst [vmem:[%s172 + $0x80] sm:$0xf] %v729
      %806 = vst [vmem:[%s172 + $0x84] sm:$0xf] %v730
      %807 = vst [vmem:[%s172 + $0x88] sm:$0xf] %v731
      %808 = vst [vmem:[%s172 + $0x8c] sm:$0xf] %v732
      %809 = vst [vmem:[%s172 + $0x90] sm:$0xf] %v733
      %810 = vst [vmem:[%s172 + $0x94] sm:$0xf] %v734
      %s811 = smul.u32 38, %s14
      %p812 = scmp.lt.s32.totalorder %s811, 75
      %s813 = scalar_select %p812, %s811, 75
      %s814 = smul.addr %s813, 4
      %s815 = scalar_lea.vmem %s3, %s814
      // Predicated region
      $region33: #{conv_decoder_forward.8} parent=31 // pred_check
        %p816 = pneg %p100
      $region34: #{conv_decoder_forward.8} parent=31 // pred_check_branch
        %818 = sbr.rel (%p816) target = $region36
      $region35: #{conv_decoder_forward.8} parent=31 // pred_region
        %s819 = smul.u32 38, %s14
      $region36: #{conv_decoder_forward.8} parent=31 // pred_fallthru
        _
    $region32: #{conv_decoder_forward.8} parent=5 // pred_fallthru
      _
    %p820 = scmp.le.s32.totalorder 2, %s9
    // Predicated region
    $region37: #{conv_decoder_forward.8} parent=5 // pred_check
      %p821 = pneg %p820
    $region38: #{conv_decoder_forward.8} parent=5 // pred_check_branch
      %823 = sbr.rel (%p821) target = $region40
    $region39: #{conv_decoder_forward.8} parent=5 // pred_region
      %s824 = ssub.s32 %s9, 2
      // Predicated region
      $region41: #{conv_decoder_forward.8} parent=39 // pred_check
        %p825 = pneg %p106
      $region42: #{conv_decoder_forward.8} parent=39 // pred_check_branch
        %827 = sbr.rel (%p825) target = $region44
      $region43: #{conv_decoder_forward.8} parent=39 // pred_region
        %s828 = smul.u32 38, %s15
        %p829 = scmp.lt.s32.totalorder %s828, 75
        %s830 = scalar_select %p829, %s828, 75
        %s831 = smul.addr %s830, 4
        %s832 = scalar_lea.vmem %s3, %s831
      $region44: #{conv_decoder_forward.8} parent=39 // pred_fallthru
        _
    $region40: #{conv_decoder_forward.8} parent=5 // pred_fallthru
      _
  $region6: #{conv_decoder_forward.8} parent=0 // loop_footer
    %s13 = sadd.s32 1, %s9
  $region7: #{conv_decoder_forward.8} parent=0 // loop_footer_branch
    %8 = sbr.rel target = $region3
  $region8: #{conv_decoder_forward.8} parent=0 // loop_exit
    _

// kernel: conv_decoder_forward.9
$region0: #{conv_decoder_forward.9}
  #allocation0 [shape = 'u32[]', space=smem, size = 0x4, offset = 0x4, fixed_abs, tag = 'smem constant byte address 0x4 - core index']
  #allocation1 [shape = 'u32[144,128]{1,0:T(1,128)}', space=vmem, size = 0x12000, scoped, tag = 'internal scratch']
  %s0 = inlined_call_operand.vmem [shape: bf16[2208,128], index: 0, kind: input, shape index: {}]
  %s1 = inlined_call_operand.vmem [shape: bf16[128,128], index: 1, kind: input, shape index: {}]
  %s2 = inlined_call_operand.vmem [shape: f32[1,128], index: 2, kind: input, shape index: {}]
  %s3 = inlined_call_operand.vmem [shape: f32[2208,128], index: 3, kind: output, shape index: {}]
  %s4 = sld [smem:[#allocation0]]
  $region45: #{conv_decoder_forward.9} parent=0
    _
  %s6 = ssub.s32 1, %s4
  %s7 = scalar_select 0, %s6, %s4
  loop: start=0, step=1, limit=4
  $region2: #{conv_decoder_forward.9} parent=0 // loop_pre_header
    _
  $region3: #{conv_decoder_forward.9} parent=0 // loop_header
    %s9 = sphi 0, %s13
    %p10 = scmp.ge.s32.totalorder %s9, 4
    %s19 = sphi 0, %s21
    %s22 = sphi 0, %s19
    %s23 = sphi 0, %s22
    %s39 = sphi 0, %s23
    %s43 = sphi 0, %s43
    %s45 = sphi 0, %s43
    %s46 = sphi 0, %s45
    %s60 = sphi 0, %s46
    %s64 = sphi 0, %s64
    %s66 = sphi 0, %s64
    %s67 = sphi 0, %s66
    %s81 = sphi 0, %s67
    %s87 = sphi 0, %s89
    %s90 = sphi 0, %s87
    %s91 = sphi 0, %s90
    %s107 = sphi 0, %s91
  $region4: #{conv_decoder_forward.9} parent=0 // loop_header_branch
    %12 = sbr.rel (%p10) target = $region8
  $region5: #{conv_decoder_forward.9} parent=0 // loop_body
    %s14 = ssub.s32 %s9, 1
    %s15 = ssub.s32 %s9, 2
    %s16 = sadd.s32 %s9, 1
    %s17 = ssub.s32 %s9, %s16
    %p18 = scmp.eq.s32.totalorder %s17, 0
    %s20 = sadd.s32 %s19, 1
    %s21 = scalar_select %p18, %s19, %s20
    %p24 = pneg %p18
    %p25 = scmp.eq.s32.totalorder %s9, 1
    %p26 = por %p24, %p25
    %p27 = scmp.ne.s32.totalorder %s19, %s22
    %p28 = scmp.eq.s32.totalorder %s9, 0
    %p29 = por %p27, %p28
    %p30 = scmp.ne.s32.totalorder %s19, %s22
    %p31 = scmp.eq.s32.totalorder %s14, 1
    %p32 = por %p30, %p31
    %p33 = scmp.ne.s32.totalorder %s22, %s23
    %p34 = scmp.eq.s32.totalorder %s14, 0
    %p35 = por %p33, %p34
    %p36 = scmp.ne.s32.totalorder %s22, %s23
    %p37 = scmp.eq.s32.totalorder %s15, 1
    %p38 = por %p36, %p37
    %p40 = scmp.ne.s32.totalorder %s23, %s39
    %p41 = scmp.eq.s32.totalorder %s15, 0
    %p42 = por %p40, %p41
    %s44 = sadd.s32 %s43, 1
    %p47 = scmp.eq.s32.totalorder %s9, 1
    %p48 = scmp.ne.s32.totalorder %s43, %s45
    %p49 = scmp.eq.s32.totalorder %s9, 0
    %p50 = por %p48, %p49
    %p51 = scmp.ne.s32.totalorder %s43, %s45
    %p52 = scmp.eq.s32.totalorder %s14, 1
    %p53 = por %p51, %p52
    %p54 = scmp.ne.s32.totalorder %s45, %s46
    %p55 = scmp.eq.s32.totalorder %s14, 0
    %p56 = por %p54, %p55
    %p57 = scmp.ne.s32.totalorder %s45, %s46
    %p58 = scmp.eq.s32.totalorder %s15, 1
    %p59 = por %p57, %p58
    %p61 = scmp.ne.s32.totalorder %s46, %s60
    %p62 = scmp.eq.s32.totalorder %s15, 0
    %p63 = por %p61, %p62
    %s65 = sadd.s32 %s64, 1
    %p68 = scmp.eq.s32.totalorder %s9, 1
    %p69 = scmp.ne.s32.totalorder %s64, %s66
    %p70 = scmp.eq.s32.totalorder %s9, 0
    %p71 = por %p69, %p70
    %p72 = scmp.ne.s32.totalorder %s64, %s66
    %p73 = scmp.eq.s32.totalorder %s14, 1
    %p74 = por %p72, %p73
    %p75 = scmp.ne.s32.totalorder %s66, %s67
    %p76 = scmp.eq.s32.totalorder %s14, 0
    %p77 = por %p75, %p76
    %p78 = scmp.ne.s32.totalorder %s66, %s67
    %p79 = scmp.eq.s32.totalorder %s15, 1
    %p80 = por %p78, %p79
    %p82 = scmp.ne.s32.totalorder %s67, %s81
    %p83 = scmp.eq.s32.totalorder %s15, 0
    %p84 = por %p82, %p83
    %s85 = ssub.s32 %s9, %s16
    %p86 = scmp.eq.s32.totalorder %s85, 0
    %s88 = sadd.s32 %s87, 1
    %s89 = scalar_select %p86, %s87, %s88
    %p92 = pneg %p86
    %p93 = scmp.eq.s32.totalorder %s9, 1
    %p94 = por %p92, %p93
    %p95 = scmp.ne.s32.totalorder %s87, %s90
    %p96 = scmp.eq.s32.totalorder %s9, 0
    %p97 = por %p95, %p96
    %p98 = scmp.ne.s32.totalorder %s87, %s90
    %p99 = scmp.eq.s32.totalorder %s14, 1
    %p100 = por %p98, %p99
    %p101 = scmp.ne.s32.totalorder %s90, %s91
    %p102 = scmp.eq.s32.totalorder %s14, 0
    %p103 = por %p101, %p102
    %p104 = scmp.ne.s32.totalorder %s90, %s91
    %p105 = scmp.eq.s32.totalorder %s15, 1
    %p106 = por %p104, %p105
    %p108 = scmp.ne.s32.totalorder %s91, %s107
    %p109 = scmp.eq.s32.totalorder %s15, 0
    %p110 = por %p108, %p109
    %p111 = scmp.le.s32.totalorder 1, %s9
    %p112 = scmp.lt.s32.totalorder %s9, 3
    %p113 = pnand %p111, %p112
    %p114 = pneg %p113
    // Predicated region
    $region9: #{conv_decoder_forward.9} parent=5 // pred_check
      _
    $region10: #{conv_decoder_forward.9} parent=5 // pred_check_branch
      %116 = sbr.rel (%p113) target = $region12
    $region11: #{conv_decoder_forward.9} parent=5 // pred_region
      %s117 = ssub.s32 %s9, 1
      // Predicated region
      $region13: #{conv_decoder_forward.9} parent=11 // pred_check
        %p118 = pneg %p56
      $region14: #{conv_decoder_forward.9} parent=11 // pred_check_branch
        %120 = sbr.rel (%p118) target = $region16
      $region15: #{conv_decoder_forward.9} parent=11 // pred_region
        _
      $region16: #{conv_decoder_forward.9} parent=11 // pred_fallthru
        _
      // Predicated region
      $region17: #{conv_decoder_forward.9} parent=11 // pred_check
        %p121 = pneg %p77
      $region18: #{conv_decoder_forward.9} parent=11 // pred_check_branch
        %123 = sbr.rel (%p121) target = $region20
      $region19: #{conv_decoder_forward.9} parent=11 // pred_region
        _
      $region20: #{conv_decoder_forward.9} parent=11 // pred_fallthru
        _
    $region12: #{conv_decoder_forward.9} parent=5 // pred_fallthru
      _
    %p124 = scmp.lt.s32.totalorder %s9, 2
    // Predicated region
    $region21: #{conv_decoder_forward.9} parent=5 // pred_check
      %p125 = pneg %p124
    $region22: #{conv_decoder_forward.9} parent=5 // pred_check_branch
      %127 = sbr.rel (%p125) target = $region24
    $region23: #{conv_decoder_forward.9} parent=5 // pred_region
      // Predicated region
      $region25: #{conv_decoder_forward.9} parent=23 // pred_check
        %p128 = pneg %p29
      $region26: #{conv_decoder_forward.9} parent=23 // pred_check_branch
        %130 = sbr.rel (%p128) target = $region28
      $region27: #{conv_decoder_forward.9} parent=23 // pred_region
        %s131 = smul.u32 138, %s9
        %p132 = scmp.lt.s32.totalorder %s131, 275
        %s133 = scalar_select %p132, %s131, 275
        %s134 = smul.addr %s133, 4
        %s135 = scalar_lea.vmem %s0, %s134
        %s136 = smul.u32 138, %s9
      $region28: #{conv_decoder_forward.9} parent=23 // pred_fallthru
        _
    $region24: #{conv_decoder_forward.9} parent=5 // pred_fallthru
      _
    %p137 = scmp.le.s32.totalorder 1, %s9
    %p138 = scmp.lt.s32.totalorder %s9, 3
    %p139 = pnand %p137, %p138
    %p140 = pneg %p139
    // Predicated region
    $region29: #{conv_decoder_forward.9} parent=5 // pred_check
      _
    $region30: #{conv_decoder_forward.9} parent=5 // pred_check_branch
      %142 = sbr.rel (%p139) target = $region32
    $region31: #{conv_decoder_forward.9} parent=5 // pred_region
      %s143 = ssub.s32 %s9, 1
      %s144 = smul.u32 138, %s14
      %p145 = scmp.lt.s32.totalorder %s144, 275
      %s146 = scalar_select %p145, %s144, 275
      %s147 = smul.addr %s146, 4
      %s148 = scalar_lea.vmem %s0, %s147
      %p149 = pneg %p35
      %p150 = pneg %p32
      %p151 = pneg %p56
      %p152 = pneg %p53
      %p153 = pneg %p77
      %p154 = pneg %p74
      %p155 = pneg %p103
      %p156 = pneg %p100
      %s157 = smul.u32 138, %s14
      %p158 = scmp.lt.s32.totalorder %s157, 275
      %s159 = scalar_select %p158, %s157, 275
      %s160 = smul.addr %s159, 8
      %s161 = scalar_lea.vmem %s3, %s160
      %s162 = smul.u32 138, %s14
      %p163 = scmp.lt.s32.totalorder %s162, 275
      %s164 = scalar_select %p163, %s162, 275
      %s165 = smul.addr %s164, 4
      %s166 = scalar_lea.vmem %s0, %s165
      %s167 = smul.u32 138, %s14
      %s168 = smul.u32 138, %s14
      %p169 = scmp.lt.s32.totalorder %s168, 275
      %s170 = scalar_select %p169, %s168, 275
      %s171 = smul.addr %s170, 8
      %s172 = scalar_lea.vmem %s3, %s171
      %s173 = smul.u32 138, %s14
      %v175 = vld [vmem:[%s166] sm:$0xf]
      %v176 = vld [vmem:[%s166 + $0x4] sm:$0xf]
      %v177 = vld [vmem:[%s166 + $0x8] sm:$0xf]
      %v178 = vld [vmem:[%s166 + $0xc] sm:$0xf]
      %v179 = vld [vmem:[%s166 + $0x10] sm:$0xf]
      %v180 = vld [vmem:[%s166 + $0x14] sm:$0xf]
      %v181 = vld [vmem:[%s166 + $0x18] sm:$0xf]
      %v182 = vld [vmem:[%s166 + $0x1c] sm:$0xf]
      %v183 = vld [vmem:[%s166 + $0x20] sm:$0xf]
      %v184 = vld [vmem:[%s166 + $0x24] sm:$0xf]
      %v185 = vld [vmem:[%s166 + $0x28] sm:$0xf]
      %v186 = vld [vmem:[%s166 + $0x2c] sm:$0xf]
      %v187 = vld [vmem:[%s166 + $0x30] sm:$0xf]
      %v188 = vld [vmem:[%s166 + $0x34] sm:$0xf]
      %v189 = vld [vmem:[%s166 + $0x38] sm:$0xf]
      %v190 = vld [vmem:[%s166 + $0x3c] sm:$0xf]
      %v191 = vld [vmem:[%s166 + $0x40] sm:$0xf]
      %v192 = vld [vmem:[%s166 + $0x44] sm:$0xf]
      %v193 = vld [vmem:[%s166 + $0x48] sm:$0xf]
      %v194 = vld [vmem:[%s166 + $0x4c] sm:$0xf]
      %v195 = vld [vmem:[%s166 + $0x50] sm:$0xf]
      %v196 = vld [vmem:[%s166 + $0x54] sm:$0xf]
      %v197 = vld [vmem:[%s166 + $0x58] sm:$0xf]
      %v198 = vld [vmem:[%s166 + $0x5c] sm:$0xf]
      %v199 = vld [vmem:[%s166 + $0x60] sm:$0xf]
      %v200 = vld [vmem:[%s166 + $0x64] sm:$0xf]
      %v201 = vld [vmem:[%s166 + $0x68] sm:$0xf]
      %v202 = vld [vmem:[%s166 + $0x6c] sm:$0xf]
      %v203 = vld [vmem:[%s166 + $0x70] sm:$0xf]
      %v204 = vld [vmem:[%s166 + $0x74] sm:$0xf]
      %v205 = vld [vmem:[%s166 + $0x78] sm:$0xf]
      %v206 = vld [vmem:[%s166 + $0x7c] sm:$0xf]
      %v207 = vld [vmem:[%s166 + $0x80] sm:$0xf]
      %v208 = vld [vmem:[%s166 + $0x84] sm:$0xf]
      %v209 = vld [vmem:[%s166 + $0x88] sm:$0xf]
      %v210 = vld [vmem:[%s166 + $0x8c] sm:$0xf]
      %v211 = vld [vmem:[%s166 + $0x90] sm:$0xf]
      %v212 = vld [vmem:[%s166 + $0x94] sm:$0xf]
      %v213 = vld [vmem:[%s166 + $0x98] sm:$0xf]
      %v214 = vld [vmem:[%s166 + $0x9c] sm:$0xf]
      %v215 = vld [vmem:[%s166 + $0xa0] sm:$0xf]
      %v216 = vld [vmem:[%s166 + $0xa4] sm:$0xf]
      %v217 = vld [vmem:[%s166 + $0xa8] sm:$0xf]
      %v218 = vld [vmem:[%s166 + $0xac] sm:$0xf]
      %v219 = vld [vmem:[%s166 + $0xb0] sm:$0xf]
      %v220 = vld [vmem:[%s166 + $0xb4] sm:$0xf]
      %v221 = vld [vmem:[%s166 + $0xb8] sm:$0xf]
      %v222 = vld [vmem:[%s166 + $0xbc] sm:$0xf]
      %v223 = vld [vmem:[%s166 + $0xc0] sm:$0xf]
      %v224 = vld [vmem:[%s166 + $0xc4] sm:$0xf]
      %v225 = vld [vmem:[%s166 + $0xc8] sm:$0xf]
      %v226 = vld [vmem:[%s166 + $0xcc] sm:$0xf]
      %v227 = vld [vmem:[%s166 + $0xd0] sm:$0xf]
      %v228 = vld [vmem:[%s166 + $0xd4] sm:$0xf]
      %v229 = vld [vmem:[%s166 + $0xd8] sm:$0xf]
      %v230 = vld [vmem:[%s166 + $0xdc] sm:$0xf]
      %v231 = vld [vmem:[%s166 + $0xe0] sm:$0xf]
      %v232 = vld [vmem:[%s166 + $0xe4] sm:$0xf]
      %v233 = vld [vmem:[%s166 + $0xe8] sm:$0xf]
      %v234 = vld [vmem:[%s166 + $0xec] sm:$0xf]
      %v235 = vld [vmem:[%s166 + $0xf0] sm:$0xf]
      %v236 = vld [vmem:[%s166 + $0xf4] sm:$0xf]
      %v237 = vld [vmem:[%s166 + $0xf8] sm:$0xf]
      %v238 = vld [vmem:[%s166 + $0xfc] sm:$0xf]
      %v239 = vld [vmem:[%s166 + $0x100] sm:$0xf]
      %v240 = vld [vmem:[%s166 + $0x104] sm:$0xf]
      %v241 = vld [vmem:[%s166 + $0x108] sm:$0xf]
      %v242 = vld [vmem:[%s166 + $0x10c] sm:$0xf]
      %v243 = vld [vmem:[%s166 + $0x110] sm:$0xf]
      %v244 = vld [vmem:[%s166 + $0x114] sm:$0xf]
      %v245 = vld [vmem:[%s166 + $0x118] sm:$0xf]
      %v246 = vld [vmem:[%s166 + $0x11c] sm:$0xf]
      %v247 = vld [vmem:[%s166 + $0x120] sm:$0xf]
      %v248 = vld [vmem:[%s166 + $0x124] sm:$0xf]
      %v249 = vld [vmem:[%s166 + $0x128] sm:$0xf]
      %v250 = vld [vmem:[%s166 + $0x12c] sm:$0xf]
      %v251 = vld [vmem:[%s166 + $0x130] sm:$0xf]
      %v252 = vld [vmem:[%s166 + $0x134] sm:$0xf]
      %v253 = vld [vmem:[%s166 + $0x138] sm:$0xf]
      %v254 = vld [vmem:[%s166 + $0x13c] sm:$0xf]
      %v255 = vld [vmem:[%s166 + $0x140] sm:$0xf]
      %v256 = vld [vmem:[%s166 + $0x144] sm:$0xf]
      %v257 = vld [vmem:[%s166 + $0x148] sm:$0xf]
      %v258 = vld [vmem:[%s166 + $0x14c] sm:$0xf]
      %v259 = vld [vmem:[%s166 + $0x150] sm:$0xf]
      %v260 = vld [vmem:[%s166 + $0x154] sm:$0xf]
      %v261 = vld [vmem:[%s166 + $0x158] sm:$0xf]
      %v262 = vld [vmem:[%s166 + $0x15c] sm:$0xf]
      %v263 = vld [vmem:[%s166 + $0x160] sm:$0xf]
      %v264 = vld [vmem:[%s166 + $0x164] sm:$0xf]
      %v265 = vld [vmem:[%s166 + $0x168] sm:$0xf]
      %v266 = vld [vmem:[%s166 + $0x16c] sm:$0xf]
      %v267 = vld [vmem:[%s166 + $0x170] sm:$0xf]
      %v268 = vld [vmem:[%s166 + $0x174] sm:$0xf]
      %v269 = vld [vmem:[%s166 + $0x178] sm:$0xf]
      %v270 = vld [vmem:[%s166 + $0x17c] sm:$0xf]
      %v271 = vld [vmem:[%s166 + $0x180] sm:$0xf]
      %v272 = vld [vmem:[%s166 + $0x184] sm:$0xf]
      %v273 = vld [vmem:[%s166 + $0x188] sm:$0xf]
      %v274 = vld [vmem:[%s166 + $0x18c] sm:$0xf]
      %v275 = vld [vmem:[%s166 + $0x190] sm:$0xf]
      %v276 = vld [vmem:[%s166 + $0x194] sm:$0xf]
      %v277 = vld [vmem:[%s166 + $0x198] sm:$0xf]
      %v278 = vld [vmem:[%s166 + $0x19c] sm:$0xf]
      %v279 = vld [vmem:[%s166 + $0x1a0] sm:$0xf]
      %v280 = vld [vmem:[%s166 + $0x1a4] sm:$0xf]
      %v281 = vld [vmem:[%s166 + $0x1a8] sm:$0xf]
      %v282 = vld [vmem:[%s166 + $0x1ac] sm:$0xf]
      %v283 = vld [vmem:[%s166 + $0x1b0] sm:$0xf]
      %v284 = vld [vmem:[%s166 + $0x1b4] sm:$0xf]
      %v285 = vld [vmem:[%s166 + $0x1b8] sm:$0xf]
      %v286 = vld [vmem:[%s166 + $0x1bc] sm:$0xf]
      %v287 = vld [vmem:[%s166 + $0x1c0] sm:$0xf]
      %v288 = vld [vmem:[%s166 + $0x1c4] sm:$0xf]
      %v289 = vld [vmem:[%s166 + $0x1c8] sm:$0xf]
      %v290 = vld [vmem:[%s166 + $0x1cc] sm:$0xf]
      %v291 = vld [vmem:[%s166 + $0x1d0] sm:$0xf]
      %v292 = vld [vmem:[%s166 + $0x1d4] sm:$0xf]
      %v293 = vld [vmem:[%s166 + $0x1d8] sm:$0xf]
      %v294 = vld [vmem:[%s166 + $0x1dc] sm:$0xf]
      %v295 = vld [vmem:[%s166 + $0x1e0] sm:$0xf]
      %v296 = vld [vmem:[%s166 + $0x1e4] sm:$0xf]
      %v297 = vld [vmem:[%s166 + $0x1e8] sm:$0xf]
      %v298 = vld [vmem:[%s166 + $0x1ec] sm:$0xf]
      %v299 = vld [vmem:[%s166 + $0x1f0] sm:$0xf]
      %v300 = vld [vmem:[%s166 + $0x1f4] sm:$0xf]
      %v301 = vld [vmem:[%s166 + $0x1f8] sm:$0xf]
      %v302 = vld [vmem:[%s166 + $0x1fc] sm:$0xf]
      %v303 = vld [vmem:[%s166 + $0x200] sm:$0xf]
      %v304 = vld [vmem:[%s166 + $0x204] sm:$0xf]
      %v305 = vld [vmem:[%s166 + $0x208] sm:$0xf]
      %v306 = vld [vmem:[%s166 + $0x20c] sm:$0xf]
      %v307 = vld [vmem:[%s166 + $0x210] sm:$0xf]
      %v308 = vld [vmem:[%s166 + $0x214] sm:$0xf]
      %v309 = vld [vmem:[%s166 + $0x218] sm:$0xf]
      %v310 = vld [vmem:[%s166 + $0x21c] sm:$0xf]
      %v311 = vld [vmem:[%s166 + $0x220] sm:$0xf]
      %v312 = vld [vmem:[%s166 + $0x224] sm:$0xf]
      %v313 = vld [vmem:[%s1] sm:$0xf]
      %v314 = vld [vmem:[%s1 + $0x4] sm:$0xf]
      %v315 = vld [vmem:[%s1 + $0x8] sm:$0xf]
      %v316 = vld [vmem:[%s1 + $0xc] sm:$0xf]
      %v317 = vld [vmem:[%s1 + $0x10] sm:$0xf]
      %v318 = vld [vmem:[%s1 + $0x14] sm:$0xf]
      %v319 = vld [vmem:[%s1 + $0x18] sm:$0xf]
      %v320 = vld [vmem:[%s1 + $0x1c] sm:$0xf]
      %v321 = vld [vmem:[%s1 + $0x20] sm:$0xf]
      %v322 = vld [vmem:[%s1 + $0x24] sm:$0xf]
      %v323 = vld [vmem:[%s1 + $0x28] sm:$0xf]
      %v324 = vld [vmem:[%s1 + $0x2c] sm:$0xf]
      %v325 = vld [vmem:[%s1 + $0x30] sm:$0xf]
      %v326 = vld [vmem:[%s1 + $0x34] sm:$0xf]
      %v327 = vld [vmem:[%s1 + $0x38] sm:$0xf]
      %v328 = vld [vmem:[%s1 + $0x3c] sm:$0xf]
      %v329 = vld [vmem:[%s2] sm:$0x1]
      %v331 = vlaneseq
      %v332 = vshrl.u32 %v331, 7
      %v333 = vsub.s32 0, %v332
      %v334 = vrot.slane %v329, %v333
      %v474 = vunpack.c.l.b16 %v175
      %v475 = vunpack.c.l.b16 %v176
      %v476 = vunpack.c.l.b16 %v177
      %v477 = vunpack.c.l.b16 %v178
      %v478 = vunpack.c.l.b16 %v179
      %v479 = vunpack.c.l.b16 %v180
      %v480 = vunpack.c.l.b16 %v181
      %v481 = vunpack.c.l.b16 %v182
      %v482 = vunpack.c.l.b16 %v183
      %v483 = vunpack.c.l.b16 %v184
      %v484 = vunpack.c.l.b16 %v185
      %v485 = vunpack.c.l.b16 %v186
      %v486 = vunpack.c.l.b16 %v187
      %v487 = vunpack.c.l.b16 %v188
      %v488 = vunpack.c.l.b16 %v189
      %v489 = vunpack.c.l.b16 %v190
      %v490 = vunpack.c.l.b16 %v191
      %v491 = vunpack.c.l.b16 %v192
      %v492 = vunpack.c.l.b16 %v193
      %v493 = vunpack.c.l.b16 %v194
      %v494 = vunpack.c.l.b16 %v195
      %v495 = vunpack.c.l.b16 %v196
      %v496 = vunpack.c.l.b16 %v197
      %v497 = vunpack.c.l.b16 %v198
      %v498 = vunpack.c.l.b16 %v199
      %v499 = vunpack.c.l.b16 %v200
      %v500 = vunpack.c.l.b16 %v201
      %v501 = vunpack.c.l.b16 %v202
      %v502 = vunpack.c.l.b16 %v203
      %v503 = vunpack.c.l.b16 %v204
      %v504 = vunpack.c.l.b16 %v205
      %v505 = vunpack.c.l.b16 %v206
      %v506 = vunpack.c.l.b16 %v207
      %v507 = vunpack.c.l.b16 %v208
      %v508 = vunpack.c.l.b16 %v209
      %v509 = vunpack.c.l.b16 %v210
      %v510 = vunpack.c.l.b16 %v211
      %v511 = vunpack.c.l.b16 %v212
      %v512 = vunpack.c.l.b16 %v213
      %v513 = vunpack.c.l.b16 %v214
      %v514 = vunpack.c.l.b16 %v215
      %v515 = vunpack.c.l.b16 %v216
      %v516 = vunpack.c.l.b16 %v217
      %v517 = vunpack.c.l.b16 %v218
      %v518 = vunpack.c.l.b16 %v219
      %v519 = vunpack.c.l.b16 %v220
      %v520 = vunpack.c.l.b16 %v221
      %v521 = vunpack.c.l.b16 %v222
      %v522 = vunpack.c.l.b16 %v223
      %v523 = vunpack.c.l.b16 %v224
      %v524 = vunpack.c.l.b16 %v225
      %v525 = vunpack.c.l.b16 %v226
      %v526 = vunpack.c.l.b16 %v227
      %v527 = vunpack.c.l.b16 %v228
      %v528 = vunpack.c.l.b16 %v229
      %v529 = vunpack.c.l.b16 %v230
      %v530 = vunpack.c.l.b16 %v231
      %v531 = vunpack.c.l.b16 %v232
      %v532 = vunpack.c.l.b16 %v233
      %v533 = vunpack.c.l.b16 %v234
      %v534 = vunpack.c.l.b16 %v235
      %v535 = vunpack.c.l.b16 %v236
      %v536 = vunpack.c.l.b16 %v237
      %v537 = vunpack.c.l.b16 %v238
      %v538 = vunpack.c.l.b16 %v239
      %v539 = vunpack.c.l.b16 %v240
      %v540 = vunpack.c.l.b16 %v241
      %v541 = vunpack.c.l.b16 %v242
      %v542 = vunpack.c.l.b16 %v243
      %v543 = vunpack.c.l.b16 %v244
      %v544 = vunpack.c.l.b16 %v245
      %v545 = vunpack.c.l.b16 %v246
      %v546 = vunpack.c.l.b16 %v247
      %v547 = vunpack.c.l.b16 %v248
      %v548 = vunpack.c.l.b16 %v249
      %v549 = vunpack.c.l.b16 %v250
      %v550 = vunpack.c.l.b16 %v251
      %v551 = vunpack.c.l.b16 %v252
      %v552 = vunpack.c.l.b16 %v253
      %v553 = vunpack.c.l.b16 %v254
      %v554 = vunpack.c.l.b16 %v255
      %v555 = vunpack.c.l.b16 %v256
      %v556 = vunpack.c.l.b16 %v257
      %v557 = vunpack.c.l.b16 %v258
      %v558 = vunpack.c.l.b16 %v259
      %v559 = vunpack.c.l.b16 %v260
      %v560 = vunpack.c.l.b16 %v261
      %v561 = vunpack.c.l.b16 %v262
      %v562 = vunpack.c.l.b16 %v263
      %v563 = vunpack.c.l.b16 %v264
      %v564 = vunpack.c.l.b16 %v265
      %v565 = vunpack.c.l.b16 %v266
      %v566 = vunpack.c.l.b16 %v267
      %v567 = vunpack.c.l.b16 %v268
      %v568 = vunpack.c.l.b16 %v269
      %v569 = vunpack.c.l.b16 %v270
      %v570 = vunpack.c.l.b16 %v271
      %v571 = vunpack.c.l.b16 %v272
      %v572 = vunpack.c.l.b16 %v273
      %v573 = vunpack.c.l.b16 %v274
      %v574 = vunpack.c.l.b16 %v275
      %v575 = vunpack.c.l.b16 %v276
      %v576 = vunpack.c.l.b16 %v277
      %v577 = vunpack.c.l.b16 %v278
      %v578 = vunpack.c.l.b16 %v279
      %v579 = vunpack.c.l.b16 %v280
      %v580 = vunpack.c.l.b16 %v281
      %v581 = vunpack.c.l.b16 %v282
      %v582 = vunpack.c.l.b16 %v283
      %v583 = vunpack.c.l.b16 %v284
      %v584 = vunpack.c.l.b16 %v285
      %v585 = vunpack.c.l.b16 %v286
      %v586 = vunpack.c.l.b16 %v287
      %v587 = vunpack.c.l.b16 %v288
      %v588 = vunpack.c.l.b16 %v289
      %v589 = vunpack.c.l.b16 %v290
      %v590 = vunpack.c.l.b16 %v291
      %v591 = vunpack.c.l.b16 %v292
      %v592 = vunpack.c.l.b16 %v293
      %v593 = vunpack.c.l.b16 %v294
      %v594 = vunpack.c.l.b16 %v295
      %v595 = vunpack.c.l.b16 %v296
      %v596 = vunpack.c.l.b16 %v297
      %v597 = vunpack.c.l.b16 %v298
      %v598 = vunpack.c.l.b16 %v299
      %v599 = vunpack.c.l.b16 %v300
      %v600 = vunpack.c.l.b16 %v301
      %v601 = vunpack.c.l.b16 %v302
      %v602 = vunpack.c.l.b16 %v303
      %v603 = vunpack.c.l.b16 %v304
      %v604 = vunpack.c.l.b16 %v305
      %v605 = vunpack.c.l.b16 %v306
      %v606 = vunpack.c.l.b16 %v307
      %v607 = vunpack.c.l.b16 %v308
      %v608 = vunpack.c.l.b16 %v309
      %v609 = vunpack.c.l.b16 %v310
      %v610 = vunpack.c.l.b16 %v311
      %v611 = vunpack.c.l.b16 %v312
      %v612 = vpack.c.b16 %v475, %v474
      %v613 = vpack.c.b16 %v477, %v476
      %v614 = vpack.c.b16 %v479, %v478
      %v615 = vpack.c.b16 %v481, %v480
      %v616 = vpack.c.b16 %v483, %v482
      %v617 = vpack.c.b16 %v485, %v484
      %v618 = vpack.c.b16 %v487, %v486
      %v619 = vpack.c.b16 %v489, %v488
      %v620 = vpack.c.b16 %v491, %v490
      %v621 = vpack.c.b16 %v493, %v492
      %v622 = vpack.c.b16 %v495, %v494
      %v623 = vpack.c.b16 %v497, %v496
      %v624 = vpack.c.b16 %v499, %v498
      %v625 = vpack.c.b16 %v501, %v500
      %v626 = vpack.c.b16 %v503, %v502
      %v627 = vpack.c.b16 %v505, %v504
      %v628 = vpack.c.b16 %v507, %v506
      %v629 = vpack.c.b16 %v509, %v508
      %v630 = vpack.c.b16 %v511, %v510
      %v631 = vpack.c.b16 %v513, %v512
      %v632 = vpack.c.b16 %v515, %v514
      %v633 = vpack.c.b16 %v517, %v516
      %v634 = vpack.c.b16 %v519, %v518
      %v635 = vpack.c.b16 %v521, %v520
      %v636 = vpack.c.b16 %v523, %v522
      %v637 = vpack.c.b16 %v525, %v524
      %v638 = vpack.c.b16 %v527, %v526
      %v639 = vpack.c.b16 %v529, %v528
      %v640 = vpack.c.b16 %v531, %v530
      %v641 = vpack.c.b16 %v533, %v532
      %v642 = vpack.c.b16 %v535, %v534
      %v643 = vpack.c.b16 %v537, %v536
      %v644 = vpack.c.b16 %v539, %v538
      %v645 = vpack.c.b16 %v541, %v540
      %v646 = vpack.c.b16 %v543, %v542
      %v647 = vpack.c.b16 %v545, %v544
      %v648 = vpack.c.b16 %v547, %v546
      %v649 = vpack.c.b16 %v549, %v548
      %v650 = vpack.c.b16 %v551, %v550
      %v651 = vpack.c.b16 %v553, %v552
      %v652 = vpack.c.b16 %v555, %v554
      %v653 = vpack.c.b16 %v557, %v556
      %v654 = vpack.c.b16 %v559, %v558
      %v655 = vpack.c.b16 %v561, %v560
      %v656 = vpack.c.b16 %v563, %v562
      %v657 = vpack.c.b16 %v565, %v564
      %v658 = vpack.c.b16 %v567, %v566
      %v659 = vpack.c.b16 %v569, %v568
      %v660 = vpack.c.b16 %v571, %v570
      %v661 = vpack.c.b16 %v573, %v572
      %v662 = vpack.c.b16 %v575, %v574
      %v663 = vpack.c.b16 %v577, %v576
      %v664 = vpack.c.b16 %v579, %v578
      %v665 = vpack.c.b16 %v581, %v580
      %v666 = vpack.c.b16 %v583, %v582
      %v667 = vpack.c.b16 %v585, %v584
      %v668 = vpack.c.b16 %v587, %v586
      %v669 = vpack.c.b16 %v589, %v588
      %v670 = vpack.c.b16 %v591, %v590
      %v671 = vpack.c.b16 %v593, %v592
      %v672 = vpack.c.b16 %v595, %v594
      %v673 = vpack.c.b16 %v597, %v596
      %v674 = vpack.c.b16 %v599, %v598
      %v675 = vpack.c.b16 %v601, %v600
      %v676 = vpack.c.b16 %v603, %v602
      %v677 = vpack.c.b16 %v605, %v604
      %v678 = vpack.c.b16 %v607, %v606
      %v679 = vpack.c.b16 %v609, %v608
      %v680 = vpack.c.b16 %v611, %v610
      %v766 = vunpack.c.l.b16 %v313
      %v767 = vunpack.c.l.b16 %v314
      %v768 = vunpack.c.l.b16 %v315
      %v769 = vunpack.c.l.b16 %v316
      %v770 = vunpack.c.l.b16 %v317
      %v771 = vunpack.c.l.b16 %v318
      %v772 = vunpack.c.l.b16 %v319
      %v773 = vunpack.c.l.b16 %v320
      %v774 = vunpack.c.l.b16 %v321
      %v775 = vunpack.c.l.b16 %v322
      %v776 = vunpack.c.l.b16 %v323
      %v777 = vunpack.c.l.b16 %v324
      %v778 = vunpack.c.l.b16 %v325
      %v779 = vunpack.c.l.b16 %v326
      %v780 = vunpack.c.l.b16 %v327
      %v781 = vunpack.c.l.b16 %v328
      %v782 = vpack.c.b16 %v767, %v766
      %v783 = vpack.c.b16 %v769, %v768
      %v784 = vpack.c.b16 %v771, %v770
      %v785 = vpack.c.b16 %v773, %v772
      %v786 = vpack.c.b16 %v775, %v774
      %v787 = vpack.c.b16 %v777, %v776
      %v788 = vpack.c.b16 %v779, %v778
      %v789 = vpack.c.b16 %v781, %v780
      %798 = vmatprep.subr.bf16.mxu0 0
      %799 = vmatpush1.bf16.msra.mxu0 %v789
      %800 = vmatprep.subr.bf16.mxu0 0
      %801 = vmatpush1.bf16.msra.mxu0 %v788
      %802 = vmatprep.subr.bf16.mxu0 0
      %803 = vmatpush1.bf16.msra.mxu0 %v787
      %804 = vmatprep.subr.bf16.mxu0 0
      %805 = vmatpush1.bf16.msra.mxu0 %v786
      %806 = vmatprep.subr.bf16.mxu0 0
      %807 = vmatpush1.bf16.msra.mxu0 %v785
      %808 = vmatprep.subr.bf16.mxu0 0
      %809 = vmatpush1.bf16.msra.mxu0 %v784
      %810 = vmatprep.subr.bf16.mxu0 0
      %811 = vmatpush1.bf16.msra.mxu0 %v783
      %812 = vmatprep.subr.bf16.mxu0 0
      %813 = vmatpush1.bf16.msra.mxu0 %v782
      %814 = vmatprep.subr.bf16.mxu0 0
      %815 = vmatpush2.bf16.msra.mxu0 0
      %816 = vmatprep.subr.bf16.mxu0 0
      %817 = vmatpush2.bf16.msra.mxu0 0
      %818 = vmatprep.subr.bf16.mxu0 0
      %819 = vmatpush2.bf16.msra.mxu0 0
      %820 = vmatprep.subr.bf16.mxu0 0
      %821 = vmatpush2.bf16.msra.mxu0 0
      %822 = vmatprep.subr.bf16.mxu0 0
      %823 = vmatpush2.bf16.msra.mxu0 0
      %824 = vmatprep.subr.bf16.mxu0 0
      %825 = vmatpush2.bf16.msra.mxu0 0
      %826 = vmatprep.subr.bf16.mxu0 0
      %827 = vmatpush2.bf16.msra.mxu0 0
      %828 = vmatprep.subr.bf16.mxu0 0
      %829 = vmatpush2.bf16.msra.mxu0 0
      %830 = vmatprep.mubr.bf16.mxu0 0
      %831 = vmatmul.mubr.bf16.gmra.mxu0 %v612
      %v832 = vpop.f32.mrf.mxu0
      %v833 = vadd.f32 %v334, %v832
      %v834 = vpop.f32.mrf.mxu0
      %v835 = vpop.f32.mrf.mxu0
      %v836 = vadd.f32 %v334, %v835
      %v837 = vpop.f32.mrf.mxu0
      %838 = vmatprep.mubr.bf16.mxu0 0
      %839 = vmatmul.mubr.bf16.gmra.mxu0 %v613
      %v840 = vpop.f32.mrf.mxu0
      %v841 = vadd.f32 %v334, %v840
      %v842 = vpop.f32.mrf.mxu0
      %v843 = vpop.f32.mrf.mxu0
      %v844 = vadd.f32 %v334, %v843
      %v845 = vpop.f32.mrf.mxu0
      %846 = vmatprep.mubr.bf16.mxu0 0
      %847 = vmatmul.mubr.bf16.gmra.mxu0 %v614
      %v848 = vpop.f32.mrf.mxu0
      %v849 = vadd.f32 %v334, %v848
      %v850 = vpop.f32.mrf.mxu0
      %v851 = vpop.f32.mrf.mxu0
      %v852 = vadd.f32 %v334, %v851
      %v853 = vpop.f32.mrf.mxu0
      %854 = vmatprep.mubr.bf16.mxu0 0
      %855 = vmatmul.mubr.bf16.gmra.mxu0 %v615
      %v856 = vpop.f32.mrf.mxu0
      %v857 = vadd.f32 %v334, %v856
      %v858 = vpop.f32.mrf.mxu0
      %v859 = vpop.f32.mrf.mxu0
      %v860 = vadd.f32 %v334, %v859
      %v861 = vpop.f32.mrf.mxu0
      %862 = vmatprep.mubr.bf16.mxu0 0
      %863 = vmatmul.mubr.bf16.gmra.mxu0 %v616
      %v864 = vpop.f32.mrf.mxu0
      %v865 = vadd.f32 %v334, %v864
      %v866 = vpop.f32.mrf.mxu0
      %v867 = vpop.f32.mrf.mxu0
      %v868 = vadd.f32 %v334, %v867
      %v869 = vpop.f32.mrf.mxu0
      %870 = vmatprep.mubr.bf16.mxu0 0
      %871 = vmatmul.mubr.bf16.gmra.mxu0 %v617
      %v872 = vpop.f32.mrf.mxu0
      %v873 = vadd.f32 %v334, %v872
      %v874 = vpop.f32.mrf.mxu0
      %v875 = vpop.f32.mrf.mxu0
      %v876 = vadd.f32 %v334, %v875
      %v877 = vpop.f32.mrf.mxu0
      %878 = vmatprep.mubr.bf16.mxu0 0
      %879 = vmatmul.mubr.bf16.gmra.mxu0 %v618
      %v880 = vpop.f32.mrf.mxu0
      %v881 = vadd.f32 %v334, %v880
      %v882 = vpop.f32.mrf.mxu0
      %v883 = vpop.f32.mrf.mxu0
      %v884 = vadd.f32 %v334, %v883
      %v885 = vpop.f32.mrf.mxu0
      %886 = vmatprep.mubr.bf16.mxu0 0
      %887 = vmatmul.mubr.bf16.gmra.mxu0 %v619
      %v888 = vpop.f32.mrf.mxu0
      %v889 = vadd.f32 %v334, %v888
      %v890 = vpop.f32.mrf.mxu0
      %v891 = vpop.f32.mrf.mxu0
      %v892 = vadd.f32 %v334, %v891
      %v893 = vpop.f32.mrf.mxu0
      %894 = vmatprep.mubr.bf16.mxu0 0
      %895 = vmatmul.mubr.bf16.gmra.mxu0 %v620
      %v896 = vpop.f32.mrf.mxu0
      %v897 = vadd.f32 %v334, %v896
      %v898 = vpop.f32.mrf.mxu0
      %v899 = vpop.f32.mrf.mxu0
      %v900 = vadd.f32 %v334, %v899
      %v901 = vpop.f32.mrf.mxu0
      %902 = vmatprep.mubr.bf16.mxu0 0
      %903 = vmatmul.mubr.bf16.gmra.mxu0 %v621
      %v904 = vpop.f32.mrf.mxu0
      %v905 = vadd.f32 %v334, %v904
      %v906 = vpop.f32.mrf.mxu0
      %v907 = vpop.f32.mrf.mxu0
      %v908 = vadd.f32 %v334, %v907
      %v909 = vpop.f32.mrf.mxu0
      %910 = vmatprep.mubr.bf16.mxu0 0
      %911 = vmatmul.mubr.bf16.gmra.mxu0 %v622
      %v912 = vpop.f32.mrf.mxu0
      %v913 = vadd.f32 %v334, %v912
      %v914 = vpop.f32.mrf.mxu0
      %v915 = vpop.f32.mrf.mxu0
      %v916 = vadd.f32 %v334, %v915
      %v917 = vpop.f32.mrf.mxu0
      %918 = vmatprep.mubr.bf16.mxu0 0
      %919 = vmatmul.mubr.bf16.gmra.mxu0 %v623
      %v920 = vpop.f32.mrf.mxu0
      %v921 = vadd.f32 %v334, %v920
      %v922 = vpop.f32.mrf.mxu0
      %v923 = vpop.f32.mrf.mxu0
      %v924 = vadd.f32 %v334, %v923
      %v925 = vpop.f32.mrf.mxu0
      %926 = vmatprep.mubr.bf16.mxu0 0
      %927 = vmatmul.mubr.bf16.gmra.mxu0 %v624
      %v928 = vpop.f32.mrf.mxu0
      %v929 = vadd.f32 %v334, %v928
      %v930 = vpop.f32.mrf.mxu0
      %v931 = vpop.f32.mrf.mxu0
      %v932 = vadd.f32 %v334, %v931
      %v933 = vpop.f32.mrf.mxu0
      %934 = vmatprep.mubr.bf16.mxu0 0
      %935 = vmatmul.mubr.bf16.gmra.mxu0 %v625
      %v936 = vpop.f32.mrf.mxu0
      %v937 = vadd.f32 %v334, %v936
      %v938 = vpop.f32.mrf.mxu0
      %v939 = vpop.f32.mrf.mxu0
      %v940 = vadd.f32 %v334, %v939
      %v941 = vpop.f32.mrf.mxu0
      %942 = vmatprep.mubr.bf16.mxu0 0
      %943 = vmatmul.mubr.bf16.gmra.mxu0 %v626
      %v944 = vpop.f32.mrf.mxu0
      %v945 = vadd.f32 %v334, %v944
      %v946 = vpop.f32.mrf.mxu0
      %v947 = vpop.f32.mrf.mxu0
      %v948 = vadd.f32 %v334, %v947
      %v949 = vpop.f32.mrf.mxu0
      %950 = vmatprep.mubr.bf16.mxu0 0
      %951 = vmatmul.mubr.bf16.gmra.mxu0 %v627
      %v952 = vpop.f32.mrf.mxu0
      %v953 = vadd.f32 %v334, %v952
      %v954 = vpop.f32.mrf.mxu0
      %v955 = vpop.f32.mrf.mxu0
      %v956 = vadd.f32 %v334, %v955
      %v957 = vpop.f32.mrf.mxu0
      %958 = vmatprep.mubr.bf16.mxu0 0
      %959 = vmatmul.mubr.bf16.gmra.mxu0 %v628
      %v960 = vpop.f32.mrf.mxu0
      %v961 = vadd.f32 %v334, %v960
      %v962 = vpop.f32.mrf.mxu0
      %v963 = vpop.f32.mrf.mxu0
      %v964 = vadd.f32 %v334, %v963
      %v965 = vpop.f32.mrf.mxu0
      %966 = vmatprep.mubr.bf16.mxu0 0
      %967 = vmatmul.mubr.bf16.gmra.mxu0 %v629
      %v968 = vpop.f32.mrf.mxu0
      %v969 = vadd.f32 %v334, %v968
      %v970 = vpop.f32.mrf.mxu0
      %v971 = vpop.f32.mrf.mxu0
      %v972 = vadd.f32 %v334, %v971
      %v973 = vpop.f32.mrf.mxu0
      %974 = vmatprep.mubr.bf16.mxu0 0
      %975 = vmatmul.mubr.bf16.gmra.mxu0 %v630
      %v976 = vpop.f32.mrf.mxu0
      %v977 = vadd.f32 %v334, %v976
      %v978 = vpop.f32.mrf.mxu0
      %v979 = vpop.f32.mrf.mxu0
      %v980 = vadd.f32 %v334, %v979
      %v981 = vpop.f32.mrf.mxu0
      %982 = vmatprep.mubr.bf16.mxu0 0
      %983 = vmatmul.mubr.bf16.gmra.mxu0 %v631
      %v984 = vpop.f32.mrf.mxu0
      %v985 = vadd.f32 %v334, %v984
      %v986 = vpop.f32.mrf.mxu0
      %v987 = vpop.f32.mrf.mxu0
      %v988 = vadd.f32 %v334, %v987
      %v989 = vpop.f32.mrf.mxu0
      %990 = vmatprep.mubr.bf16.mxu0 0
      %991 = vmatmul.mubr.bf16.gmra.mxu0 %v632
      %v992 = vpop.f32.mrf.mxu0
      %v993 = vadd.f32 %v334, %v992
      %v994 = vpop.f32.mrf.mxu0
      %v995 = vpop.f32.mrf.mxu0
      %v996 = vadd.f32 %v334, %v995
      %v997 = vpop.f32.mrf.mxu0
      %998 = vmatprep.mubr.bf16.mxu0 0
      %999 = vmatmul.mubr.bf16.gmra.mxu0 %v633
      %v1000 = vpop.f32.mrf.mxu0
      %v1001 = vadd.f32 %v334, %v1000
      %v1002 = vpop.f32.mrf.mxu0
      %v1003 = vpop.f32.mrf.mxu0
      %v1004 = vadd.f32 %v334, %v1003
      %v1005 = vpop.f32.mrf.mxu0
      %1006 = vmatprep.mubr.bf16.mxu0 0
      %1007 = vmatmul.mubr.bf16.gmra.mxu0 %v634
      %v1008 = vpop.f32.mrf.mxu0
      %v1009 = vadd.f32 %v334, %v1008
      %v1010 = vpop.f32.mrf.mxu0
      %v1011 = vpop.f32.mrf.mxu0
      %v1012 = vadd.f32 %v334, %v1011
      %v1013 = vpop.f32.mrf.mxu0
      %1014 = vmatprep.mubr.bf16.mxu0 0
      %1015 = vmatmul.mubr.bf16.gmra.mxu0 %v635
      %v1016 = vpop.f32.mrf.mxu0
      %v1017 = vadd.f32 %v334, %v1016
      %v1018 = vpop.f32.mrf.mxu0
      %v1019 = vpop.f32.mrf.mxu0
      %v1020 = vadd.f32 %v334, %v1019
      %v1021 = vpop.f32.mrf.mxu0
      %1022 = vmatprep.mubr.bf16.mxu0 0
      %1023 = vmatmul.mubr.bf16.gmra.mxu0 %v636
      %v1024 = vpop.f32.mrf.mxu0
      %v1025 = vadd.f32 %v334, %v1024
      %v1026 = vpop.f32.mrf.mxu0
      %v1027 = vpop.f32.mrf.mxu0
      %v1028 = vadd.f32 %v334, %v1027
      %v1029 = vpop.f32.mrf.mxu0
      %1030 = vmatprep.mubr.bf16.mxu0 0
      %1031 = vmatmul.mubr.bf16.gmra.mxu0 %v637
      %v1032 = vpop.f32.mrf.mxu0
      %v1033 = vadd.f32 %v334, %v1032
      %v1034 = vpop.f32.mrf.mxu0
      %v1035 = vpop.f32.mrf.mxu0
      %v1036 = vadd.f32 %v334, %v1035
      %v1037 = vpop.f32.mrf.mxu0
      %1038 = vmatprep.mubr.bf16.mxu0 0
      %1039 = vmatmul.mubr.bf16.gmra.mxu0 %v638
      %v1040 = vpop.f32.mrf.mxu0
      %v1041 = vadd.f32 %v334, %v1040
      %v1042 = vpop.f32.mrf.mxu0
      %v1043 = vpop.f32.mrf.mxu0
      %v1044 = vadd.f32 %v334, %v1043
      %v1045 = vpop.f32.mrf.mxu0
      %1046 = vmatprep.mubr.bf16.mxu0 0
      %1047 = vmatmul.mubr.bf16.gmra.mxu0 %v639
      %v1048 = vpop.f32.mrf.mxu0
      %v1049 = vadd.f32 %v334, %v1048
      %v1050 = vpop.f32.mrf.mxu0
      %v1051 = vpop.f32.mrf.mxu0
      %v1052 = vadd.f32 %v334, %v1051
      %v1053 = vpop.f32.mrf.mxu0
      %1054 = vmatprep.mubr.bf16.mxu0 0
      %1055 = vmatmul.mubr.bf16.gmra.mxu0 %v640
      %v1056 = vpop.f32.mrf.mxu0
      %v1057 = vadd.f32 %v334, %v1056
      %v1058 = vpop.f32.mrf.mxu0
      %v1059 = vpop.f32.mrf.mxu0
      %v1060 = vadd.f32 %v334, %v1059
      %v1061 = vpop.f32.mrf.mxu0
      %1062 = vmatprep.mubr.bf16.mxu0 0
      %1063 = vmatmul.mubr.bf16.gmra.mxu0 %v641
      %v1064 = vpop.f32.mrf.mxu0
      %v1065 = vadd.f32 %v334, %v1064
      %v1066 = vpop.f32.mrf.mxu0
      %v1067 = vpop.f32.mrf.mxu0
      %v1068 = vadd.f32 %v334, %v1067
      %v1069 = vpop.f32.mrf.mxu0
      %1070 = vmatprep.mubr.bf16.mxu0 0
      %1071 = vmatmul.mubr.bf16.gmra.mxu0 %v642
      %v1072 = vpop.f32.mrf.mxu0
      %v1073 = vadd.f32 %v334, %v1072
      %v1074 = vpop.f32.mrf.mxu0
      %v1075 = vpop.f32.mrf.mxu0
      %v1076 = vadd.f32 %v334, %v1075
      %v1077 = vpop.f32.mrf.mxu0
      %1078 = vmatprep.mubr.bf16.mxu0 0
      %1079 = vmatmul.mubr.bf16.gmra.mxu0 %v643
      %v1080 = vpop.f32.mrf.mxu0
      %v1081 = vadd.f32 %v334, %v1080
      %v1082 = vpop.f32.mrf.mxu0
      %v1083 = vpop.f32.mrf.mxu0
      %v1084 = vadd.f32 %v334, %v1083
      %v1085 = vpop.f32.mrf.mxu0
      %1086 = vmatprep.mubr.bf16.mxu0 0
      %1087 = vmatmul.mubr.bf16.gmra.mxu0 %v644
      %v1088 = vpop.f32.mrf.mxu0
      %v1089 = vadd.f32 %v334, %v1088
      %v1090 = vpop.f32.mrf.mxu0
      %v1091 = vpop.f32.mrf.mxu0
      %v1092 = vadd.f32 %v334, %v1091
      %v1093 = vpop.f32.mrf.mxu0
      %1094 = vmatprep.mubr.bf16.mxu0 0
      %1095 = vmatmul.mubr.bf16.gmra.mxu0 %v645
      %v1096 = vpop.f32.mrf.mxu0
      %v1097 = vadd.f32 %v334, %v1096
      %v1098 = vpop.f32.mrf.mxu0
      %v1099 = vpop.f32.mrf.mxu0
      %v1100 = vadd.f32 %v334, %v1099
      %v1101 = vpop.f32.mrf.mxu0
      %1102 = vmatprep.mubr.bf16.mxu0 0
      %1103 = vmatmul.mubr.bf16.gmra.mxu0 %v646
      %v1104 = vpop.f32.mrf.mxu0
      %v1105 = vadd.f32 %v334, %v1104
      %v1106 = vpop.f32.mrf.mxu0
      %v1107 = vpop.f32.mrf.mxu0
      %v1108 = vadd.f32 %v334, %v1107
      %v1109 = vpop.f32.mrf.mxu0
      %1110 = vmatprep.mubr.bf16.mxu0 0
      %1111 = vmatmul.mubr.bf16.gmra.mxu0 %v647
      %v1112 = vpop.f32.mrf.mxu0
      %v1113 = vadd.f32 %v334, %v1112
      %v1114 = vpop.f32.mrf.mxu0
      %v1115 = vpop.f32.mrf.mxu0
      %v1116 = vadd.f32 %v334, %v1115
      %v1117 = vpop.f32.mrf.mxu0
      %1118 = vmatprep.mubr.bf16.mxu0 0
      %1119 = vmatmul.mubr.bf16.gmra.mxu0 %v648
      %v1120 = vpop.f32.mrf.mxu0
      %v1121 = vadd.f32 %v334, %v1120
      %v1122 = vpop.f32.mrf.mxu0
      %v1123 = vpop.f32.mrf.mxu0
      %v1124 = vadd.f32 %v334, %v1123
      %v1125 = vpop.f32.mrf.mxu0
      %1126 = vmatprep.mubr.bf16.mxu0 0
      %1127 = vmatmul.mubr.bf16.gmra.mxu0 %v649
      %v1128 = vpop.f32.mrf.mxu0
      %v1129 = vadd.f32 %v334, %v1128
      %v1130 = vpop.f32.mrf.mxu0
      %v1131 = vpop.f32.mrf.mxu0
      %v1132 = vadd.f32 %v334, %v1131
      %v1133 = vpop.f32.mrf.mxu0
      %1134 = vmatprep.mubr.bf16.mxu0 0
      %1135 = vmatmul.mubr.bf16.gmra.mxu0 %v650
      %v1136 = vpop.f32.mrf.mxu0
      %v1137 = vadd.f32 %v334, %v1136
      %v1138 = vpop.f32.mrf.mxu0
      %v1139 = vpop.f32.mrf.mxu0
      %v1140 = vadd.f32 %v334, %v1139
      %v1141 = vpop.f32.mrf.mxu0
      %1142 = vmatprep.mubr.bf16.mxu0 0
      %1143 = vmatmul.mubr.bf16.gmra.mxu0 %v651
      %v1144 = vpop.f32.mrf.mxu0
      %v1145 = vadd.f32 %v334, %v1144
      %v1146 = vpop.f32.mrf.mxu0
      %v1147 = vpop.f32.mrf.mxu0
      %v1148 = vadd.f32 %v334, %v1147
      %v1149 = vpop.f32.mrf.mxu0
      %1150 = vmatprep.mubr.bf16.mxu0 0
      %1151 = vmatmul.mubr.bf16.gmra.mxu0 %v652
      %v1152 = vpop.f32.mrf.mxu0
      %v1153 = vadd.f32 %v334, %v1152
      %v1154 = vpop.f32.mrf.mxu0
      %v1155 = vpop.f32.mrf.mxu0
      %v1156 = vadd.f32 %v334, %v1155
      %v1157 = vpop.f32.mrf.mxu0
      %1158 = vmatprep.mubr.bf16.mxu0 0
      %1159 = vmatmul.mubr.bf16.gmra.mxu0 %v653
      %v1160 = vpop.f32.mrf.mxu0
      %v1161 = vadd.f32 %v334, %v1160
      %v1162 = vpop.f32.mrf.mxu0
      %v1163 = vpop.f32.mrf.mxu0
      %v1164 = vadd.f32 %v334, %v1163
      %v1165 = vpop.f32.mrf.mxu0
      %1166 = vmatprep.mubr.bf16.mxu0 0
      %1167 = vmatmul.mubr.bf16.gmra.mxu0 %v654
      %v1168 = vpop.f32.mrf.mxu0
      %v1169 = vadd.f32 %v334, %v1168
      %v1170 = vpop.f32.mrf.mxu0
      %v1171 = vpop.f32.mrf.mxu0
      %v1172 = vadd.f32 %v334, %v1171
      %v1173 = vpop.f32.mrf.mxu0
      %1174 = vmatprep.mubr.bf16.mxu0 0
      %1175 = vmatmul.mubr.bf16.gmra.mxu0 %v655
      %v1176 = vpop.f32.mrf.mxu0
      %v1177 = vadd.f32 %v334, %v1176
      %v1178 = vpop.f32.mrf.mxu0
      %v1179 = vpop.f32.mrf.mxu0
      %v1180 = vadd.f32 %v334, %v1179
      %v1181 = vpop.f32.mrf.mxu0
      %1182 = vmatprep.mubr.bf16.mxu0 0
      %1183 = vmatmul.mubr.bf16.gmra.mxu0 %v656
      %v1184 = vpop.f32.mrf.mxu0
      %v1185 = vadd.f32 %v334, %v1184
      %v1186 = vpop.f32.mrf.mxu0
      %v1187 = vpop.f32.mrf.mxu0
      %v1188 = vadd.f32 %v334, %v1187
      %v1189 = vpop.f32.mrf.mxu0
      %1190 = vmatprep.mubr.bf16.mxu0 0
      %1191 = vmatmul.mubr.bf16.gmra.mxu0 %v657
      %v1192 = vpop.f32.mrf.mxu0
      %v1193 = vadd.f32 %v334, %v1192
      %v1194 = vpop.f32.mrf.mxu0
      %v1195 = vpop.f32.mrf.mxu0
      %v1196 = vadd.f32 %v334, %v1195
      %v1197 = vpop.f32.mrf.mxu0
      %1198 = vmatprep.mubr.bf16.mxu0 0
      %1199 = vmatmul.mubr.bf16.gmra.mxu0 %v658
      %v1200 = vpop.f32.mrf.mxu0
      %v1201 = vadd.f32 %v334, %v1200
      %v1202 = vpop.f32.mrf.mxu0
      %v1203 = vpop.f32.mrf.mxu0
      %v1204 = vadd.f32 %v334, %v1203
      %v1205 = vpop.f32.mrf.mxu0
      %1206 = vmatprep.mubr.bf16.mxu0 0
      %1207 = vmatmul.mubr.bf16.gmra.mxu0 %v659
      %v1208 = vpop.f32.mrf.mxu0
      %v1209 = vadd.f32 %v334, %v1208
      %v1210 = vpop.f32.mrf.mxu0
      %v1211 = vpop.f32.mrf.mxu0
      %v1212 = vadd.f32 %v334, %v1211
      %v1213 = vpop.f32.mrf.mxu0
      %1214 = vmatprep.mubr.bf16.mxu0 0
      %1215 = vmatmul.mubr.bf16.gmra.mxu0 %v660
      %v1216 = vpop.f32.mrf.mxu0
      %v1217 = vadd.f32 %v334, %v1216
      %v1218 = vpop.f32.mrf.mxu0
      %v1219 = vpop.f32.mrf.mxu0
      %v1220 = vadd.f32 %v334, %v1219
      %v1221 = vpop.f32.mrf.mxu0
      %1222 = vmatprep.mubr.bf16.mxu0 0
      %1223 = vmatmul.mubr.bf16.gmra.mxu0 %v661
      %v1224 = vpop.f32.mrf.mxu0
      %v1225 = vadd.f32 %v334, %v1224
      %v1226 = vpop.f32.mrf.mxu0
      %v1227 = vpop.f32.mrf.mxu0
      %v1228 = vadd.f32 %v334, %v1227
      %v1229 = vpop.f32.mrf.mxu0
      %1230 = vmatprep.mubr.bf16.mxu0 0
      %1231 = vmatmul.mubr.bf16.gmra.mxu0 %v662
      %v1232 = vpop.f32.mrf.mxu0
      %v1233 = vadd.f32 %v334, %v1232
      %v1234 = vpop.f32.mrf.mxu0
      %v1235 = vpop.f32.mrf.mxu0
      %v1236 = vadd.f32 %v334, %v1235
      %v1237 = vpop.f32.mrf.mxu0
      %1238 = vmatprep.mubr.bf16.mxu0 0
      %1239 = vmatmul.mubr.bf16.gmra.mxu0 %v663
      %v1240 = vpop.f32.mrf.mxu0
      %v1241 = vadd.f32 %v334, %v1240
      %v1242 = vpop.f32.mrf.mxu0
      %v1243 = vpop.f32.mrf.mxu0
      %v1244 = vadd.f32 %v334, %v1243
      %v1245 = vpop.f32.mrf.mxu0
      %1246 = vmatprep.mubr.bf16.mxu0 0
      %1247 = vmatmul.mubr.bf16.gmra.mxu0 %v664
      %v1248 = vpop.f32.mrf.mxu0
      %v1249 = vadd.f32 %v334, %v1248
      %v1250 = vpop.f32.mrf.mxu0
      %v1251 = vpop.f32.mrf.mxu0
      %v1252 = vadd.f32 %v334, %v1251
      %v1253 = vpop.f32.mrf.mxu0
      %1254 = vmatprep.mubr.bf16.mxu0 0
      %1255 = vmatmul.mubr.bf16.gmra.mxu0 %v665
      %v1256 = vpop.f32.mrf.mxu0
      %v1257 = vadd.f32 %v334, %v1256
      %v1258 = vpop.f32.mrf.mxu0
      %v1259 = vpop.f32.mrf.mxu0
      %v1260 = vadd.f32 %v334, %v1259
      %v1261 = vpop.f32.mrf.mxu0
      %1262 = vmatprep.mubr.bf16.mxu0 0
      %1263 = vmatmul.mubr.bf16.gmra.mxu0 %v666
      %v1264 = vpop.f32.mrf.mxu0
      %v1265 = vadd.f32 %v334, %v1264
      %v1266 = vpop.f32.mrf.mxu0
      %v1267 = vpop.f32.mrf.mxu0
      %v1268 = vadd.f32 %v334, %v1267
      %v1269 = vpop.f32.mrf.mxu0
      %1270 = vmatprep.mubr.bf16.mxu0 0
      %1271 = vmatmul.mubr.bf16.gmra.mxu0 %v667
      %v1272 = vpop.f32.mrf.mxu0
      %v1273 = vadd.f32 %v334, %v1272
      %v1274 = vpop.f32.mrf.mxu0
      %v1275 = vpop.f32.mrf.mxu0
      %v1276 = vadd.f32 %v334, %v1275
      %v1277 = vpop.f32.mrf.mxu0
      %1278 = vmatprep.mubr.bf16.mxu0 0
      %1279 = vmatmul.mubr.bf16.gmra.mxu0 %v668
      %v1280 = vpop.f32.mrf.mxu0
      %v1281 = vadd.f32 %v334, %v1280
      %v1282 = vpop.f32.mrf.mxu0
      %v1283 = vpop.f32.mrf.mxu0
      %v1284 = vadd.f32 %v334, %v1283
      %v1285 = vpop.f32.mrf.mxu0
      %1286 = vmatprep.mubr.bf16.mxu0 0
      %1287 = vmatmul.mubr.bf16.gmra.mxu0 %v669
      %v1288 = vpop.f32.mrf.mxu0
      %v1289 = vadd.f32 %v334, %v1288
      %v1290 = vpop.f32.mrf.mxu0
      %v1291 = vpop.f32.mrf.mxu0
      %v1292 = vadd.f32 %v334, %v1291
      %v1293 = vpop.f32.mrf.mxu0
      %1294 = vmatprep.mubr.bf16.mxu0 0
      %1295 = vmatmul.mubr.bf16.gmra.mxu0 %v670
      %v1296 = vpop.f32.mrf.mxu0
      %v1297 = vadd.f32 %v334, %v1296
      %v1298 = vpop.f32.mrf.mxu0
      %v1299 = vpop.f32.mrf.mxu0
      %v1300 = vadd.f32 %v334, %v1299
      %v1301 = vpop.f32.mrf.mxu0
      %1302 = vmatprep.mubr.bf16.mxu0 0
      %1303 = vmatmul.mubr.bf16.gmra.mxu0 %v671
      %v1304 = vpop.f32.mrf.mxu0
      %v1305 = vadd.f32 %v334, %v1304
      %v1306 = vpop.f32.mrf.mxu0
      %v1307 = vpop.f32.mrf.mxu0
      %v1308 = vadd.f32 %v334, %v1307
      %v1309 = vpop.f32.mrf.mxu0
      %1310 = vmatprep.mubr.bf16.mxu0 0
      %1311 = vmatmul.mubr.bf16.gmra.mxu0 %v672
      %v1312 = vpop.f32.mrf.mxu0
      %v1313 = vadd.f32 %v334, %v1312
      %v1314 = vpop.f32.mrf.mxu0
      %v1315 = vpop.f32.mrf.mxu0
      %v1316 = vadd.f32 %v334, %v1315
      %v1317 = vpop.f32.mrf.mxu0
      %1318 = vmatprep.mubr.bf16.mxu0 0
      %1319 = vmatmul.mubr.bf16.gmra.mxu0 %v673
      %v1320 = vpop.f32.mrf.mxu0
      %v1321 = vadd.f32 %v334, %v1320
      %v1322 = vpop.f32.mrf.mxu0
      %v1323 = vpop.f32.mrf.mxu0
      %v1324 = vadd.f32 %v334, %v1323
      %v1325 = vpop.f32.mrf.mxu0
      %1326 = vmatprep.mubr.bf16.mxu0 0
      %1327 = vmatmul.mubr.bf16.gmra.mxu0 %v674
      %v1328 = vpop.f32.mrf.mxu0
      %v1329 = vadd.f32 %v334, %v1328
      %v1330 = vpop.f32.mrf.mxu0
      %v1331 = vpop.f32.mrf.mxu0
      %v1332 = vadd.f32 %v334, %v1331
      %v1333 = vpop.f32.mrf.mxu0
      %1334 = vmatprep.mubr.bf16.mxu0 0
      %1335 = vmatmul.mubr.bf16.gmra.mxu0 %v675
      %v1336 = vpop.f32.mrf.mxu0
      %v1337 = vadd.f32 %v334, %v1336
      %v1338 = vpop.f32.mrf.mxu0
      %v1339 = vpop.f32.mrf.mxu0
      %v1340 = vadd.f32 %v334, %v1339
      %v1341 = vpop.f32.mrf.mxu0
      %1342 = vmatprep.mubr.bf16.mxu0 0
      %1343 = vmatmul.mubr.bf16.gmra.mxu0 %v676
      %v1344 = vpop.f32.mrf.mxu0
      %v1345 = vadd.f32 %v334, %v1344
      %v1346 = vpop.f32.mrf.mxu0
      %v1347 = vpop.f32.mrf.mxu0
      %v1348 = vadd.f32 %v334, %v1347
      %v1349 = vpop.f32.mrf.mxu0
      %1350 = vmatprep.mubr.bf16.mxu0 0
      %1351 = vmatmul.mubr.bf16.gmra.mxu0 %v677
      %v1352 = vpop.f32.mrf.mxu0
      %v1353 = vadd.f32 %v334, %v1352
      %v1354 = vpop.f32.mrf.mxu0
      %v1355 = vpop.f32.mrf.mxu0
      %v1356 = vadd.f32 %v334, %v1355
      %v1357 = vpop.f32.mrf.mxu0
      %1358 = vmatprep.mubr.bf16.mxu0 0
      %1359 = vmatmul.mubr.bf16.gmra.mxu0 %v678
      %v1360 = vpop.f32.mrf.mxu0
      %v1361 = vadd.f32 %v334, %v1360
      %v1362 = vpop.f32.mrf.mxu0
      %v1363 = vpop.f32.mrf.mxu0
      %v1364 = vadd.f32 %v334, %v1363
      %v1365 = vpop.f32.mrf.mxu0
      %1366 = vmatprep.mubr.bf16.mxu0 0
      %1367 = vmatmul.mubr.bf16.gmra.mxu0 %v679
      %v1368 = vpop.f32.mrf.mxu0
      %v1369 = vadd.f32 %v334, %v1368
      %v1370 = vpop.f32.mrf.mxu0
      %v1371 = vpop.f32.mrf.mxu0
      %v1372 = vadd.f32 %v334, %v1371
      %v1373 = vpop.f32.mrf.mxu0
      %1374 = vmatprep.mubr.bf16.mxu0 0
      %1375 = vmatmul.mubr.bf16.gmra.mxu0 %v680
      %v1376 = vpop.f32.mrf.mxu0
      %v1377 = vadd.f32 %v334, %v1376
      %v1378 = vpop.f32.mrf.mxu0
      %v1379 = vpop.f32.mrf.mxu0
      %v1380 = vadd.f32 %v334, %v1379
      %v1381 = vpop.f32.mrf.mxu0
      %1382 = vdwg.mxu0
      %1383 = vst [vmem:[%s172] sm:$0xff] %v833
      %1384 = vst [vmem:[%s172 + $0x8] sm:$0xff] %v836
      %1385 = vst [vmem:[%s172 + $0x10] sm:$0xff] %v841
      %1386 = vst [vmem:[%s172 + $0x18] sm:$0xff] %v844
      %1387 = vst [vmem:[%s172 + $0x20] sm:$0xff] %v849
      %1388 = vst [vmem:[%s172 + $0x28] sm:$0xff] %v852
      %1389 = vst [vmem:[%s172 + $0x30] sm:$0xff] %v857
      %1390 = vst [vmem:[%s172 + $0x38] sm:$0xff] %v860
      %1391 = vst [vmem:[%s172 + $0x40] sm:$0xff] %v865
      %1392 = vst [vmem:[%s172 + $0x48] sm:$0xff] %v868
      %1393 = vst [vmem:[%s172 + $0x50] sm:$0xff] %v873
      %1394 = vst [vmem:[%s172 + $0x58] sm:$0xff] %v876
      %1395 = vst [vmem:[%s172 + $0x60] sm:$0xff] %v881
      %1396 = vst [vmem:[%s172 + $0x68] sm:$0xff] %v884
      %1397 = vst [vmem:[%s172 + $0x70] sm:$0xff] %v889
      %1398 = vst [vmem:[%s172 + $0x78] sm:$0xff] %v892
      %1399 = vst [vmem:[%s172 + $0x80] sm:$0xff] %v897
      %1400 = vst [vmem:[%s172 + $0x88] sm:$0xff] %v900
      %1401 = vst [vmem:[%s172 + $0x90] sm:$0xff] %v905
      %1402 = vst [vmem:[%s172 + $0x98] sm:$0xff] %v908
      %1403 = vst [vmem:[%s172 + $0xa0] sm:$0xff] %v913
      %1404 = vst [vmem:[%s172 + $0xa8] sm:$0xff] %v916
      %1405 = vst [vmem:[%s172 + $0xb0] sm:$0xff] %v921
      %1406 = vst [vmem:[%s172 + $0xb8] sm:$0xff] %v924
      %1407 = vst [vmem:[%s172 + $0xc0] sm:$0xff] %v929
      %1408 = vst [vmem:[%s172 + $0xc8] sm:$0xff] %v932
      %1409 = vst [vmem:[%s172 + $0xd0] sm:$0xff] %v937
      %1410 = vst [vmem:[%s172 + $0xd8] sm:$0xff] %v940
      %1411 = vst [vmem:[%s172 + $0xe0] sm:$0xff] %v945
      %1412 = vst [vmem:[%s172 + $0xe8] sm:$0xff] %v948
      %1413 = vst [vmem:[%s172 + $0xf0] sm:$0xff] %v953
      %1414 = vst [vmem:[%s172 + $0xf8] sm:$0xff] %v956
      %1415 = vst [vmem:[%s172 + $0x100] sm:$0xff] %v961
      %1416 = vst [vmem:[%s172 + $0x108] sm:$0xff] %v964
      %1417 = vst [vmem:[%s172 + $0x110] sm:$0xff] %v969
      %1418 = vst [vmem:[%s172 + $0x118] sm:$0xff] %v972
      %1419 = vst [vmem:[%s172 + $0x120] sm:$0xff] %v977
      %1420 = vst [vmem:[%s172 + $0x128] sm:$0xff] %v980
      %1421 = vst [vmem:[%s172 + $0x130] sm:$0xff] %v985
      %1422 = vst [vmem:[%s172 + $0x138] sm:$0xff] %v988
      %1423 = vst [vmem:[%s172 + $0x140] sm:$0xff] %v993
      %1424 = vst [vmem:[%s172 + $0x148] sm:$0xff] %v996
      %1425 = vst [vmem:[%s172 + $0x150] sm:$0xff] %v1001
      %1426 = vst [vmem:[%s172 + $0x158] sm:$0xff] %v1004
      %1427 = vst [vmem:[%s172 + $0x160] sm:$0xff] %v1009
      %1428 = vst [vmem:[%s172 + $0x168] sm:$0xff] %v1012
      %1429 = vst [vmem:[%s172 + $0x170] sm:$0xff] %v1017
      %1430 = vst [vmem:[%s172 + $0x178] sm:$0xff] %v1020
      %1431 = vst [vmem:[%s172 + $0x180] sm:$0xff] %v1025
      %1432 = vst [vmem:[%s172 + $0x188] sm:$0xff] %v1028
      %1433 = vst [vmem:[%s172 + $0x190] sm:$0xff] %v1033
      %1434 = vst [vmem:[%s172 + $0x198] sm:$0xff] %v1036
      %1435 = vst [vmem:[%s172 + $0x1a0] sm:$0xff] %v1041
      %1436 = vst [vmem:[%s172 + $0x1a8] sm:$0xff] %v1044
      %1437 = vst [vmem:[%s172 + $0x1b0] sm:$0xff] %v1049
      %1438 = vst [vmem:[%s172 + $0x1b8] sm:$0xff] %v1052
      %1439 = vst [vmem:[%s172 + $0x1c0] sm:$0xff] %v1057
      %1440 = vst [vmem:[%s172 + $0x1c8] sm:$0xff] %v1060
      %1441 = vst [vmem:[%s172 + $0x1d0] sm:$0xff] %v1065
      %1442 = vst [vmem:[%s172 + $0x1d8] sm:$0xff] %v1068
      %1443 = vst [vmem:[%s172 + $0x1e0] sm:$0xff] %v1073
      %1444 = vst [vmem:[%s172 + $0x1e8] sm:$0xff] %v1076
      %1445 = vst [vmem:[%s172 + $0x1f0] sm:$0xff] %v1081
      %1446 = vst [vmem:[%s172 + $0x1f8] sm:$0xff] %v1084
      %1447 = vst [vmem:[%s172 + $0x200] sm:$0xff] %v1089
      %1448 = vst [vmem:[%s172 + $0x208] sm:$0xff] %v1092
      %1449 = vst [vmem:[%s172 + $0x210] sm:$0xff] %v1097
      %1450 = vst [vmem:[%s172 + $0x218] sm:$0xff] %v1100
      %1451 = vst [vmem:[%s172 + $0x220] sm:$0xff] %v1105
      %1452 = vst [vmem:[%s172 + $0x228] sm:$0xff] %v1108
      %1453 = vst [vmem:[%s172 + $0x230] sm:$0xff] %v1113
      %1454 = vst [vmem:[%s172 + $0x238] sm:$0xff] %v1116
      %1455 = vst [vmem:[%s172 + $0x240] sm:$0xff] %v1121
      %1456 = vst [vmem:[%s172 + $0x248] sm:$0xff] %v1124
      %1457 = vst [vmem:[%s172 + $0x250] sm:$0xff] %v1129
      %1458 = vst [vmem:[%s172 + $0x258] sm:$0xff] %v1132
      %1459 = vst [vmem:[%s172 + $0x260] sm:$0xff] %v1137
      %1460 = vst [vmem:[%s172 + $0x268] sm:$0xff] %v1140
      %1461 = vst [vmem:[%s172 + $0x270] sm:$0xff] %v1145
      %1462 = vst [vmem:[%s172 + $0x278] sm:$0xff] %v1148
      %1463 = vst [vmem:[%s172 + $0x280] sm:$0xff] %v1153
      %1464 = vst [vmem:[%s172 + $0x288] sm:$0xff] %v1156
      %1465 = vst [vmem:[%s172 + $0x290] sm:$0xff] %v1161
      %1466 = vst [vmem:[%s172 + $0x298] sm:$0xff] %v1164
      %1467 = vst [vmem:[%s172 + $0x2a0] sm:$0xff] %v1169
      %1468 = vst [vmem:[%s172 + $0x2a8] sm:$0xff] %v1172
      %1469 = vst [vmem:[%s172 + $0x2b0] sm:$0xff] %v1177
      %1470 = vst [vmem:[%s172 + $0x2b8] sm:$0xff] %v1180
      %1471 = vst [vmem:[%s172 + $0x2c0] sm:$0xff] %v1185
      %1472 = vst [vmem:[%s172 + $0x2c8] sm:$0xff] %v1188
      %1473 = vst [vmem:[%s172 + $0x2d0] sm:$0xff] %v1193
      %1474 = vst [vmem:[%s172 + $0x2d8] sm:$0xff] %v1196
      %1475 = vst [vmem:[%s172 + $0x2e0] sm:$0xff] %v1201
      %1476 = vst [vmem:[%s172 + $0x2e8] sm:$0xff] %v1204
      %1477 = vst [vmem:[%s172 + $0x2f0] sm:$0xff] %v1209
      %1478 = vst [vmem:[%s172 + $0x2f8] sm:$0xff] %v1212
      %1479 = vst [vmem:[%s172 + $0x300] sm:$0xff] %v1217
      %1480 = vst [vmem:[%s172 + $0x308] sm:$0xff] %v1220
      %1481 = vst [vmem:[%s172 + $0x310] sm:$0xff] %v1225
      %1482 = vst [vmem:[%s172 + $0x318] sm:$0xff] %v1228
      %1483 = vst [vmem:[%s172 + $0x320] sm:$0xff] %v1233
      %1484 = vst [vmem:[%s172 + $0x328] sm:$0xff] %v1236
      %1485 = vst [vmem:[%s172 + $0x330] sm:$0xff] %v1241
      %1486 = vst [vmem:[%s172 + $0x338] sm:$0xff] %v1244
      %1487 = vst [vmem:[%s172 + $0x340] sm:$0xff] %v1249
      %1488 = vst [vmem:[%s172 + $0x348] sm:$0xff] %v1252
      %1489 = vst [vmem:[%s172 + $0x350] sm:$0xff] %v1257
      %1490 = vst [vmem:[%s172 + $0x358] sm:$0xff] %v1260
      %1491 = vst [vmem:[%s172 + $0x360] sm:$0xff] %v1265
      %1492 = vst [vmem:[%s172 + $0x368] sm:$0xff] %v1268
      %1493 = vst [vmem:[%s172 + $0x370] sm:$0xff] %v1273
      %1494 = vst [vmem:[%s172 + $0x378] sm:$0xff] %v1276
      %1495 = vst [vmem:[%s172 + $0x380] sm:$0xff] %v1281
      %1496 = vst [vmem:[%s172 + $0x388] sm:$0xff] %v1284
      %1497 = vst [vmem:[%s172 + $0x390] sm:$0xff] %v1289
      %1498 = vst [vmem:[%s172 + $0x398] sm:$0xff] %v1292
      %1499 = vst [vmem:[%s172 + $0x3a0] sm:$0xff] %v1297
      %1500 = vst [vmem:[%s172 + $0x3a8] sm:$0xff] %v1300
      %1501 = vst [vmem:[%s172 + $0x3b0] sm:$0xff] %v1305
      %1502 = vst [vmem:[%s172 + $0x3b8] sm:$0xff] %v1308
      %1503 = vst [vmem:[%s172 + $0x3c0] sm:$0xff] %v1313
      %1504 = vst [vmem:[%s172 + $0x3c8] sm:$0xff] %v1316
      %1505 = vst [vmem:[%s172 + $0x3d0] sm:$0xff] %v1321
      %1506 = vst [vmem:[%s172 + $0x3d8] sm:$0xff] %v1324
      %1507 = vst [vmem:[%s172 + $0x3e0] sm:$0xff] %v1329
      %1508 = vst [vmem:[%s172 + $0x3e8] sm:$0xff] %v1332
      %1509 = vst [vmem:[%s172 + $0x3f0] sm:$0xff] %v1337
      %1510 = vst [vmem:[%s172 + $0x3f8] sm:$0xff] %v1340
      %1511 = vst [vmem:[%s172 + $0x400] sm:$0xff] %v1345
      %1512 = vst [vmem:[%s172 + $0x408] sm:$0xff] %v1348
      %1513 = vst [vmem:[%s172 + $0x410] sm:$0xff] %v1353
      %1514 = vst [vmem:[%s172 + $0x418] sm:$0xff] %v1356
      %1515 = vst [vmem:[%s172 + $0x420] sm:$0xff] %v1361
      %1516 = vst [vmem:[%s172 + $0x428] sm:$0xff] %v1364
      %1517 = vst [vmem:[%s172 + $0x430] sm:$0xff] %v1369
      %1518 = vst [vmem:[%s172 + $0x438] sm:$0xff] %v1372
      %1519 = vst [vmem:[%s172 + $0x440] sm:$0xff] %v1377
      %1520 = vst [vmem:[%s172 + $0x448] sm:$0xff] %v1380
      %s1521 = smul.u32 138, %s14
      %p1522 = scmp.lt.s32.totalorder %s1521, 275
      %s1523 = scalar_select %p1522, %s1521, 275
      %s1524 = smul.addr %s1523, 8
      %s1525 = scalar_lea.vmem %s3, %s1524
      // Predicated region
      $region33: #{conv_decoder_forward.9} parent=31 // pred_check
        %p1526 = pneg %p100
      $region34: #{conv_decoder_forward.9} parent=31 // pred_check_branch
        %1528 = sbr.rel (%p1526) target = $region36
      $region35: #{conv_decoder_forward.9} parent=31 // pred_region
        %s1529 = smul.u32 138, %s14
      $region36: #{conv_decoder_forward.9} parent=31 // pred_fallthru
        _
    $region32: #{conv_decoder_forward.9} parent=5 // pred_fallthru
      _
    %p1530 = scmp.le.s32.totalorder 2, %s9
    // Predicated region
    $region37: #{conv_decoder_forward.9} parent=5 // pred_check
      %p1531 = pneg %p1530
    $region38: #{conv_decoder_forward.9} parent=5 // pred_check_branch
      %1533 = sbr.rel (%p1531) target = $region40
    $region39: #{conv_decoder_forward.9} parent=5 // pred_region
      %s1534 = ssub.s32 %s9, 2
      // Predicated region
      $region41: #{conv_decoder_forward.9} parent=39 // pred_check
        %p1535 = pneg %p106
      $region42: #{conv_decoder_forward.9} parent=39 // pred_check_branch
        %1537 = sbr.rel (%p1535) target = $region44
      $region43: #{conv_decoder_forward.9} parent=39 // pred_region
        %s1538 = smul.u32 138, %s15
        %p1539 = scmp.lt.s32.totalorder %s1538, 275
        %s1540 = scalar_select %p1539, %s1538, 275
        %s1541 = smul.addr %s1540, 8
        %s1542 = scalar_lea.vmem %s3, %s1541
      $region44: #{conv_decoder_forward.9} parent=39 // pred_fallthru
        _
    $region40: #{conv_decoder_forward.9} parent=5 // pred_fallthru
      _
  $region6: #{conv_decoder_forward.9} parent=0 // loop_footer
    %s13 = sadd.s32 1, %s9
  $region7: #{conv_decoder_forward.9} parent=0 // loop_footer_branch
    %8 = sbr.rel target = $region3
  $region8: #{conv_decoder_forward.9} parent=0 // loop_exit
    _

</llo_original>
